<compile_context>
chip_gen: v7x
topology: tpu7x:2x2x1
jax: 0.10.0
libtpu: 0.0.40
codegen_flags: <defaults>
</compile_context>

<pallas_src>
import jax
import jax.numpy as jnp
import numpy as np
from jax import lax
from jax.experimental import pallas as pl
from jax.experimental.pallas import tpu as pltpu

_BN_EPS = 1e-5


# ----------------------------------------------------------------------------
# Fused kernel: whole `Down` forward for one batch element, entirely in VMEM.
# ----------------------------------------------------------------------------
def _down_fused_kernel(x_ref, wb1, wb2, wb3, wb4, wb5, wb6, bias_ref,
                       ft1_ref, ft2_ref, ft3_ref,
                       p1, p2, p3, p4, p5, p6):

    def fill_pad(p_ref, y):
        # rows 1..h of p_ref <- y ; rows 0 and h+1 <- 0 (the "same"-padding
        # halo along H; padding along W is folded into the banded weights).
        h = p_ref.shape[0] - 2
        zrow = jnp.zeros((1, p_ref.shape[1]), p_ref.dtype)
        p_ref[0:1, :] = zrow
        p_ref[h + 1:h + 2, :] = zrow
        p_ref[1:h + 1, :] = y.astype(p_ref.dtype)

    def conv_relu(p_ref, wb_ref, bias_idx):
        # 3x3 "same" conv as 3 block-banded MXU dots (K = W*Cin per tap row),
        # bf16 operands / f32 accumulation, + (BN-folded) bias, ReLU.
        h = p_ref.shape[0] - 2
        acc = jnp.zeros((h, wb_ref.shape[2]), jnp.float32)
        for kh in range(3):
            acc = acc + jnp.dot(p_ref[kh:kh + h, :].astype(jnp.bfloat16),
                                wb_ref[kh],
                                preferred_element_type=jnp.float32)
        acc = acc + bias_ref[bias_idx:bias_idx + 1, :]
        return jnp.maximum(acc, 0.0)

    def pool_into(y, c, dst_ref):
        # 2x2 / stride-2 max pool of lane-flattened y = (h, w*c); result plus
        # zeroed H-halo is written straight into the next conv's padded scratch.
        h, wc = y.shape
        w = wc // c
        yh = jnp.max(y.reshape(h // 2, 2, wc), axis=1)           # pool along H
        zrow = jnp.zeros((1, dst_ref.shape[1]), dst_ref.dtype)
        dst_ref[0:1, :] = zrow
        dst_ref[h // 2 + 1:h // 2 + 2, :] = zrow
        for i in range(w // 2):                                  # pool along W
            dst_ref[1:h // 2 + 1, i * c:(i + 1) * c] = jnp.maximum(
                yh[:, (2 * i) * c:(2 * i + 1) * c],
                yh[:, (2 * i + 1) * c:(2 * i + 2) * c])

    # ---- block 1: conv1 -> BN -> ReLU -> conv2 -> ReLU ; ft1 ; pool --------
    fill_pad(p1, x_ref[0])
    y = conv_relu(p1, wb1, 0)
    fill_pad(p2, y)
    y = conv_relu(p2, wb2, 1)
    ft1_ref[0] = y
    pool_into(y, 16, p3)            # dropout(p=0.2) is identity in eval mode

    # ---- block 2 ------------------------------------------------------------
    y = conv_relu(p3, wb3, 2)
    fill_pad(p4, y)
    y = conv_relu(p4, wb4, 3)
    ft2_ref[0] = y
    pool_into(y, 32, p5)

    # ---- block 3 ------------------------------------------------------------
    y = conv_relu(p5, wb5, 4)
    fill_pad(p6, y)
    y = conv_relu(p6, wb6, 5)
    ft3_ref[0] = y
    # The module's trailing pool+dropout do not affect the returned ft_maps.


# ----------------------------------------------------------------------------
# Weight preprocessing (trace-time glue, runs once outside the kernel)
# ----------------------------------------------------------------------------
def _band_conv3x3_weights(w_hwio, width):
    """Fold "same" zero-padding along W into a block-banded weight matrix.

    w_hwio: (3, 3, Cin, Cout) -> (3, width*Cin, width*Cout) such that a
    lane-flattened input row (index w_src*Cin + c) dotted with band[kh] gives
    the kh-tap-row contribution for every output position/channel
    (w_dst*Cout + co); out-of-range taps are dropped (zero padding along W).
    """
    cin, cout = w_hwio.shape[2], w_hwio.shape[3]
    sel = np.zeros((3, width, width), np.float32)       # sel[kw, w_dst, w_src]
    for kw in range(3):
        for wd in range(width):
            ws = wd + kw - 1
            if 0 <= ws < width:
                sel[kw, wd, ws] = 1.0
    band = jnp.einsum('hkcd,kws->hscwd', w_hwio, jnp.asarray(sel))
    return band.reshape(3, width * cin, width * cout)


# ----------------------------------------------------------------------------
# Parameter construction (deterministic, mirrors the PyTorch __init__)
# ----------------------------------------------------------------------------
def _make_conv_params(key, cin, cout):
    """weight ~ N(0, sqrt(2/(3*3*cout))) (module's custom init); PyTorch default bias."""
    kw, kb = jax.random.split(key)
    std = np.sqrt(2.0 / (3 * 3 * cout))
    w = std * jax.random.normal(kw, (3, 3, cin, cout), jnp.float32)  # HWIO
    bound = 1.0 / np.sqrt(3 * 3 * cin)
    b = jax.random.uniform(kb, (cout,), jnp.float32, -bound, bound)
    return w, b


def make_down_params(key):
    chans = [(3, 16), (16, 16), (16, 32), (32, 32), (32, 64), (64, 64)]
    keys = jax.random.split(key, len(chans))
    convs = [_make_conv_params(k, ci, co) for k, (ci, co) in zip(keys, chans)]
    # BatchNorm2d defaults (eval): gamma=1, beta=0, running_mean=0, running_var=1.
    bns = [
        dict(gamma=jnp.ones((c,), jnp.float32), beta=jnp.zeros((c,), jnp.float32),
             mean=jnp.zeros((c,), jnp.float32), var=jnp.ones((c,), jnp.float32))
        for c in (16, 32, 64)
    ]
    return convs, bns


# ----------------------------------------------------------------------------
# Forward pass of `Down` (eval mode); input/outputs are NCHW like PyTorch.
# ----------------------------------------------------------------------------
@jax.jit
def down_forward(x_nchw, convs, bns):
    N, cin0, H, W = x_nchw.shape
    assert cin0 == 3 and H % 4 == 0 and W % 4 == 0
    x = jnp.transpose(x_nchw, (0, 2, 3, 1)).astype(jnp.float32)   # NCHW -> NHWC
    x_flat = x.reshape(N, H, W * cin0)                            # lane-flattened

    widths = [W, W, W // 2, W // 2, W // 4, W // 4]
    lanes = W * 16            # = widths[i] * Cout[i] for every conv here (256)

    wbands, biases = [], []
    for i in range(6):
        w, b = convs[i]
        if i % 2 == 0:                      # conv followed by BatchNorm (eval)
            bn = bns[i // 2]
            scale = bn["gamma"] / jnp.sqrt(bn["var"] + _BN_EPS)
            bias = (b - bn["mean"]) * scale + bn["beta"]
            w = w * scale[None, None, None, :]      # fold BN scale into weights
        else:
            bias = b
        wbands.append(_band_conv3x3_weights(w, widths[i]).astype(jnp.bfloat16))
        biases.append(jnp.tile(bias, widths[i]))    # per-lane bias (w*Cout + co)
    bias_all = jnp.stack(biases, axis=0)            # (6, W*16) f32

    in_specs = [pl.BlockSpec((1, H, W * cin0), lambda n: (n, 0, 0))]
    for wb in wbands:
        in_specs.append(pl.BlockSpec(wb.shape, lambda n: (0, 0, 0)))
    in_specs.append(pl.BlockSpec((6, lanes), lambda n: (0, 0)))

    out_shape = (
        jax.ShapeDtypeStruct((N, H, lanes), jnp.float32),
        jax.ShapeDtypeStruct((N, H // 2, lanes), jnp.float32),
        jax.ShapeDtypeStruct((N, H // 4, lanes), jnp.float32),
    )
    out_specs = (
        pl.BlockSpec((1, H, lanes), lambda n: (n, 0, 0)),
        pl.BlockSpec((1, H // 2, lanes), lambda n: (n, 0, 0)),
        pl.BlockSpec((1, H // 4, lanes), lambda n: (n, 0, 0)),
    )
    scratch_shapes = [                                        # padded activations
        pltpu.VMEM((H + 2, W * cin0), jnp.float32),           # conv1 input
        pltpu.VMEM((H + 2, W * 16), jnp.float32),             # conv2 input
        pltpu.VMEM((H // 2 + 2, (W // 2) * 16), jnp.float32), # conv3 input
        pltpu.VMEM((H // 2 + 2, (W // 2) * 32), jnp.float32), # conv4 input
        pltpu.VMEM((H // 4 + 2, (W // 4) * 32), jnp.float32), # conv5 input
        pltpu.VMEM((H // 4 + 2, (W // 4) * 64), jnp.float32), # conv6 input
    ]

    ft1, ft2, ft3 = pl.pallas_call(
        _down_fused_kernel,
        out_shape=out_shape,
        grid_spec=pltpu.PrefetchScalarGridSpec(
            num_scalar_prefetch=0,
            grid=(N,),
            in_specs=in_specs,
            out_specs=out_specs,
            scratch_shapes=scratch_shapes),
        compiler_params=pltpu.CompilerParams(
            dimension_semantics=("parallel",)),   # batch shards across TCs (v7x)
    )(x_flat, *wbands, bias_all)

    # lane-flat (N, H, W*C) -> NCHW, matching the PyTorch module's convention.
    ft1 = jnp.transpose(ft1.reshape(N, H, W, 16), (0, 3, 1, 2))
    ft2 = jnp.transpose(ft2.reshape(N, H // 2, W // 2, 32), (0, 3, 1, 2))
    ft3 = jnp.transpose(ft3.reshape(N, H // 4, W // 4, 64), (0, 3, 1, 2))
    return [ft1, ft2, ft3]


# ----------------------------------------------------------------------------
# Pure-JAX (f32) reference for validation
# ----------------------------------------------------------------------------
def _ref_conv(x, w, b):
    y = lax.conv_general_dilated(x, w, (1, 1), "SAME",
                                 dimension_numbers=("NHWC", "HWIO", "NHWC"))
    return y + b


def _ref_pool(x):
    return lax.reduce_window(x, -jnp.inf, lax.max,
                             (1, 2, 2, 1), (1, 2, 2, 1), "VALID")


def down_forward_ref(x_nchw, convs, bns):
    x = jnp.transpose(x_nchw, (0, 2, 3, 1)).astype(jnp.float32)
    ft_maps = []
    for blk in range(3):
        (w_a, b_a), (w_b, b_b) = convs[2 * blk], convs[2 * blk + 1]
        bn = bns[blk]
        y = _ref_conv(x, w_a, b_a)
        y = (y - bn["mean"]) / jnp.sqrt(bn["var"] + _BN_EPS) * bn["gamma"] + bn["beta"]
        y = jnp.maximum(y, 0.0)
        y = jnp.maximum(_ref_conv(y, w_b, b_b), 0.0)
        ft_maps.append(jnp.transpose(y, (0, 3, 1, 2)))
        x = _ref_pool(y)
    return ft_maps


# ----------------------------------------------------------------------------
if __name__ == "__main__":
    key = jax.random.PRNGKey(0)
    k_par, k_x = jax.random.split(key)

    convs, bns = make_down_params(k_par)
    x = jax.random.normal(k_x, (2, 3, 16, 16), jnp.float32)  # NCHW, like PyTorch

    ft_maps = jax.block_until_ready(down_forward(x, convs, bns))

    expected_shapes = [(2, 16, 16, 16), (2, 32, 8, 8), (2, 64, 4, 4)]
    for ft, es in zip(ft_maps, expected_shapes):
        assert ft.shape == es, (ft.shape, es)

    ref_maps = down_forward_ref(x, convs, bns)
    # bf16 MXU operands (f32 accumulation) over 6 conv layers: tolerance
    # loosened from the f32-only 1e-4 accordingly.
    for ft, rf in zip(ft_maps, ref_maps):
        np.testing.assert_allclose(np.asarray(ft), np.asarray(rf),
                                   rtol=3e-2, atol=3e-2)

    print("KERNEL_OK")
</pallas_src>

<mosaic_0001>
module attributes {stable_mosaic.version = 11 : i64} {
  func.func @_down_fused_kernel(%arg0: i32, %arg1: memref<1x16x48xf32, #tpu.memory_space<vmem>>, %arg2: memref<3x48x256xbf16, #tpu.memory_space<vmem>>, %arg3: memref<3x256x256xbf16, #tpu.memory_space<vmem>>, %arg4: memref<3x128x256xbf16, #tpu.memory_space<vmem>>, %arg5: memref<3x256x256xbf16, #tpu.memory_space<vmem>>, %arg6: memref<3x128x256xbf16, #tpu.memory_space<vmem>>, %arg7: memref<3x256x256xbf16, #tpu.memory_space<vmem>>, %arg8: memref<6x256xf32, #tpu.memory_space<vmem>>, %arg9: memref<1x16x256xf32, #tpu.memory_space<vmem>>, %arg10: memref<1x8x256xf32, #tpu.memory_space<vmem>>, %arg11: memref<1x4x256xf32, #tpu.memory_space<vmem>>, %arg12: memref<18x48xf32, #tpu.memory_space<vmem>>, %arg13: memref<18x256xf32, #tpu.memory_space<vmem>>, %arg14: memref<10x128xf32, #tpu.memory_space<vmem>>, %arg15: memref<10x256xf32, #tpu.memory_space<vmem>>, %arg16: memref<6x128xf32, #tpu.memory_space<vmem>>, %arg17: memref<6x256xf32, #tpu.memory_space<vmem>>) attributes {dimension_semantics = [#tpu.dimension_semantics<parallel>], iteration_bounds = array<i64: 2>, scalar_prefetch = 0 : i64, scratch_operands = 6 : i64, tpu.core_type = #tpu.core_type<tc>, window_params = [{transform_indices = @transform_0, window_bounds = array<i64: 1, 16, 48>}, {pipeline_mode = #tpu.pipeline_mode<synchronous>, transform_indices = @transform_1, window_bounds = array<i64: 3, 48, 256>}, {pipeline_mode = #tpu.pipeline_mode<synchronous>, transform_indices = @transform_2, window_bounds = array<i64: 3, 256, 256>}, {pipeline_mode = #tpu.pipeline_mode<synchronous>, transform_indices = @transform_3, window_bounds = array<i64: 3, 128, 256>}, {pipeline_mode = #tpu.pipeline_mode<synchronous>, transform_indices = @transform_4, window_bounds = array<i64: 3, 256, 256>}, {pipeline_mode = #tpu.pipeline_mode<synchronous>, transform_indices = @transform_5, window_bounds = array<i64: 3, 128, 256>}, {pipeline_mode = #tpu.pipeline_mode<synchronous>, transform_indices = @transform_6, window_bounds = array<i64: 3, 256, 256>}, {pipeline_mode = #tpu.pipeline_mode<synchronous>, transform_indices = @transform_7, window_bounds = array<i64: 6, 256>}, {transform_indices = @transform_8, window_bounds = array<i64: 1, 16, 256>}, {transform_indices = @transform_9, window_bounds = array<i64: 1, 8, 256>}, {transform_indices = @transform_10, window_bounds = array<i64: 1, 4, 256>}]} {
    %c0 = arith.constant 0 : index
    %c0_0 = arith.constant 0 : index
    %c0_1 = arith.constant 0 : index
    %0 = vector.load %arg1[%c0, %c0_0, %c0_1] : memref<1x16x48xf32, #tpu.memory_space<vmem>>, vector<1x16x48xf32>
    %1 = vector.shape_cast %0 : vector<1x16x48xf32> to vector<16x48xf32>
    %cst = arith.constant 0.000000e+00 : f32
    %2 = vector.broadcast %cst : f32 to vector<1x48xf32>
    %c0_2 = arith.constant 0 : index
    %c0_3 = arith.constant 0 : index
    %3 = vector.load %arg12[%c0_2, %c0_3] : memref<18x48xf32, #tpu.memory_space<vmem>>, vector<1x48xf32>
    tpu.vector_store %arg12[%c0_2, %c0_3], %2 {strides = array<i32>} : memref<18x48xf32, #tpu.memory_space<vmem>>, vector<1x48xf32>,
    %c17 = arith.constant 17 : index
    %c0_4 = arith.constant 0 : index
    %4 = vector.load %arg12[%c17, %c0_4] : memref<18x48xf32, #tpu.memory_space<vmem>>, vector<1x48xf32>
    tpu.vector_store %arg12[%c17, %c0_4], %2 {strides = array<i32>} : memref<18x48xf32, #tpu.memory_space<vmem>>, vector<1x48xf32>,
    %c1 = arith.constant 1 : index
    %c0_5 = arith.constant 0 : index
    %5 = vector.load %arg12[%c1, %c0_5] : memref<18x48xf32, #tpu.memory_space<vmem>>, vector<16x48xf32>
    tpu.vector_store %arg12[%c1, %c0_5], %1 {strides = array<i32>} : memref<18x48xf32, #tpu.memory_space<vmem>>, vector<16x48xf32>,
    %cst_6 = arith.constant 0.000000e+00 : f32
    %6 = vector.broadcast %cst_6 : f32 to vector<16x256xf32>
    %c0_7 = arith.constant 0 : index
    %c0_8 = arith.constant 0 : index
    %7 = vector.load %arg12[%c0_7, %c0_8] : memref<18x48xf32, #tpu.memory_space<vmem>>, vector<16x48xf32>
    %8 = arith.truncf %7 : vector<16x48xf32> to vector<16x48xbf16>
    %c0_9 = arith.constant 0 : index
    %c0_10 = arith.constant 0 : index
    %c0_11 = arith.constant 0 : index
    %9 = vector.load %arg2[%c0_9, %c0_10, %c0_11] : memref<3x48x256xbf16, #tpu.memory_space<vmem>>, vector<1x48x256xbf16>
    %10 = vector.shape_cast %9 : vector<1x48x256xbf16> to vector<48x256xbf16>
    %cst_12 = arith.constant dense<0.000000e+00> : vector<16x256xf32>
    %11 = tpu.matmul %8, %10, %cst_12 {dimension_numbers = #tpu.dot_dimension_numbers<[1], [0], [0], [1], [0, 0, 1, 1], [], []>} : vector<16x48xbf16>, vector<48x256xbf16>, vector<16x256xf32> -> vector<16x256xf32>
    %12 = arith.addf %6, %11 : vector<16x256xf32>
    %c1_13 = arith.constant 1 : index
    %c0_14 = arith.constant 0 : index
    %13 = vector.load %arg12[%c1_13, %c0_14] : memref<18x48xf32, #tpu.memory_space<vmem>>, vector<16x48xf32>
    %14 = arith.truncf %13 : vector<16x48xf32> to vector<16x48xbf16>
    %c1_15 = arith.constant 1 : index
    %c0_16 = arith.constant 0 : index
    %c0_17 = arith.constant 0 : index
    %15 = vector.load %arg2[%c1_15, %c0_16, %c0_17] : memref<3x48x256xbf16, #tpu.memory_space<vmem>>, vector<1x48x256xbf16>
    %16 = vector.shape_cast %15 : vector<1x48x256xbf16> to vector<48x256xbf16>
    %cst_18 = arith.constant dense<0.000000e+00> : vector<16x256xf32>
    %17 = tpu.matmul %14, %16, %cst_18 {dimension_numbers = #tpu.dot_dimension_numbers<[1], [0], [0], [1], [0, 0, 1, 1], [], []>} : vector<16x48xbf16>, vector<48x256xbf16>, vector<16x256xf32> -> vector<16x256xf32>
    %18 = arith.addf %12, %17 : vector<16x256xf32>
    %c2 = arith.constant 2 : index
    %c0_19 = arith.constant 0 : index
    %19 = vector.load %arg12[%c2, %c0_19] : memref<18x48xf32, #tpu.memory_space<vmem>>, vector<16x48xf32>
    %20 = arith.truncf %19 : vector<16x48xf32> to vector<16x48xbf16>
    %c2_20 = arith.constant 2 : index
    %c0_21 = arith.constant 0 : index
    %c0_22 = arith.constant 0 : index
    %21 = vector.load %arg2[%c2_20, %c0_21, %c0_22] : memref<3x48x256xbf16, #tpu.memory_space<vmem>>, vector<1x48x256xbf16>
    %22 = vector.shape_cast %21 : vector<1x48x256xbf16> to vector<48x256xbf16>
    %cst_23 = arith.constant dense<0.000000e+00> : vector<16x256xf32>
    %23 = tpu.matmul %20, %22, %cst_23 {dimension_numbers = #tpu.dot_dimension_numbers<[1], [0], [0], [1], [0, 0, 1, 1], [], []>} : vector<16x48xbf16>, vector<48x256xbf16>, vector<16x256xf32> -> vector<16x256xf32>
    %24 = arith.addf %18, %23 : vector<16x256xf32>
    %c0_24 = arith.constant 0 : index
    %c0_25 = arith.constant 0 : index
    %25 = vector.load %arg8[%c0_24, %c0_25] : memref<6x256xf32, #tpu.memory_space<vmem>>, vector<1x256xf32>
    %26 = vector.broadcast %25 : vector<1x256xf32> to vector<16x256xf32>
    %27 = arith.addf %24, %26 : vector<16x256xf32>
    %cst_26 = arith.constant 0.000000e+00 : f32
    %28 = vector.broadcast %cst_26 : f32 to vector<16x256xf32>
    %29 = arith.maximumf %27, %28 : vector<16x256xf32>
    %cst_27 = arith.constant 0.000000e+00 : f32
    %30 = vector.broadcast %cst_27 : f32 to vector<1x256xf32>
    %c0_28 = arith.constant 0 : index
    %c0_29 = arith.constant 0 : index
    %31 = vector.load %arg13[%c0_28, %c0_29] : memref<18x256xf32, #tpu.memory_space<vmem>>, vector<1x256xf32>
    tpu.vector_store %arg13[%c0_28, %c0_29], %30 {strides = array<i32>} : memref<18x256xf32, #tpu.memory_space<vmem>>, vector<1x256xf32>,
    %c17_30 = arith.constant 17 : index
    %c0_31 = arith.constant 0 : index
    %32 = vector.load %arg13[%c17_30, %c0_31] : memref<18x256xf32, #tpu.memory_space<vmem>>, vector<1x256xf32>
    tpu.vector_store %arg13[%c17_30, %c0_31], %30 {strides = array<i32>} : memref<18x256xf32, #tpu.memory_space<vmem>>, vector<1x256xf32>,
    %c1_32 = arith.constant 1 : index
    %c0_33 = arith.constant 0 : index
    %33 = vector.load %arg13[%c1_32, %c0_33] : memref<18x256xf32, #tpu.memory_space<vmem>>, vector<16x256xf32>
    tpu.vector_store %arg13[%c1_32, %c0_33], %29 {strides = array<i32>} : memref<18x256xf32, #tpu.memory_space<vmem>>, vector<16x256xf32>,
    %cst_34 = arith.constant 0.000000e+00 : f32
    %34 = vector.broadcast %cst_34 : f32 to vector<16x256xf32>
    %c0_35 = arith.constant 0 : index
    %c0_36 = arith.constant 0 : index
    %35 = vector.load %arg13[%c0_35, %c0_36] : memref<18x256xf32, #tpu.memory_space<vmem>>, vector<16x256xf32>
    %36 = arith.truncf %35 : vector<16x256xf32> to vector<16x256xbf16>
    %c0_37 = arith.constant 0 : index
    %c0_38 = arith.constant 0 : index
    %c0_39 = arith.constant 0 : index
    %37 = vector.load %arg3[%c0_37, %c0_38, %c0_39] : memref<3x256x256xbf16, #tpu.memory_space<vmem>>, vector<1x256x256xbf16>
    %38 = vector.shape_cast %37 : vector<1x256x256xbf16> to vector<256x256xbf16>
    %cst_40 = arith.constant dense<0.000000e+00> : vector<16x256xf32>
    %39 = tpu.matmul %36, %38, %cst_40 {dimension_numbers = #tpu.dot_dimension_numbers<[1], [0], [0], [1], [0, 0, 1, 1], [], []>} : vector<16x256xbf16>, vector<256x256xbf16>, vector<16x256xf32> -> vector<16x256xf32>
    %40 = arith.addf %34, %39 : vector<16x256xf32>
    %c1_41 = arith.constant 1 : index
    %c0_42 = arith.constant 0 : index
    %41 = vector.load %arg13[%c1_41, %c0_42] : memref<18x256xf32, #tpu.memory_space<vmem>>, vector<16x256xf32>
    %42 = arith.truncf %41 : vector<16x256xf32> to vector<16x256xbf16>
    %c1_43 = arith.constant 1 : index
    %c0_44 = arith.constant 0 : index
    %c0_45 = arith.constant 0 : index
    %43 = vector.load %arg3[%c1_43, %c0_44, %c0_45] : memref<3x256x256xbf16, #tpu.memory_space<vmem>>, vector<1x256x256xbf16>
    %44 = vector.shape_cast %43 : vector<1x256x256xbf16> to vector<256x256xbf16>
    %cst_46 = arith.constant dense<0.000000e+00> : vector<16x256xf32>
    %45 = tpu.matmul %42, %44, %cst_46 {dimension_numbers = #tpu.dot_dimension_numbers<[1], [0], [0], [1], [0, 0, 1, 1], [], []>} : vector<16x256xbf16>, vector<256x256xbf16>, vector<16x256xf32> -> vector<16x256xf32>
    %46 = arith.addf %40, %45 : vector<16x256xf32>
    %c2_47 = arith.constant 2 : index
    %c0_48 = arith.constant 0 : index
    %47 = vector.load %arg13[%c2_47, %c0_48] : memref<18x256xf32, #tpu.memory_space<vmem>>, vector<16x256xf32>
    %48 = arith.truncf %47 : vector<16x256xf32> to vector<16x256xbf16>
    %c2_49 = arith.constant 2 : index
    %c0_50 = arith.constant 0 : index
    %c0_51 = arith.constant 0 : index
    %49 = vector.load %arg3[%c2_49, %c0_50, %c0_51] : memref<3x256x256xbf16, #tpu.memory_space<vmem>>, vector<1x256x256xbf16>
    %50 = vector.shape_cast %49 : vector<1x256x256xbf16> to vector<256x256xbf16>
    %cst_52 = arith.constant dense<0.000000e+00> : vector<16x256xf32>
    %51 = tpu.matmul %48, %50, %cst_52 {dimension_numbers = #tpu.dot_dimension_numbers<[1], [0], [0], [1], [0, 0, 1, 1], [], []>} : vector<16x256xbf16>, vector<256x256xbf16>, vector<16x256xf32> -> vector<16x256xf32>
    %52 = arith.addf %46, %51 : vector<16x256xf32>
    %c1_53 = arith.constant 1 : index
    %c0_54 = arith.constant 0 : index
    %53 = vector.load %arg8[%c1_53, %c0_54] : memref<6x256xf32, #tpu.memory_space<vmem>>, vector<1x256xf32>
    %54 = vector.broadcast %53 : vector<1x256xf32> to vector<16x256xf32>
    %55 = arith.addf %52, %54 : vector<16x256xf32>
    %cst_55 = arith.constant 0.000000e+00 : f32
    %56 = vector.broadcast %cst_55 : f32 to vector<16x256xf32>
    %57 = arith.maximumf %55, %56 : vector<16x256xf32>
    %c0_56 = arith.constant 0 : index
    %c0_57 = arith.constant 0 : index
    %c0_58 = arith.constant 0 : index
    %58 = vector.load %arg9[%c0_56, %c0_57, %c0_58] : memref<1x16x256xf32, #tpu.memory_space<vmem>>, vector<1x16x256xf32>
    %59 = vector.shape_cast %58 : vector<1x16x256xf32> to vector<16x256xf32>
    %60 = vector.shape_cast %57 : vector<16x256xf32> to vector<1x16x256xf32>
    tpu.vector_store %arg9[%c0_56, %c0_57, %c0_58], %60 {strides = array<i32>} : memref<1x16x256xf32, #tpu.memory_space<vmem>>, vector<1x16x256xf32>,
    %61 = vector.shape_cast %57 : vector<16x256xf32> to vector<8x2x256xf32>
    %cst_59 = arith.constant dense<0xFF800000> : vector<8x256xf32>
    %62 = vector.multi_reduction <maximumf>, %61, %cst_59 [1] : vector<8x2x256xf32> to vector<8x256xf32>
    %cst_60 = arith.constant 0.000000e+00 : f32
    %63 = vector.broadcast %cst_60 : f32 to vector<1x128xf32>
    %c0_61 = arith.constant 0 : index
    %c0_62 = arith.constant 0 : index
    %64 = vector.load %arg14[%c0_61, %c0_62] : memref<10x128xf32, #tpu.memory_space<vmem>>, vector<1x128xf32>
    tpu.vector_store %arg14[%c0_61, %c0_62], %63 {strides = array<i32>} : memref<10x128xf32, #tpu.memory_space<vmem>>, vector<1x128xf32>,
    %c9 = arith.constant 9 : index
    %c0_63 = arith.constant 0 : index
    %65 = vector.load %arg14[%c9, %c0_63] : memref<10x128xf32, #tpu.memory_space<vmem>>, vector<1x128xf32>
    tpu.vector_store %arg14[%c9, %c0_63], %63 {strides = array<i32>} : memref<10x128xf32, #tpu.memory_space<vmem>>, vector<1x128xf32>,
    %66 = vector.extract_strided_slice %62 {offsets = [0, 0], sizes = [8, 16], strides = [1, 1]} : vector<8x256xf32> to vector<8x16xf32>
    %67 = vector.extract_strided_slice %62 {offsets = [0, 16], sizes = [8, 16], strides = [1, 1]} : vector<8x256xf32> to vector<8x16xf32>
    %68 = arith.maximumf %66, %67 : vector<8x16xf32>
    %c1_64 = arith.constant 1 : index
    %c0_65 = arith.constant 0 : index
    %69 = vector.load %arg14[%c1_64, %c0_65] : memref<10x128xf32, #tpu.memory_space<vmem>>, vector<8x16xf32>
    tpu.vector_store %arg14[%c1_64, %c0_65], %68 {strides = array<i32>} : memref<10x128xf32, #tpu.memory_space<vmem>>, vector<8x16xf32>,
    %70 = vector.extract_strided_slice %62 {offsets = [0, 32], sizes = [8, 16], strides = [1, 1]} : vector<8x256xf32> to vector<8x16xf32>
    %71 = vector.extract_strided_slice %62 {offsets = [0, 48], sizes = [8, 16], strides = [1, 1]} : vector<8x256xf32> to vector<8x16xf32>
    %72 = arith.maximumf %70, %71 : vector<8x16xf32>
    %c1_66 = arith.constant 1 : index
    %c16 = arith.constant 16 : index
    %73 = vector.load %arg14[%c1_66, %c16] : memref<10x128xf32, #tpu.memory_space<vmem>>, vector<8x16xf32>
    tpu.vector_store %arg14[%c1_66, %c16], %72 {strides = array<i32>} : memref<10x128xf32, #tpu.memory_space<vmem>>, vector<8x16xf32>,
    %74 = vector.extract_strided_slice %62 {offsets = [0, 64], sizes = [8, 16], strides = [1, 1]} : vector<8x256xf32> to vector<8x16xf32>
    %75 = vector.extract_strided_slice %62 {offsets = [0, 80], sizes = [8, 16], strides = [1, 1]} : vector<8x256xf32> to vector<8x16xf32>
    %76 = arith.maximumf %74, %75 : vector<8x16xf32>
    %c1_67 = arith.constant 1 : index
    %c32 = arith.constant 32 : index
    %77 = vector.load %arg14[%c1_67, %c32] : memref<10x128xf32, #tpu.memory_space<vmem>>, vector<8x16xf32>
    tpu.vector_store %arg14[%c1_67, %c32], %76 {strides = array<i32>} : memref<10x128xf32, #tpu.memory_space<vmem>>, vector<8x16xf32>,
    %78 = vector.extract_strided_slice %62 {offsets = [0, 96], sizes = [8, 16], strides = [1, 1]} : vector<8x256xf32> to vector<8x16xf32>
    %79 = vector.extract_strided_slice %62 {offsets = [0, 112], sizes = [8, 16], strides = [1, 1]} : vector<8x256xf32> to vector<8x16xf32>
    %80 = arith.maximumf %78, %79 : vector<8x16xf32>
    %c1_68 = arith.constant 1 : index
    %c48 = arith.constant 48 : index
    %81 = vector.load %arg14[%c1_68, %c48] : memref<10x128xf32, #tpu.memory_space<vmem>>, vector<8x16xf32>
    tpu.vector_store %arg14[%c1_68, %c48], %80 {strides = array<i32>} : memref<10x128xf32, #tpu.memory_space<vmem>>, vector<8x16xf32>,
    %82 = vector.extract_strided_slice %62 {offsets = [0, 128], sizes = [8, 16], strides = [1, 1]} : vector<8x256xf32> to vector<8x16xf32>
    %83 = vector.extract_strided_slice %62 {offsets = [0, 144], sizes = [8, 16], strides = [1, 1]} : vector<8x256xf32> to vector<8x16xf32>
    %84 = arith.maximumf %82, %83 : vector<8x16xf32>
    %c1_69 = arith.constant 1 : index
    %c64 = arith.constant 64 : index
    %85 = vector.load %arg14[%c1_69, %c64] : memref<10x128xf32, #tpu.memory_space<vmem>>, vector<8x16xf32>
    tpu.vector_store %arg14[%c1_69, %c64], %84 {strides = array<i32>} : memref<10x128xf32, #tpu.memory_space<vmem>>, vector<8x16xf32>,
    %86 = vector.extract_strided_slice %62 {offsets = [0, 160], sizes = [8, 16], strides = [1, 1]} : vector<8x256xf32> to vector<8x16xf32>
    %87 = vector.extract_strided_slice %62 {offsets = [0, 176], sizes = [8, 16], strides = [1, 1]} : vector<8x256xf32> to vector<8x16xf32>
    %88 = arith.maximumf %86, %87 : vector<8x16xf32>
    %c1_70 = arith.constant 1 : index
    %c80 = arith.constant 80 : index
    %89 = vector.load %arg14[%c1_70, %c80] : memref<10x128xf32, #tpu.memory_space<vmem>>, vector<8x16xf32>
    tpu.vector_store %arg14[%c1_70, %c80], %88 {strides = array<i32>} : memref<10x128xf32, #tpu.memory_space<vmem>>, vector<8x16xf32>,
    %90 = vector.extract_strided_slice %62 {offsets = [0, 192], sizes = [8, 16], strides = [1, 1]} : vector<8x256xf32> to vector<8x16xf32>
    %91 = vector.extract_strided_slice %62 {offsets = [0, 208], sizes = [8, 16], strides = [1, 1]} : vector<8x256xf32> to vector<8x16xf32>
    %92 = arith.maximumf %90, %91 : vector<8x16xf32>
    %c1_71 = arith.constant 1 : index
    %c96 = arith.constant 96 : index
    %93 = vector.load %arg14[%c1_71, %c96] : memref<10x128xf32, #tpu.memory_space<vmem>>, vector<8x16xf32>
    tpu.vector_store %arg14[%c1_71, %c96], %92 {strides = array<i32>} : memref<10x128xf32, #tpu.memory_space<vmem>>, vector<8x16xf32>,
    %94 = vector.extract_strided_slice %62 {offsets = [0, 224], sizes = [8, 16], strides = [1, 1]} : vector<8x256xf32> to vector<8x16xf32>
    %95 = vector.extract_strided_slice %62 {offsets = [0, 240], sizes = [8, 16], strides = [1, 1]} : vector<8x256xf32> to vector<8x16xf32>
    %96 = arith.maximumf %94, %95 : vector<8x16xf32>
    %c1_72 = arith.constant 1 : index
    %c112 = arith.constant 112 : index
    %97 = vector.load %arg14[%c1_72, %c112] : memref<10x128xf32, #tpu.memory_space<vmem>>, vector<8x16xf32>
    tpu.vector_store %arg14[%c1_72, %c112], %96 {strides = array<i32>} : memref<10x128xf32, #tpu.memory_space<vmem>>, vector<8x16xf32>,
    %cst_73 = arith.constant 0.000000e+00 : f32
    %98 = vector.broadcast %cst_73 : f32 to vector<8x256xf32>
    %c0_74 = arith.constant 0 : index
    %c0_75 = arith.constant 0 : index
    %99 = vector.load %arg14[%c0_74, %c0_75] : memref<10x128xf32, #tpu.memory_space<vmem>>, vector<8x128xf32>
    %100 = arith.truncf %99 : vector<8x128xf32> to vector<8x128xbf16>
    %c0_76 = arith.constant 0 : index
    %c0_77 = arith.constant 0 : index
    %c0_78 = arith.constant 0 : index
    %101 = vector.load %arg4[%c0_76, %c0_77, %c0_78] : memref<3x128x256xbf16, #tpu.memory_space<vmem>>, vector<1x128x256xbf16>
    %102 = vector.shape_cast %101 : vector<1x128x256xbf16> to vector<128x256xbf16>
    %cst_79 = arith.constant dense<0.000000e+00> : vector<8x256xf32>
    %103 = tpu.matmul %100, %102, %cst_79 {dimension_numbers = #tpu.dot_dimension_numbers<[1], [0], [0], [1], [0, 0, 1, 1], [], []>} : vector<8x128xbf16>, vector<128x256xbf16>, vector<8x256xf32> -> vector<8x256xf32>
    %104 = arith.addf %98, %103 : vector<8x256xf32>
    %c1_80 = arith.constant 1 : index
    %c0_81 = arith.constant 0 : index
    %105 = vector.load %arg14[%c1_80, %c0_81] : memref<10x128xf32, #tpu.memory_space<vmem>>, vector<8x128xf32>
    %106 = arith.truncf %105 : vector<8x128xf32> to vector<8x128xbf16>
    %c1_82 = arith.constant 1 : index
    %c0_83 = arith.constant 0 : index
    %c0_84 = arith.constant 0 : index
    %107 = vector.load %arg4[%c1_82, %c0_83, %c0_84] : memref<3x128x256xbf16, #tpu.memory_space<vmem>>, vector<1x128x256xbf16>
    %108 = vector.shape_cast %107 : vector<1x128x256xbf16> to vector<128x256xbf16>
    %cst_85 = arith.constant dense<0.000000e+00> : vector<8x256xf32>
    %109 = tpu.matmul %106, %108, %cst_85 {dimension_numbers = #tpu.dot_dimension_numbers<[1], [0], [0], [1], [0, 0, 1, 1], [], []>} : vector<8x128xbf16>, vector<128x256xbf16>, vector<8x256xf32> -> vector<8x256xf32>
    %110 = arith.addf %104, %109 : vector<8x256xf32>
    %c2_86 = arith.constant 2 : index
    %c0_87 = arith.constant 0 : index
    %111 = vector.load %arg14[%c2_86, %c0_87] : memref<10x128xf32, #tpu.memory_space<vmem>>, vector<8x128xf32>
    %112 = arith.truncf %111 : vector<8x128xf32> to vector<8x128xbf16>
    %c2_88 = arith.constant 2 : index
    %c0_89 = arith.constant 0 : index
    %c0_90 = arith.constant 0 : index
    %113 = vector.load %arg4[%c2_88, %c0_89, %c0_90] : memref<3x128x256xbf16, #tpu.memory_space<vmem>>, vector<1x128x256xbf16>
    %114 = vector.shape_cast %113 : vector<1x128x256xbf16> to vector<128x256xbf16>
    %cst_91 = arith.constant dense<0.000000e+00> : vector<8x256xf32>
    %115 = tpu.matmul %112, %114, %cst_91 {dimension_numbers = #tpu.dot_dimension_numbers<[1], [0], [0], [1], [0, 0, 1, 1], [], []>} : vector<8x128xbf16>, vector<128x256xbf16>, vector<8x256xf32> -> vector<8x256xf32>
    %116 = arith.addf %110, %115 : vector<8x256xf32>
    %c2_92 = arith.constant 2 : index
    %c0_93 = arith.constant 0 : index
    %117 = vector.load %arg8[%c2_92, %c0_93] : memref<6x256xf32, #tpu.memory_space<vmem>>, vector<1x256xf32>
    %118 = vector.broadcast %117 : vector<1x256xf32> to vector<8x256xf32>
    %119 = arith.addf %116, %118 : vector<8x256xf32>
    %cst_94 = arith.constant 0.000000e+00 : f32
    %120 = vector.broadcast %cst_94 : f32 to vector<8x256xf32>
    %121 = arith.maximumf %119, %120 : vector<8x256xf32>
    %cst_95 = arith.constant 0.000000e+00 : f32
    %122 = vector.broadcast %cst_95 : f32 to vector<1x256xf32>
    %c0_96 = arith.constant 0 : index
    %c0_97 = arith.constant 0 : index
    %123 = vector.load %arg15[%c0_96, %c0_97] : memref<10x256xf32, #tpu.memory_space<vmem>>, vector<1x256xf32>
    tpu.vector_store %arg15[%c0_96, %c0_97], %122 {strides = array<i32>} : memref<10x256xf32, #tpu.memory_space<vmem>>, vector<1x256xf32>,
    %c9_98 = arith.constant 9 : index
    %c0_99 = arith.constant 0 : index
    %124 = vector.load %arg15[%c9_98, %c0_99] : memref<10x256xf32, #tpu.memory_space<vmem>>, vector<1x256xf32>
    tpu.vector_store %arg15[%c9_98, %c0_99], %122 {strides = array<i32>} : memref<10x256xf32, #tpu.memory_space<vmem>>, vector<1x256xf32>,
    %c1_100 = arith.constant 1 : index
    %c0_101 = arith.constant 0 : index
    %125 = vector.load %arg15[%c1_100, %c0_101] : memref<10x256xf32, #tpu.memory_space<vmem>>, vector<8x256xf32>
    tpu.vector_store %arg15[%c1_100, %c0_101], %121 {strides = array<i32>} : memref<10x256xf32, #tpu.memory_space<vmem>>, vector<8x256xf32>,
    %cst_102 = arith.constant 0.000000e+00 : f32
    %126 = vector.broadcast %cst_102 : f32 to vector<8x256xf32>
    %c0_103 = arith.constant 0 : index
    %c0_104 = arith.constant 0 : index
    %127 = vector.load %arg15[%c0_103, %c0_104] : memref<10x256xf32, #tpu.memory_space<vmem>>, vector<8x256xf32>
    %128 = arith.truncf %127 : vector<8x256xf32> to vector<8x256xbf16>
    %c0_105 = arith.constant 0 : index
    %c0_106 = arith.constant 0 : index
    %c0_107 = arith.constant 0 : index
    %129 = vector.load %arg5[%c0_105, %c0_106, %c0_107] : memref<3x256x256xbf16, #tpu.memory_space<vmem>>, vector<1x256x256xbf16>
    %130 = vector.shape_cast %129 : vector<1x256x256xbf16> to vector<256x256xbf16>
    %cst_108 = arith.constant dense<0.000000e+00> : vector<8x256xf32>
    %131 = tpu.matmul %128, %130, %cst_108 {dimension_numbers = #tpu.dot_dimension_numbers<[1], [0], [0], [1], [0, 0, 1, 1], [], []>} : vector<8x256xbf16>, vector<256x256xbf16>, vector<8x256xf32> -> vector<8x256xf32>
    %132 = arith.addf %126, %131 : vector<8x256xf32>
    %c1_109 = arith.constant 1 : index
    %c0_110 = arith.constant 0 : index
    %133 = vector.load %arg15[%c1_109, %c0_110] : memref<10x256xf32, #tpu.memory_space<vmem>>, vector<8x256xf32>
    %134 = arith.truncf %133 : vector<8x256xf32> to vector<8x256xbf16>
    %c1_111 = arith.constant 1 : index
    %c0_112 = arith.constant 0 : index
    %c0_113 = arith.constant 0 : index
    %135 = vector.load %arg5[%c1_111, %c0_112, %c0_113] : memref<3x256x256xbf16, #tpu.memory_space<vmem>>, vector<1x256x256xbf16>
    %136 = vector.shape_cast %135 : vector<1x256x256xbf16> to vector<256x256xbf16>
    %cst_114 = arith.constant dense<0.000000e+00> : vector<8x256xf32>
    %137 = tpu.matmul %134, %136, %cst_114 {dimension_numbers = #tpu.dot_dimension_numbers<[1], [0], [0], [1], [0, 0, 1, 1], [], []>} : vector<8x256xbf16>, vector<256x256xbf16>, vector<8x256xf32> -> vector<8x256xf32>
    %138 = arith.addf %132, %137 : vector<8x256xf32>
    %c2_115 = arith.constant 2 : index
    %c0_116 = arith.constant 0 : index
    %139 = vector.load %arg15[%c2_115, %c0_116] : memref<10x256xf32, #tpu.memory_space<vmem>>, vector<8x256xf32>
    %140 = arith.truncf %139 : vector<8x256xf32> to vector<8x256xbf16>
    %c2_117 = arith.constant 2 : index
    %c0_118 = arith.constant 0 : index
    %c0_119 = arith.constant 0 : index
    %141 = vector.load %arg5[%c2_117, %c0_118, %c0_119] : memref<3x256x256xbf16, #tpu.memory_space<vmem>>, vector<1x256x256xbf16>
    %142 = vector.shape_cast %141 : vector<1x256x256xbf16> to vector<256x256xbf16>
    %cst_120 = arith.constant dense<0.000000e+00> : vector<8x256xf32>
    %143 = tpu.matmul %140, %142, %cst_120 {dimension_numbers = #tpu.dot_dimension_numbers<[1], [0], [0], [1], [0, 0, 1, 1], [], []>} : vector<8x256xbf16>, vector<256x256xbf16>, vector<8x256xf32> -> vector<8x256xf32>
    %144 = arith.addf %138, %143 : vector<8x256xf32>
    %c3 = arith.constant 3 : index
    %c0_121 = arith.constant 0 : index
    %145 = vector.load %arg8[%c3, %c0_121] : memref<6x256xf32, #tpu.memory_space<vmem>>, vector<1x256xf32>
    %146 = vector.broadcast %145 : vector<1x256xf32> to vector<8x256xf32>
    %147 = arith.addf %144, %146 : vector<8x256xf32>
    %cst_122 = arith.constant 0.000000e+00 : f32
    %148 = vector.broadcast %cst_122 : f32 to vector<8x256xf32>
    %149 = arith.maximumf %147, %148 : vector<8x256xf32>
    %c0_123 = arith.constant 0 : index
    %c0_124 = arith.constant 0 : index
    %c0_125 = arith.constant 0 : index
    %150 = vector.load %arg10[%c0_123, %c0_124, %c0_125] : memref<1x8x256xf32, #tpu.memory_space<vmem>>, vector<1x8x256xf32>
    %151 = vector.shape_cast %150 : vector<1x8x256xf32> to vector<8x256xf32>
    %152 = vector.shape_cast %149 : vector<8x256xf32> to vector<1x8x256xf32>
    tpu.vector_store %arg10[%c0_123, %c0_124, %c0_125], %152 {strides = array<i32>} : memref<1x8x256xf32, #tpu.memory_space<vmem>>, vector<1x8x256xf32>,
    %153 = vector.shape_cast %149 : vector<8x256xf32> to vector<4x2x256xf32>
    %cst_126 = arith.constant dense<0xFF800000> : vector<4x256xf32>
    %154 = vector.multi_reduction <maximumf>, %153, %cst_126 [1] : vector<4x2x256xf32> to vector<4x256xf32>
    %cst_127 = arith.constant 0.000000e+00 : f32
    %155 = vector.broadcast %cst_127 : f32 to vector<1x128xf32>
    %c0_128 = arith.constant 0 : index
    %c0_129 = arith.constant 0 : index
    %156 = vector.load %arg16[%c0_128, %c0_129] : memref<6x128xf32, #tpu.memory_space<vmem>>, vector<1x128xf32>
    tpu.vector_store %arg16[%c0_128, %c0_129], %155 {strides = array<i32>} : memref<6x128xf32, #tpu.memory_space<vmem>>, vector<1x128xf32>,
    %c5 = arith.constant 5 : index
    %c0_130 = arith.constant 0 : index
    %157 = vector.load %arg16[%c5, %c0_130] : memref<6x128xf32, #tpu.memory_space<vmem>>, vector<1x128xf32>
    tpu.vector_store %arg16[%c5, %c0_130], %155 {strides = array<i32>} : memref<6x128xf32, #tpu.memory_space<vmem>>, vector<1x128xf32>,
    %158 = vector.extract_strided_slice %154 {offsets = [0, 0], sizes = [4, 32], strides = [1, 1]} : vector<4x256xf32> to vector<4x32xf32>
    %159 = vector.extract_strided_slice %154 {offsets = [0, 32], sizes = [4, 32], strides = [1, 1]} : vector<4x256xf32> to vector<4x32xf32>
    %160 = arith.maximumf %158, %159 : vector<4x32xf32>
    %c1_131 = arith.constant 1 : index
    %c0_132 = arith.constant 0 : index
    %161 = vector.load %arg16[%c1_131, %c0_132] : memref<6x128xf32, #tpu.memory_space<vmem>>, vector<4x32xf32>
    tpu.vector_store %arg16[%c1_131, %c0_132], %160 {strides = array<i32>} : memref<6x128xf32, #tpu.memory_space<vmem>>, vector<4x32xf32>,
    %162 = vector.extract_strided_slice %154 {offsets = [0, 64], sizes = [4, 32], strides = [1, 1]} : vector<4x256xf32> to vector<4x32xf32>
    %163 = vector.extract_strided_slice %154 {offsets = [0, 96], sizes = [4, 32], strides = [1, 1]} : vector<4x256xf32> to vector<4x32xf32>
    %164 = arith.maximumf %162, %163 : vector<4x32xf32>
    %c1_133 = arith.constant 1 : index
    %c32_134 = arith.constant 32 : index
    %165 = vector.load %arg16[%c1_133, %c32_134] : memref<6x128xf32, #tpu.memory_space<vmem>>, vector<4x32xf32>
    tpu.vector_store %arg16[%c1_133, %c32_134], %164 {strides = array<i32>} : memref<6x128xf32, #tpu.memory_space<vmem>>, vector<4x32xf32>,
    %166 = vector.extract_strided_slice %154 {offsets = [0, 128], sizes = [4, 32], strides = [1, 1]} : vector<4x256xf32> to vector<4x32xf32>
    %167 = vector.extract_strided_slice %154 {offsets = [0, 160], sizes = [4, 32], strides = [1, 1]} : vector<4x256xf32> to vector<4x32xf32>
    %168 = arith.maximumf %166, %167 : vector<4x32xf32>
    %c1_135 = arith.constant 1 : index
    %c64_136 = arith.constant 64 : index
    %169 = vector.load %arg16[%c1_135, %c64_136] : memref<6x128xf32, #tpu.memory_space<vmem>>, vector<4x32xf32>
    tpu.vector_store %arg16[%c1_135, %c64_136], %168 {strides = array<i32>} : memref<6x128xf32, #tpu.memory_space<vmem>>, vector<4x32xf32>,
    %170 = vector.extract_strided_slice %154 {offsets = [0, 192], sizes = [4, 32], strides = [1, 1]} : vector<4x256xf32> to vector<4x32xf32>
    %171 = vector.extract_strided_slice %154 {offsets = [0, 224], sizes = [4, 32], strides = [1, 1]} : vector<4x256xf32> to vector<4x32xf32>
    %172 = arith.maximumf %170, %171 : vector<4x32xf32>
    %c1_137 = arith.constant 1 : index
    %c96_138 = arith.constant 96 : index
    %173 = vector.load %arg16[%c1_137, %c96_138] : memref<6x128xf32, #tpu.memory_space<vmem>>, vector<4x32xf32>
    tpu.vector_store %arg16[%c1_137, %c96_138], %172 {strides = array<i32>} : memref<6x128xf32, #tpu.memory_space<vmem>>, vector<4x32xf32>,
    %cst_139 = arith.constant 0.000000e+00 : f32
    %174 = vector.broadcast %cst_139 : f32 to vector<4x256xf32>
    %c0_140 = arith.constant 0 : index
    %c0_141 = arith.constant 0 : index
    %175 = vector.load %arg16[%c0_140, %c0_141] : memref<6x128xf32, #tpu.memory_space<vmem>>, vector<4x128xf32>
    %176 = arith.truncf %175 : vector<4x128xf32> to vector<4x128xbf16>
    %c0_142 = arith.constant 0 : index
    %c0_143 = arith.constant 0 : index
    %c0_144 = arith.constant 0 : index
    %177 = vector.load %arg6[%c0_142, %c0_143, %c0_144] : memref<3x128x256xbf16, #tpu.memory_space<vmem>>, vector<1x128x256xbf16>
    %178 = vector.shape_cast %177 : vector<1x128x256xbf16> to vector<128x256xbf16>
    %cst_145 = arith.constant dense<0.000000e+00> : vector<4x256xf32>
    %179 = tpu.matmul %176, %178, %cst_145 {dimension_numbers = #tpu.dot_dimension_numbers<[1], [0], [0], [1], [0, 0, 1, 1], [], []>} : vector<4x128xbf16>, vector<128x256xbf16>, vector<4x256xf32> -> vector<4x256xf32>
    %180 = arith.addf %174, %179 : vector<4x256xf32>
    %c1_146 = arith.constant 1 : index
    %c0_147 = arith.constant 0 : index
    %181 = vector.load %arg16[%c1_146, %c0_147] : memref<6x128xf32, #tpu.memory_space<vmem>>, vector<4x128xf32>
    %182 = arith.truncf %181 : vector<4x128xf32> to vector<4x128xbf16>
    %c1_148 = arith.constant 1 : index
    %c0_149 = arith.constant 0 : index
    %c0_150 = arith.constant 0 : index
    %183 = vector.load %arg6[%c1_148, %c0_149, %c0_150] : memref<3x128x256xbf16, #tpu.memory_space<vmem>>, vector<1x128x256xbf16>
    %184 = vector.shape_cast %183 : vector<1x128x256xbf16> to vector<128x256xbf16>
    %cst_151 = arith.constant dense<0.000000e+00> : vector<4x256xf32>
    %185 = tpu.matmul %182, %184, %cst_151 {dimension_numbers = #tpu.dot_dimension_numbers<[1], [0], [0], [1], [0, 0, 1, 1], [], []>} : vector<4x128xbf16>, vector<128x256xbf16>, vector<4x256xf32> -> vector<4x256xf32>
    %186 = arith.addf %180, %185 : vector<4x256xf32>
    %c2_152 = arith.constant 2 : index
    %c0_153 = arith.constant 0 : index
    %187 = vector.load %arg16[%c2_152, %c0_153] : memref<6x128xf32, #tpu.memory_space<vmem>>, vector<4x128xf32>
    %188 = arith.truncf %187 : vector<4x128xf32> to vector<4x128xbf16>
    %c2_154 = arith.constant 2 : index
    %c0_155 = arith.constant 0 : index
    %c0_156 = arith.constant 0 : index
    %189 = vector.load %arg6[%c2_154, %c0_155, %c0_156] : memref<3x128x256xbf16, #tpu.memory_space<vmem>>, vector<1x128x256xbf16>
    %190 = vector.shape_cast %189 : vector<1x128x256xbf16> to vector<128x256xbf16>
    %cst_157 = arith.constant dense<0.000000e+00> : vector<4x256xf32>
    %191 = tpu.matmul %188, %190, %cst_157 {dimension_numbers = #tpu.dot_dimension_numbers<[1], [0], [0], [1], [0, 0, 1, 1], [], []>} : vector<4x128xbf16>, vector<128x256xbf16>, vector<4x256xf32> -> vector<4x256xf32>
    %192 = arith.addf %186, %191 : vector<4x256xf32>
    %c4 = arith.constant 4 : index
    %c0_158 = arith.constant 0 : index
    %193 = vector.load %arg8[%c4, %c0_158] : memref<6x256xf32, #tpu.memory_space<vmem>>, vector<1x256xf32>
    %194 = vector.broadcast %193 : vector<1x256xf32> to vector<4x256xf32>
    %195 = arith.addf %192, %194 : vector<4x256xf32>
    %cst_159 = arith.constant 0.000000e+00 : f32
    %196 = vector.broadcast %cst_159 : f32 to vector<4x256xf32>
    %197 = arith.maximumf %195, %196 : vector<4x256xf32>
    %cst_160 = arith.constant 0.000000e+00 : f32
    %198 = vector.broadcast %cst_160 : f32 to vector<1x256xf32>
    %c0_161 = arith.constant 0 : index
    %c0_162 = arith.constant 0 : index
    %199 = vector.load %arg17[%c0_161, %c0_162] : memref<6x256xf32, #tpu.memory_space<vmem>>, vector<1x256xf32>
    tpu.vector_store %arg17[%c0_161, %c0_162], %198 {strides = array<i32>} : memref<6x256xf32, #tpu.memory_space<vmem>>, vector<1x256xf32>,
    %c5_163 = arith.constant 5 : index
    %c0_164 = arith.constant 0 : index
    %200 = vector.load %arg17[%c5_163, %c0_164] : memref<6x256xf32, #tpu.memory_space<vmem>>, vector<1x256xf32>
    tpu.vector_store %arg17[%c5_163, %c0_164], %198 {strides = array<i32>} : memref<6x256xf32, #tpu.memory_space<vmem>>, vector<1x256xf32>,
    %c1_165 = arith.constant 1 : index
    %c0_166 = arith.constant 0 : index
    %201 = vector.load %arg17[%c1_165, %c0_166] : memref<6x256xf32, #tpu.memory_space<vmem>>, vector<4x256xf32>
    tpu.vector_store %arg17[%c1_165, %c0_166], %197 {strides = array<i32>} : memref<6x256xf32, #tpu.memory_space<vmem>>, vector<4x256xf32>,
    %cst_167 = arith.constant 0.000000e+00 : f32
    %202 = vector.broadcast %cst_167 : f32 to vector<4x256xf32>
    %c0_168 = arith.constant 0 : index
    %c0_169 = arith.constant 0 : index
    %203 = vector.load %arg17[%c0_168, %c0_169] : memref<6x256xf32, #tpu.memory_space<vmem>>, vector<4x256xf32>
    %204 = arith.truncf %203 : vector<4x256xf32> to vector<4x256xbf16>
    %c0_170 = arith.constant 0 : index
    %c0_171 = arith.constant 0 : index
    %c0_172 = arith.constant 0 : index
    %205 = vector.load %arg7[%c0_170, %c0_171, %c0_172] : memref<3x256x256xbf16, #tpu.memory_space<vmem>>, vector<1x256x256xbf16>
    %206 = vector.shape_cast %205 : vector<1x256x256xbf16> to vector<256x256xbf16>
    %cst_173 = arith.constant dense<0.000000e+00> : vector<4x256xf32>
    %207 = tpu.matmul %204, %206, %cst_173 {dimension_numbers = #tpu.dot_dimension_numbers<[1], [0], [0], [1], [0, 0, 1, 1], [], []>} : vector<4x256xbf16>, vector<256x256xbf16>, vector<4x256xf32> -> vector<4x256xf32>
    %208 = arith.addf %202, %207 : vector<4x256xf32>
    %c1_174 = arith.constant 1 : index
    %c0_175 = arith.constant 0 : index
    %209 = vector.load %arg17[%c1_174, %c0_175] : memref<6x256xf32, #tpu.memory_space<vmem>>, vector<4x256xf32>
    %210 = arith.truncf %209 : vector<4x256xf32> to vector<4x256xbf16>
    %c1_176 = arith.constant 1 : index
    %c0_177 = arith.constant 0 : index
    %c0_178 = arith.constant 0 : index
    %211 = vector.load %arg7[%c1_176, %c0_177, %c0_178] : memref<3x256x256xbf16, #tpu.memory_space<vmem>>, vector<1x256x256xbf16>
    %212 = vector.shape_cast %211 : vector<1x256x256xbf16> to vector<256x256xbf16>
    %cst_179 = arith.constant dense<0.000000e+00> : vector<4x256xf32>
    %213 = tpu.matmul %210, %212, %cst_179 {dimension_numbers = #tpu.dot_dimension_numbers<[1], [0], [0], [1], [0, 0, 1, 1], [], []>} : vector<4x256xbf16>, vector<256x256xbf16>, vector<4x256xf32> -> vector<4x256xf32>
    %214 = arith.addf %208, %213 : vector<4x256xf32>
    %c2_180 = arith.constant 2 : index
    %c0_181 = arith.constant 0 : index
    %215 = vector.load %arg17[%c2_180, %c0_181] : memref<6x256xf32, #tpu.memory_space<vmem>>, vector<4x256xf32>
    %216 = arith.truncf %215 : vector<4x256xf32> to vector<4x256xbf16>
    %c2_182 = arith.constant 2 : index
    %c0_183 = arith.constant 0 : index
    %c0_184 = arith.constant 0 : index
    %217 = vector.load %arg7[%c2_182, %c0_183, %c0_184] : memref<3x256x256xbf16, #tpu.memory_space<vmem>>, vector<1x256x256xbf16>
    %218 = vector.shape_cast %217 : vector<1x256x256xbf16> to vector<256x256xbf16>
    %cst_185 = arith.constant dense<0.000000e+00> : vector<4x256xf32>
    %219 = tpu.matmul %216, %218, %cst_185 {dimension_numbers = #tpu.dot_dimension_numbers<[1], [0], [0], [1], [0, 0, 1, 1], [], []>} : vector<4x256xbf16>, vector<256x256xbf16>, vector<4x256xf32> -> vector<4x256xf32>
    %220 = arith.addf %214, %219 : vector<4x256xf32>
    %c5_186 = arith.constant 5 : index
    %c0_187 = arith.constant 0 : index
    %221 = vector.load %arg8[%c5_186, %c0_187] : memref<6x256xf32, #tpu.memory_space<vmem>>, vector<1x256xf32>
    %222 = vector.broadcast %221 : vector<1x256xf32> to vector<4x256xf32>
    %223 = arith.addf %220, %222 : vector<4x256xf32>
    %cst_188 = arith.constant 0.000000e+00 : f32
    %224 = vector.broadcast %cst_188 : f32 to vector<4x256xf32>
    %225 = arith.maximumf %223, %224 : vector<4x256xf32>
    %c0_189 = arith.constant 0 : index
    %c0_190 = arith.constant 0 : index
    %c0_191 = arith.constant 0 : index
    %226 = vector.load %arg11[%c0_189, %c0_190, %c0_191] : memref<1x4x256xf32, #tpu.memory_space<vmem>>, vector<1x4x256xf32>
    %227 = vector.shape_cast %226 : vector<1x4x256xf32> to vector<4x256xf32>
    %228 = vector.shape_cast %225 : vector<4x256xf32> to vector<1x4x256xf32>
    tpu.vector_store %arg11[%c0_189, %c0_190, %c0_191], %228 {strides = array<i32>} : memref<1x4x256xf32, #tpu.memory_space<vmem>>, vector<1x4x256xf32>,
    return
  }
  func.func @transform_0(%arg0: i32) -> (i32, i32, i32) {
    %c0_i32 = arith.constant 0 : i32
    %c0_i32_0 = arith.constant 0 : i32
    %c0_i32_1 = arith.constant 0 : i32
    return %arg0, %c0_i32, %c0_i32_0 : i32, i32, i32
  }
  func.func @transform_1(%arg0: i32) -> (i32, i32, i32) {
    %c0_i32 = arith.constant 0 : i32
    %c0_i32_0 = arith.constant 0 : i32
    %c0_i32_1 = arith.constant 0 : i32
    %c0_i32_2 = arith.constant 0 : i32
    return %c0_i32, %c0_i32_0, %c0_i32_1 : i32, i32, i32
  }
  func.func @transform_2(%arg0: i32) -> (i32, i32, i32) {
    %c0_i32 = arith.constant 0 : i32
    %c0_i32_0 = arith.constant 0 : i32
    %c0_i32_1 = arith.constant 0 : i32
    %c0_i32_2 = arith.constant 0 : i32
    return %c0_i32, %c0_i32_0, %c0_i32_1 : i32, i32, i32
  }
  func.func @transform_3(%arg0: i32) -> (i32, i32, i32) {
    %c0_i32 = arith.constant 0 : i32
    %c0_i32_0 = arith.constant 0 : i32
    %c0_i32_1 = arith.constant 0 : i32
    %c0_i32_2 = arith.constant 0 : i32
    return %c0_i32, %c0_i32_0, %c0_i32_1 : i32, i32, i32
  }
  func.func @transform_4(%arg0: i32) -> (i32, i32, i32) {
    %c0_i32 = arith.constant 0 : i32
    %c0_i32_0 = arith.constant 0 : i32
    %c0_i32_1 = arith.constant 0 : i32
    %c0_i32_2 = arith.constant 0 : i32
    return %c0_i32, %c0_i32_0, %c0_i32_1 : i32, i32, i32
  }
  func.func @transform_5(%arg0: i32) -> (i32, i32, i32) {
    %c0_i32 = arith.constant 0 : i32
    %c0_i32_0 = arith.constant 0 : i32
    %c0_i32_1 = arith.constant 0 : i32
    %c0_i32_2 = arith.constant 0 : i32
    return %c0_i32, %c0_i32_0, %c0_i32_1 : i32, i32, i32
  }
  func.func @transform_6(%arg0: i32) -> (i32, i32, i32) {
    %c0_i32 = arith.constant 0 : i32
    %c0_i32_0 = arith.constant 0 : i32
    %c0_i32_1 = arith.constant 0 : i32
    %c0_i32_2 = arith.constant 0 : i32
    return %c0_i32, %c0_i32_0, %c0_i32_1 : i32, i32, i32
  }
  func.func @transform_7(%arg0: i32) -> (i32, i32) {
    %c0_i32 = arith.constant 0 : i32
    %c0_i32_0 = arith.constant 0 : i32
    %c0_i32_1 = arith.constant 0 : i32
    return %c0_i32, %c0_i32_0 : i32, i32
  }
  func.func @transform_8(%arg0: i32) -> (i32, i32, i32) {
    %c0_i32 = arith.constant 0 : i32
    %c0_i32_0 = arith.constant 0 : i32
    %c0_i32_1 = arith.constant 0 : i32
    return %arg0, %c0_i32, %c0_i32_0 : i32, i32, i32
  }
  func.func @transform_9(%arg0: i32) -> (i32, i32, i32) {
    %c0_i32 = arith.constant 0 : i32
    %c0_i32_0 = arith.constant 0 : i32
    %c0_i32_1 = arith.constant 0 : i32
    return %arg0, %c0_i32, %c0_i32_0 : i32, i32, i32
  }
  func.func @transform_10(%arg0: i32) -> (i32, i32, i32) {
    %c0_i32 = arith.constant 0 : i32
    %c0_i32_0 = arith.constant 0 : i32
    %c0_i32_1 = arith.constant 0 : i32
    return %arg0, %c0_i32, %c0_i32_0 : i32, i32, i32
  }
}

</mosaic_0001>

<llo_original>
// kernel: tile.33
$region0: #{tile.33}
  #allocation0 [shape = 's32[1]{0}', space=sflag, size = 0x4, scoped, tag = 'scoped memory for tile.33']
  %s0 = inlined_call_operand.vmem [shape: f32[16], index: 0, kind: input, shape index: {}]
  %s1 = inlined_call_operand.vmem [shape: f32[16,16], index: 1, kind: output, shape index: {}]
  // Predicated region
  $region2: #{tile.33} parent=0 // pred_check
    _
  $region3: #{tile.33} parent=0 // pred_check_branch
    %3 = sbr.rel (0) target = $region5
  $region4: #{tile.33} parent=0 // pred_region
    _
  $region5: #{tile.33} parent=0 // pred_fallthru
    _
  %v4 = vld [vmem:[%s0] ss:$0 sm:$0xff]
  %5 = vst [vmem:[%s1] sm:$0xff] %v4
  %s6 = scalar_lea.vmem %s1, 8
  %7 = vst [vmem:[%s6] sm:$0xff] %v4

// kernel: tile.54
$region0: #{tile.54}
  %s0 = inlined_call_operand.vmem [shape: f32[16,16], index: 0, kind: input, shape index: {}]
  %s1 = inlined_call_operand.vmem [shape: f32[1,256], index: 1, kind: output, shape index: {}]
  $region1: #{tile.54} parent=0
    #allocation0 [shape = 'u8[8192]{0}', space=vmem, size = 0x2000, scoped, tag = 'scoped mem for output reshape']
    %s2 = smov 3
    %v3 = vld [vmem:[%s0] ss:$8 sm:%s2]
    %vm4 = vcmask 130048
    %5 = vst.msk [vmem:[#allocation0] ss:$8 sm:$0x3] %vm4, %v3
    %s6 = scalar_lea.vmem %s0, 7
    %s7 = smov 3
    %v8 = vld [vmem:[%s6] ss:$8 sm:%s7]
    %9 = vrot.lane.b32.xlu0 %v8, 112
    %v10 = vpop.permute.xlu0 %9
    %vm11 = vcmask 1048448
    %12 = vst.msk [vmem:[#allocation0] ss:$8 sm:$0x3] %vm11, %v10
    %s13 = scalar_lea.vmem %s0, 6
    %s14 = smov 3
    %v15 = vld [vmem:[%s13] ss:$8 sm:%s14]
    %16 = vrot.lane.b32.xlu0 %v15, 96
    %v17 = vpop.permute.xlu0 %16
    %vm18 = vcmask 917248
    %19 = vst.msk [vmem:[#allocation0] ss:$8 sm:$0x3] %vm18, %v17
    %s20 = scalar_lea.vmem %s0, 5
    %s21 = smov 3
    %v22 = vld [vmem:[%s20] ss:$8 sm:%s21]
    %23 = vrot.lane.b32.xlu0 %v22, 80
    %v24 = vpop.permute.xlu0 %23
    %vm25 = vcmask 786048
    %26 = vst.msk [vmem:[#allocation0] ss:$8 sm:$0x3] %vm25, %v24
    %s27 = scalar_lea.vmem %s0, 4
    %s28 = smov 3
    %v29 = vld [vmem:[%s27] ss:$8 sm:%s28]
    %30 = vrot.lane.b32.xlu0 %v29, 64
    %v31 = vpop.permute.xlu0 %30
    %vm32 = vcmask 654848
    %33 = vst.msk [vmem:[#allocation0] ss:$8 sm:$0x3] %vm32, %v31
    %s34 = scalar_lea.vmem %s0, 3
    %s35 = smov 3
    %v36 = vld [vmem:[%s34] ss:$8 sm:%s35]
    %37 = vrot.lane.b32.xlu0 %v36, 48
    %v38 = vpop.permute.xlu0 %37
    %vm39 = vcmask 523648
    %40 = vst.msk [vmem:[#allocation0] ss:$8 sm:$0x3] %vm39, %v38
    %s41 = scalar_lea.vmem %s0, 2
    %s42 = smov 3
    %v43 = vld [vmem:[%s41] ss:$8 sm:%s42]
    %44 = vrot.lane.b32.xlu0 %v43, 32
    %v45 = vpop.permute.xlu0 %44
    %vm46 = vcmask 392448
    %47 = vst.msk [vmem:[#allocation0] ss:$8 sm:$0x3] %vm46, %v45
    %s48 = scalar_lea.vmem %s0, 1
    %s49 = smov 3
    %v50 = vld [vmem:[%s48] ss:$8 sm:%s49]
    %51 = vrot.lane.b32.xlu0 %v50, 16
    %v52 = vpop.permute.xlu0 %51
    %vm53 = vcmask 261248
    %54 = vst.msk [vmem:[#allocation0] ss:$8 sm:$0x3] %vm53, %v52
    %s56 = sshllo.u32 0, 1
    %v58 = vld [vmem:[#allocation0] sm:%s56]
    %s59 = sshllo.u32 0, 1
    %60 = vst [vmem:[%s1] sm:%s59] %v58
    %s61 = scalar_lea.vmem [#allocation0], 8
    %v62 = vld [vmem:[%s61] sm:%s56]
    %s63 = sshllo.u32 0, 1
    %s64 = scalar_lea.vmem %s1, 1
    %65 = vst [vmem:[%s64] sm:%s63] %v62

// kernel: tile.41
$region0: #{tile.41}
  #allocation0 [shape = 's32[1]{0}', space=sflag, size = 0x4, scoped, tag = 'scoped memory for tile.41']
  %s0 = inlined_call_operand.vmem [shape: f32[32], index: 0, kind: input, shape index: {}]
  %s1 = inlined_call_operand.vmem [shape: f32[8,32], index: 1, kind: output, shape index: {}]
  // Predicated region
  $region2: #{tile.41} parent=0 // pred_check
    _
  $region3: #{tile.41} parent=0 // pred_check_branch
    %3 = sbr.rel (0) target = $region5
  $region4: #{tile.41} parent=0 // pred_region
    _
  $region5: #{tile.41} parent=0 // pred_fallthru
    _
  %v4 = vld [vmem:[%s0] ss:$0 sm:$0xff]
  %5 = vst [vmem:[%s1] sm:$0xff] %v4

// kernel: tile.56
$region0: #{tile.56}
  %s0 = inlined_call_operand.vmem [shape: f32[8,32], index: 0, kind: input, shape index: {}]
  %s1 = inlined_call_operand.vmem [shape: f32[1,256], index: 1, kind: output, shape index: {}]
  $region1: #{tile.56} parent=0
    #allocation0 [shape = 'u8[8192]{0}', space=vmem, size = 0x2000, scoped, tag = 'scoped mem for output reshape']
    %s2 = smov 3
    %v3 = vld [vmem:[%s0] ss:$4 sm:%s2]
    %vm4 = vcmask 261120
    %5 = vst.msk [vmem:[#allocation0] ss:$8 sm:$0x3] %vm4, %v3
    %s6 = scalar_lea.vmem %s0, 3
    %s7 = smov 3
    %v8 = vld [vmem:[%s6] ss:$4 sm:%s7]
    %9 = vrot.lane.b32.xlu0 %v8, 96
    %v10 = vpop.permute.xlu0 %9
    %vm11 = vcmask 1048320
    %12 = vst.msk [vmem:[#allocation0] ss:$8 sm:$0x3] %vm11, %v10
    %s13 = scalar_lea.vmem %s0, 2
    %s14 = smov 3
    %v15 = vld [vmem:[%s13] ss:$4 sm:%s14]
    %16 = vrot.lane.b32.xlu0 %v15, 64
    %v17 = vpop.permute.xlu0 %16
    %vm18 = vcmask 785920
    %19 = vst.msk [vmem:[#allocation0] ss:$8 sm:$0x3] %vm18, %v17
    %s20 = scalar_lea.vmem %s0, 1
    %s21 = smov 3
    %v22 = vld [vmem:[%s20] ss:$4 sm:%s21]
    %23 = vrot.lane.b32.xlu0 %v22, 32
    %v24 = vpop.permute.xlu0 %23
    %vm25 = vcmask 523520
    %26 = vst.msk [vmem:[#allocation0] ss:$8 sm:$0x3] %vm25, %v24
    %s28 = sshllo.u32 0, 1
    %v30 = vld [vmem:[#allocation0] sm:%s28]
    %s31 = sshllo.u32 0, 1
    %32 = vst [vmem:[%s1] sm:%s31] %v30
    %s33 = scalar_lea.vmem [#allocation0], 8
    %v34 = vld [vmem:[%s33] sm:%s28]
    %s35 = sshllo.u32 0, 1
    %s36 = scalar_lea.vmem %s1, 1
    %37 = vst [vmem:[%s36] sm:%s35] %v34

// kernel: tile.49
$region0: #{tile.49}
  #allocation0 [shape = 's32[1]{0}', space=sflag, size = 0x4, scoped, tag = 'scoped memory for tile.49']
  %s0 = inlined_call_operand.vmem [shape: f32[64], index: 0, kind: input, shape index: {}]
  %s1 = inlined_call_operand.vmem [shape: f32[4,64], index: 1, kind: output, shape index: {}]
  // Predicated region
  $region2: #{tile.49} parent=0 // pred_check
    _
  $region3: #{tile.49} parent=0 // pred_check_branch
    %3 = sbr.rel (0) target = $region5
  $region4: #{tile.49} parent=0 // pred_region
    _
  $region5: #{tile.49} parent=0 // pred_fallthru
    _
  %v4 = vld [vmem:[%s0] ss:$0 sm:$0xff]
  %5 = vst [vmem:[%s1] sm:$0xf] %v4

// kernel: tile.58
$region0: #{tile.58}
  %s0 = inlined_call_operand.vmem [shape: f32[4,64], index: 0, kind: input, shape index: {}]
  %s1 = inlined_call_operand.vmem [shape: f32[1,256], index: 1, kind: output, shape index: {}]
  $region1: #{tile.58} parent=0
    #allocation0 [shape = 'u8[8192]{0}', space=vmem, size = 0x2000, scoped, tag = 'scoped mem for output reshape']
    #allocation1 [shape = 'u8[4096]{0}', space=vmem, size = 0x1000, scoped, tag = 'scoped mem for input reshape']
    %s3 = sshllo.u32 0, 4
    %v4 = vld [vmem:[%s0] sm:%s3]
    %5 = vst [vmem:[#allocation1] sm:%s3] %v4
    %s6 = smov 3
    %v7 = vld [vmem:[#allocation1] ss:$2 sm:%s6]
    %vm8 = vcmask 523264
    %9 = vst.msk [vmem:[#allocation0] ss:$8 sm:$0x3] %vm8, %v7
    %s10 = scalar_lea.vmem [#allocation1], 1
    %s11 = smov 3
    %v12 = vld [vmem:[%s10] ss:$2 sm:%s11]
    %13 = vrot.lane.b32.xlu0 %v12, 64
    %v14 = vpop.permute.xlu0 %13
    %vm15 = vcmask 1048064
    %16 = vst.msk [vmem:[#allocation0] ss:$8 sm:$0x3] %vm15, %v14
    %s18 = sshllo.u32 0, 1
    %v20 = vld [vmem:[#allocation0] sm:%s18]
    %s21 = sshllo.u32 0, 1
    %22 = vst [vmem:[%s1] sm:%s21] %v20
    %s23 = scalar_lea.vmem [#allocation0], 8
    %v24 = vld [vmem:[%s23] sm:%s18]
    %s25 = sshllo.u32 0, 1
    %s26 = scalar_lea.vmem %s1, 1
    %27 = vst [vmem:[%s26] sm:%s25] %v24

// kernel: down_forward.1
$region0: #{down_forward.1}
  #allocation0 [shape = 'u32[]', space=smem, size = 0x4, offset = 0x4, fixed_abs, tag = 'smem constant byte address 0x4 - core index']
  #allocation1 [shape = 'u32[144,128]{1,0:T(1,128)}', space=vmem, size = 0x12000, scoped, tag = 'internal scratch']
  #allocation2 [shape = 'f32[18,48]{1,0:T(8,128)}', space=vmem, size = 0x3000, scoped, tag = 'scratch operand']
  #allocation3 [shape = 'f32[18,256]{1,0:T(8,128)}', space=vmem, size = 0x6000, scoped, tag = 'scratch operand']
  #allocation4 [shape = 'f32[10,128]{1,0:T(8,128)}', space=vmem, size = 0x2000, scoped, tag = 'scratch operand']
  #allocation5 [shape = 'f32[10,256]{1,0:T(8,128)}', space=vmem, size = 0x4000, scoped, tag = 'scratch operand']
  #allocation6 [shape = 'f32[6,128]{1,0:T(8,128)}', space=vmem, size = 0x1000, scoped, tag = 'scratch operand']
  #allocation7 [shape = 'f32[6,256]{1,0:T(8,128)}', space=vmem, size = 0x2000, scoped, tag = 'scratch operand']
  %s0 = inlined_call_operand.vmem [shape: f32[2,16,48], index: 0, kind: input, shape index: {}]
  %s1 = inlined_call_operand.vmem [shape: bf16[3,48,256], index: 1, kind: input, shape index: {}]
  %s2 = inlined_call_operand.vmem [shape: bf16[3,256,256], index: 2, kind: input, shape index: {}]
  %s3 = inlined_call_operand.vmem [shape: bf16[3,128,256], index: 3, kind: input, shape index: {}]
  %s4 = inlined_call_operand.vmem [shape: bf16[3,256,256], index: 4, kind: input, shape index: {}]
  %s5 = inlined_call_operand.vmem [shape: bf16[3,128,256], index: 5, kind: input, shape index: {}]
  %s6 = inlined_call_operand.vmem [shape: bf16[3,256,256], index: 6, kind: input, shape index: {}]
  %s7 = inlined_call_operand.vmem [shape: f32[6,256], index: 7, kind: input, shape index: {}]
  %s8 = inlined_call_operand.vmem [shape: f32[2,16,256], index: 8, kind: output, shape index: {0}]
  %s9 = inlined_call_operand.vmem [shape: f32[2,8,256], index: 9, kind: output, shape index: {1}]
  %s10 = inlined_call_operand.vmem [shape: f32[2,4,256], index: 10, kind: output, shape index: {2}]
  %11 = xla_tuple %s8, %s9, %s10
  %s12 = sld [smem:[#allocation0]]
  $region81: #{down_forward.1} parent=0
    _
  %s14 = ssub.s32 1, %s12
  %s15 = scalar_select 0, %s14, %s12
  loop: start=0, step=1, limit=4
  $region2: #{down_forward.1} parent=0 // loop_pre_header
    _
  $region3: #{down_forward.1} parent=0 // loop_header
    %s17 = sphi 0, %s21
    %p18 = scmp.ge.s32.totalorder %s17, 4
    %s27 = sphi 0, %s29
    %s30 = sphi 0, %s27
    %s31 = sphi 0, %s30
    %s47 = sphi 0, %s31
    %s51 = sphi 0, %s51
    %s53 = sphi 0, %s51
    %s54 = sphi 0, %s53
    %s68 = sphi 0, %s54
    %s72 = sphi 0, %s72
    %s74 = sphi 0, %s72
    %s75 = sphi 0, %s74
    %s89 = sphi 0, %s75
    %s93 = sphi 0, %s93
    %s95 = sphi 0, %s93
    %s96 = sphi 0, %s95
    %s110 = sphi 0, %s96
    %s114 = sphi 0, %s114
    %s116 = sphi 0, %s114
    %s117 = sphi 0, %s116
    %s131 = sphi 0, %s117
    %s135 = sphi 0, %s135
    %s137 = sphi 0, %s135
    %s138 = sphi 0, %s137
    %s152 = sphi 0, %s138
    %s156 = sphi 0, %s156
    %s158 = sphi 0, %s156
    %s159 = sphi 0, %s158
    %s173 = sphi 0, %s159
    %s177 = sphi 0, %s177
    %s179 = sphi 0, %s177
    %s180 = sphi 0, %s179
    %s194 = sphi 0, %s180
    %s200 = sphi 0, %s202
    %s203 = sphi 0, %s200
    %s204 = sphi 0, %s203
    %s220 = sphi 0, %s204
    %s226 = sphi 0, %s228
    %s229 = sphi 0, %s226
    %s230 = sphi 0, %s229
    %s246 = sphi 0, %s230
    %s252 = sphi 0, %s254
    %s255 = sphi 0, %s252
    %s256 = sphi 0, %s255
    %s272 = sphi 0, %s256
  $region4: #{down_forward.1} parent=0 // loop_header_branch
    %20 = sbr.rel (%p18) target = $region8
  $region5: #{down_forward.1} parent=0 // loop_body
    %s22 = ssub.s32 %s17, 1
    %s23 = ssub.s32 %s17, 2
    %s24 = sadd.s32 %s17, 1
    %s25 = ssub.s32 %s17, %s24
    %p26 = scmp.eq.s32.totalorder %s25, 0
    %s28 = sadd.s32 %s27, 1
    %s29 = scalar_select %p26, %s27, %s28
    %p32 = pneg %p26
    %p33 = scmp.eq.s32.totalorder %s17, 1
    %p34 = por %p32, %p33
    %p35 = scmp.ne.s32.totalorder %s27, %s30
    %p36 = scmp.eq.s32.totalorder %s17, 0
    %p37 = por %p35, %p36
    %p38 = scmp.ne.s32.totalorder %s27, %s30
    %p39 = scmp.eq.s32.totalorder %s22, 1
    %p40 = por %p38, %p39
    %p41 = scmp.ne.s32.totalorder %s30, %s31
    %p42 = scmp.eq.s32.totalorder %s22, 0
    %p43 = por %p41, %p42
    %p44 = scmp.ne.s32.totalorder %s30, %s31
    %p45 = scmp.eq.s32.totalorder %s23, 1
    %p46 = por %p44, %p45
    %p48 = scmp.ne.s32.totalorder %s31, %s47
    %p49 = scmp.eq.s32.totalorder %s23, 0
    %p50 = por %p48, %p49
    %s52 = sadd.s32 %s51, 1
    %p55 = scmp.eq.s32.totalorder %s17, 1
    %p56 = scmp.ne.s32.totalorder %s51, %s53
    %p57 = scmp.eq.s32.totalorder %s17, 0
    %p58 = por %p56, %p57
    %p59 = scmp.ne.s32.totalorder %s51, %s53
    %p60 = scmp.eq.s32.totalorder %s22, 1
    %p61 = por %p59, %p60
    %p62 = scmp.ne.s32.totalorder %s53, %s54
    %p63 = scmp.eq.s32.totalorder %s22, 0
    %p64 = por %p62, %p63
    %p65 = scmp.ne.s32.totalorder %s53, %s54
    %p66 = scmp.eq.s32.totalorder %s23, 1
    %p67 = por %p65, %p66
    %p69 = scmp.ne.s32.totalorder %s54, %s68
    %p70 = scmp.eq.s32.totalorder %s23, 0
    %p71 = por %p69, %p70
    %s73 = sadd.s32 %s72, 1
    %p76 = scmp.eq.s32.totalorder %s17, 1
    %p77 = scmp.ne.s32.totalorder %s72, %s74
    %p78 = scmp.eq.s32.totalorder %s17, 0
    %p79 = por %p77, %p78
    %p80 = scmp.ne.s32.totalorder %s72, %s74
    %p81 = scmp.eq.s32.totalorder %s22, 1
    %p82 = por %p80, %p81
    %p83 = scmp.ne.s32.totalorder %s74, %s75
    %p84 = scmp.eq.s32.totalorder %s22, 0
    %p85 = por %p83, %p84
    %p86 = scmp.ne.s32.totalorder %s74, %s75
    %p87 = scmp.eq.s32.totalorder %s23, 1
    %p88 = por %p86, %p87
    %p90 = scmp.ne.s32.totalorder %s75, %s89
    %p91 = scmp.eq.s32.totalorder %s23, 0
    %p92 = por %p90, %p91
    %s94 = sadd.s32 %s93, 1
    %p97 = scmp.eq.s32.totalorder %s17, 1
    %p98 = scmp.ne.s32.totalorder %s93, %s95
    %p99 = scmp.eq.s32.totalorder %s17, 0
    %p100 = por %p98, %p99
    %p101 = scmp.ne.s32.totalorder %s93, %s95
    %p102 = scmp.eq.s32.totalorder %s22, 1
    %p103 = por %p101, %p102
    %p104 = scmp.ne.s32.totalorder %s95, %s96
    %p105 = scmp.eq.s32.totalorder %s22, 0
    %p106 = por %p104, %p105
    %p107 = scmp.ne.s32.totalorder %s95, %s96
    %p108 = scmp.eq.s32.totalorder %s23, 1
    %p109 = por %p107, %p108
    %p111 = scmp.ne.s32.totalorder %s96, %s110
    %p112 = scmp.eq.s32.totalorder %s23, 0
    %p113 = por %p111, %p112
    %s115 = sadd.s32 %s114, 1
    %p118 = scmp.eq.s32.totalorder %s17, 1
    %p119 = scmp.ne.s32.totalorder %s114, %s116
    %p120 = scmp.eq.s32.totalorder %s17, 0
    %p121 = por %p119, %p120
    %p122 = scmp.ne.s32.totalorder %s114, %s116
    %p123 = scmp.eq.s32.totalorder %s22, 1
    %p124 = por %p122, %p123
    %p125 = scmp.ne.s32.totalorder %s116, %s117
    %p126 = scmp.eq.s32.totalorder %s22, 0
    %p127 = por %p125, %p126
    %p128 = scmp.ne.s32.totalorder %s116, %s117
    %p129 = scmp.eq.s32.totalorder %s23, 1
    %p130 = por %p128, %p129
    %p132 = scmp.ne.s32.totalorder %s117, %s131
    %p133 = scmp.eq.s32.totalorder %s23, 0
    %p134 = por %p132, %p133
    %s136 = sadd.s32 %s135, 1
    %p139 = scmp.eq.s32.totalorder %s17, 1
    %p140 = scmp.ne.s32.totalorder %s135, %s137
    %p141 = scmp.eq.s32.totalorder %s17, 0
    %p142 = por %p140, %p141
    %p143 = scmp.ne.s32.totalorder %s135, %s137
    %p144 = scmp.eq.s32.totalorder %s22, 1
    %p145 = por %p143, %p144
    %p146 = scmp.ne.s32.totalorder %s137, %s138
    %p147 = scmp.eq.s32.totalorder %s22, 0
    %p148 = por %p146, %p147
    %p149 = scmp.ne.s32.totalorder %s137, %s138
    %p150 = scmp.eq.s32.totalorder %s23, 1
    %p151 = por %p149, %p150
    %p153 = scmp.ne.s32.totalorder %s138, %s152
    %p154 = scmp.eq.s32.totalorder %s23, 0
    %p155 = por %p153, %p154
    %s157 = sadd.s32 %s156, 1
    %p160 = scmp.eq.s32.totalorder %s17, 1
    %p161 = scmp.ne.s32.totalorder %s156, %s158
    %p162 = scmp.eq.s32.totalorder %s17, 0
    %p163 = por %p161, %p162
    %p164 = scmp.ne.s32.totalorder %s156, %s158
    %p165 = scmp.eq.s32.totalorder %s22, 1
    %p166 = por %p164, %p165
    %p167 = scmp.ne.s32.totalorder %s158, %s159
    %p168 = scmp.eq.s32.totalorder %s22, 0
    %p169 = por %p167, %p168
    %p170 = scmp.ne.s32.totalorder %s158, %s159
    %p171 = scmp.eq.s32.totalorder %s23, 1
    %p172 = por %p170, %p171
    %p174 = scmp.ne.s32.totalorder %s159, %s173
    %p175 = scmp.eq.s32.totalorder %s23, 0
    %p176 = por %p174, %p175
    %s178 = sadd.s32 %s177, 1
    %p181 = scmp.eq.s32.totalorder %s17, 1
    %p182 = scmp.ne.s32.totalorder %s177, %s179
    %p183 = scmp.eq.s32.totalorder %s17, 0
    %p184 = por %p182, %p183
    %p185 = scmp.ne.s32.totalorder %s177, %s179
    %p186 = scmp.eq.s32.totalorder %s22, 1
    %p187 = por %p185, %p186
    %p188 = scmp.ne.s32.totalorder %s179, %s180
    %p189 = scmp.eq.s32.totalorder %s22, 0
    %p190 = por %p188, %p189
    %p191 = scmp.ne.s32.totalorder %s179, %s180
    %p192 = scmp.eq.s32.totalorder %s23, 1
    %p193 = por %p191, %p192
    %p195 = scmp.ne.s32.totalorder %s180, %s194
    %p196 = scmp.eq.s32.totalorder %s23, 0
    %p197 = por %p195, %p196
    %s198 = ssub.s32 %s17, %s24
    %p199 = scmp.eq.s32.totalorder %s198, 0
    %s201 = sadd.s32 %s200, 1
    %s202 = scalar_select %p199, %s200, %s201
    %p205 = pneg %p199
    %p206 = scmp.eq.s32.totalorder %s17, 1
    %p207 = por %p205, %p206
    %p208 = scmp.ne.s32.totalorder %s200, %s203
    %p209 = scmp.eq.s32.totalorder %s17, 0
    %p210 = por %p208, %p209
    %p211 = scmp.ne.s32.totalorder %s200, %s203
    %p212 = scmp.eq.s32.totalorder %s22, 1
    %p213 = por %p211, %p212
    %p214 = scmp.ne.s32.totalorder %s203, %s204
    %p215 = scmp.eq.s32.totalorder %s22, 0
    %p216 = por %p214, %p215
    %p217 = scmp.ne.s32.totalorder %s203, %s204
    %p218 = scmp.eq.s32.totalorder %s23, 1
    %p219 = por %p217, %p218
    %p221 = scmp.ne.s32.totalorder %s204, %s220
    %p222 = scmp.eq.s32.totalorder %s23, 0
    %p223 = por %p221, %p222
    %s224 = ssub.s32 %s17, %s24
    %p225 = scmp.eq.s32.totalorder %s224, 0
    %s227 = sadd.s32 %s226, 1
    %s228 = scalar_select %p225, %s226, %s227
    %p231 = pneg %p225
    %p232 = scmp.eq.s32.totalorder %s17, 1
    %p233 = por %p231, %p232
    %p234 = scmp.ne.s32.totalorder %s226, %s229
    %p235 = scmp.eq.s32.totalorder %s17, 0
    %p236 = por %p234, %p235
    %p237 = scmp.ne.s32.totalorder %s226, %s229
    %p238 = scmp.eq.s32.totalorder %s22, 1
    %p239 = por %p237, %p238
    %p240 = scmp.ne.s32.totalorder %s229, %s230
    %p241 = scmp.eq.s32.totalorder %s22, 0
    %p242 = por %p240, %p241
    %p243 = scmp.ne.s32.totalorder %s229, %s230
    %p244 = scmp.eq.s32.totalorder %s23, 1
    %p245 = por %p243, %p244
    %p247 = scmp.ne.s32.totalorder %s230, %s246
    %p248 = scmp.eq.s32.totalorder %s23, 0
    %p249 = por %p247, %p248
    %s250 = ssub.s32 %s17, %s24
    %p251 = scmp.eq.s32.totalorder %s250, 0
    %s253 = sadd.s32 %s252, 1
    %s254 = scalar_select %p251, %s252, %s253
    %p257 = pneg %p251
    %p258 = scmp.eq.s32.totalorder %s17, 1
    %p259 = por %p257, %p258
    %p260 = scmp.ne.s32.totalorder %s252, %s255
    %p261 = scmp.eq.s32.totalorder %s17, 0
    %p262 = por %p260, %p261
    %p263 = scmp.ne.s32.totalorder %s252, %s255
    %p264 = scmp.eq.s32.totalorder %s22, 1
    %p265 = por %p263, %p264
    %p266 = scmp.ne.s32.totalorder %s255, %s256
    %p267 = scmp.eq.s32.totalorder %s22, 0
    %p268 = por %p266, %p267
    %p269 = scmp.ne.s32.totalorder %s255, %s256
    %p270 = scmp.eq.s32.totalorder %s23, 1
    %p271 = por %p269, %p270
    %p273 = scmp.ne.s32.totalorder %s256, %s272
    %p274 = scmp.eq.s32.totalorder %s23, 0
    %p275 = por %p273, %p274
    %p276 = scmp.le.s32.totalorder 1, %s17
    %p277 = scmp.lt.s32.totalorder %s17, 3
    %p278 = pnand %p276, %p277
    %p279 = pneg %p278
    // Predicated region
    $region9: #{down_forward.1} parent=5 // pred_check
      _
    $region10: #{down_forward.1} parent=5 // pred_check_branch
      %281 = sbr.rel (%p278) target = $region12
    $region11: #{down_forward.1} parent=5 // pred_region
      %s282 = ssub.s32 %s17, 1
      // Predicated region
      $region13: #{down_forward.1} parent=11 // pred_check
        %p283 = pneg %p64
      $region14: #{down_forward.1} parent=11 // pred_check_branch
        %285 = sbr.rel (%p283) target = $region16
      $region15: #{down_forward.1} parent=11 // pred_region
        _
      $region16: #{down_forward.1} parent=11 // pred_fallthru
        _
      // Predicated region
      $region17: #{down_forward.1} parent=11 // pred_check
        %p286 = pneg %p85
      $region18: #{down_forward.1} parent=11 // pred_check_branch
        %288 = sbr.rel (%p286) target = $region20
      $region19: #{down_forward.1} parent=11 // pred_region
        _
      $region20: #{down_forward.1} parent=11 // pred_fallthru
        _
      // Predicated region
      $region21: #{down_forward.1} parent=11 // pred_check
        %p289 = pneg %p106
      $region22: #{down_forward.1} parent=11 // pred_check_branch
        %291 = sbr.rel (%p289) target = $region24
      $region23: #{down_forward.1} parent=11 // pred_region
        _
      $region24: #{down_forward.1} parent=11 // pred_fallthru
        _
      // Predicated region
      $region25: #{down_forward.1} parent=11 // pred_check
        %p292 = pneg %p127
      $region26: #{down_forward.1} parent=11 // pred_check_branch
        %294 = sbr.rel (%p292) target = $region28
      $region27: #{down_forward.1} parent=11 // pred_region
        _
      $region28: #{down_forward.1} parent=11 // pred_fallthru
        _
      // Predicated region
      $region29: #{down_forward.1} parent=11 // pred_check
        %p295 = pneg %p148
      $region30: #{down_forward.1} parent=11 // pred_check_branch
        %297 = sbr.rel (%p295) target = $region32
      $region31: #{down_forward.1} parent=11 // pred_region
        _
      $region32: #{down_forward.1} parent=11 // pred_fallthru
        _
      // Predicated region
      $region33: #{down_forward.1} parent=11 // pred_check
        %p298 = pneg %p169
      $region34: #{down_forward.1} parent=11 // pred_check_branch
        %300 = sbr.rel (%p298) target = $region36
      $region35: #{down_forward.1} parent=11 // pred_region
        _
      $region36: #{down_forward.1} parent=11 // pred_fallthru
        _
      // Predicated region
      $region37: #{down_forward.1} parent=11 // pred_check
        %p301 = pneg %p190
      $region38: #{down_forward.1} parent=11 // pred_check_branch
        %303 = sbr.rel (%p301) target = $region40
      $region39: #{down_forward.1} parent=11 // pred_region
        _
      $region40: #{down_forward.1} parent=11 // pred_fallthru
        _
    $region12: #{down_forward.1} parent=5 // pred_fallthru
      _
    %p304 = scmp.lt.s32.totalorder %s17, 2
    // Predicated region
    $region41: #{down_forward.1} parent=5 // pred_check
      %p305 = pneg %p304
    $region42: #{down_forward.1} parent=5 // pred_check_branch
      %307 = sbr.rel (%p305) target = $region44
    $region43: #{down_forward.1} parent=5 // pred_region
      // Predicated region
      $region45: #{down_forward.1} parent=43 // pred_check
        %p308 = pneg %p37
      $region46: #{down_forward.1} parent=43 // pred_check_branch
        %310 = sbr.rel (%p308) target = $region48
      $region47: #{down_forward.1} parent=43 // pred_region
        %p311 = scmp.lt.s32.totalorder %s17, 1
        %s312 = scalar_select %p311, %s17, 1
        %s313 = smul.addr %s312, 2
        %s314 = smul.addr %s313, 8
        %s315 = scalar_lea.vmem %s0, %s314
      $region48: #{down_forward.1} parent=43 // pred_fallthru
        _
    $region44: #{down_forward.1} parent=5 // pred_fallthru
      _
    %p316 = scmp.le.s32.totalorder 1, %s17
    %p317 = scmp.lt.s32.totalorder %s17, 3
    %p318 = pnand %p316, %p317
    %p319 = pneg %p318
    // Predicated region
    $region49: #{down_forward.1} parent=5 // pred_check
      _
    $region50: #{down_forward.1} parent=5 // pred_check_branch
      %321 = sbr.rel (%p318) target = $region52
    $region51: #{down_forward.1} parent=5 // pred_region
      %s322 = ssub.s32 %s17, 1
      %p323 = scmp.lt.s32.totalorder %s22, 1
      %s324 = scalar_select %p323, %s22, 1
      %s325 = smul.addr %s324, 2
      %s326 = smul.addr %s325, 8
      %s327 = scalar_lea.vmem %s0, %s326
      %p328 = pneg %p43
      %p329 = pneg %p40
      %p330 = pneg %p64
      %p331 = pneg %p61
      %p332 = pneg %p85
      %p333 = pneg %p82
      %p334 = pneg %p106
      %p335 = pneg %p103
      %p336 = pneg %p127
      %p337 = pneg %p124
      %p338 = pneg %p148
      %p339 = pneg %p145
      %p340 = pneg %p169
      %p341 = pneg %p166
      %p342 = pneg %p190
      %p343 = pneg %p187
      %p344 = pneg %p216
      %p345 = pneg %p213
      %p346 = scmp.lt.s32.totalorder %s22, 1
      %s347 = scalar_select %p346, %s22, 1
      %s348 = smul.addr %s347, 4
      %s349 = smul.addr %s348, 8
      %s350 = scalar_lea.vmem %s8, %s349
      %p351 = pneg %p242
      %p352 = pneg %p239
      %p353 = scmp.lt.s32.totalorder %s22, 1
      %s354 = scalar_select %p353, %s22, 1
      %s355 = smul.addr %s354, 2
      %s356 = smul.addr %s355, 8
      %s357 = scalar_lea.vmem %s9, %s356
      %p358 = pneg %p268
      %p359 = pneg %p265
      %p360 = scmp.lt.s32.totalorder %s22, 1
      %s361 = scalar_select %p360, %s22, 1
      %s362 = smul.addr %s361, 2
      %s363 = smul.addr %s362, 4
      %s364 = scalar_lea.vmem %s10, %s363
      %p365 = scmp.lt.s32.totalorder %s22, 1
      %s366 = scalar_select %p365, %s22, 1
      %s367 = smul.addr %s366, 2
      %s368 = smul.addr %s367, 8
      %s369 = scalar_lea.vmem %s0, %s368
      %p370 = scmp.lt.s32.totalorder %s22, 1
      %s371 = scalar_select %p370, %s22, 1
      %s372 = smul.addr %s371, 4
      %s373 = smul.addr %s372, 8
      %s374 = scalar_lea.vmem %s8, %s373
      %p375 = scmp.lt.s32.totalorder %s22, 1
      %s376 = scalar_select %p375, %s22, 1
      %s377 = smul.addr %s376, 2
      %s378 = smul.addr %s377, 8
      %s379 = scalar_lea.vmem %s9, %s378
      %p380 = scmp.lt.s32.totalorder %s22, 1
      %s381 = scalar_select %p380, %s22, 1
      %s382 = smul.addr %s381, 2
      %s383 = smul.addr %s382, 4
      %s384 = scalar_lea.vmem %s10, %s383
      %v386 = vld [vmem:[%s369] sm:$0xff]
      %v387 = vld [vmem:[%s369 + $0x8] sm:$0xff]
      %vm388 = vcmask 385024
      %389 = vst.msk [vmem:[#allocation2] sm:$0x1] %vm388, 0.0
      %390 = vst.msk [vmem:[#allocation2 + $0x11] sm:$0x1] %vm388, 0.0
      %vm391 = vcmask 392192
      %392 = vst.msk [vmem:[#allocation2 + $0x1] sm:$0xff] %vm391, %v386
      %393 = vst.msk [vmem:[#allocation2 + $0x9] sm:$0xff] %vm391, %v387
      %v394 = vld [vmem:[#allocation2] sm:$0xff]
      %v395 = vld [vmem:[#allocation2 + $0x8] sm:$0xff]
      %v396 = vpack.c.bf16 %v395, %v394
      %v397 = vld [vmem:[%s1] sm:$0xff]
      %v398 = vld [vmem:[%s1 + $0x8] sm:$0xff]
      %v399 = vld [vmem:[%s1 + $0x10] sm:$0xff]
      %v400 = vld [vmem:[%s1 + $0x18] sm:$0xff]
      %v401 = vld [vmem:[%s1 + $0x20] sm:$0xff]
      %v402 = vld [vmem:[%s1 + $0x28] sm:$0xff]
      %v403 = vld [vmem:[#allocation2 + $0x1] sm:$0xff]
      %v404 = vld [vmem:[#allocation2 + $0x9] sm:$0xff]
      %v405 = vpack.c.bf16 %v404, %v403
      %s406 = scalar_lea.vmem %s1, 48
      %v407 = vld [vmem:[%s406] sm:$0xff]
      %v408 = vld [vmem:[%s406 + $0x8] sm:$0xff]
      %v409 = vld [vmem:[%s406 + $0x10] sm:$0xff]
      %v410 = vld [vmem:[%s406 + $0x18] sm:$0xff]
      %v411 = vld [vmem:[%s406 + $0x20] sm:$0xff]
      %v412 = vld [vmem:[%s406 + $0x28] sm:$0xff]
      %v419 = vunpack.c.l.b16 %v407
      %v420 = vunpack.c.h.b16 %v407
      %v421 = vunpack.c.l.b16 %v408
      %v422 = vunpack.c.h.b16 %v408
      %v423 = vunpack.c.l.b16 %v409
      %v424 = vunpack.c.h.b16 %v409
      %v425 = vunpack.c.l.b16 %v410
      %v426 = vunpack.c.h.b16 %v410
      %v427 = vunpack.c.l.b16 %v411
      %v428 = vunpack.c.h.b16 %v411
      %v429 = vunpack.c.l.b16 %v412
      %v430 = vunpack.c.h.b16 %v412
      %v431 = vpack.c.b16 %v421, %v419
      %v432 = vpack.c.b16 %v422, %v420
      %v433 = vpack.c.b16 %v425, %v423
      %v434 = vpack.c.b16 %v426, %v424
      %v435 = vpack.c.b16 %v429, %v427
      %v436 = vpack.c.b16 %v430, %v428
      %v444 = vsel %vm391, %v405, 0
      %446 = vmatprep.subr.bf16.mxu0 %v432
      %447 = vmatpush1.bf16.msra.mxu0 %v431
      %448 = vmatprep.subr.bf16.mxu0 %v434
      %449 = vmatpush1.bf16.msra.mxu0 %v433
      %450 = vmatprep.subr.bf16.mxu0 %v436
      %451 = vmatpush1.bf16.msra.mxu0 %v435
      %452 = vmatprep.subr.bf16.mxu0 0
      %453 = vmatpush1.bf16.msra.mxu0 0
      %454 = vmatprep.subr.bf16.mxu0 0
      %455 = vmatpush1.bf16.msra.mxu0 0
      %456 = vmatprep.subr.bf16.mxu0 0
      %457 = vmatpush1.bf16.msra.mxu0 0
      %458 = vmatprep.subr.bf16.mxu0 0
      %459 = vmatpush1.bf16.msra.mxu0 0
      %460 = vmatprep.subr.bf16.mxu0 0
      %461 = vmatpush1.bf16.msra.mxu0 0
      %462 = vmatprep.subr.bf16.mxu0 0
      %463 = vmatpush1.bf16.msra.mxu0 0
      %464 = vmatprep.subr.bf16.mxu0 0
      %465 = vmatpush1.bf16.msra.mxu0 0
      %466 = vmatprep.subr.bf16.mxu0 0
      %467 = vmatpush1.bf16.msra.mxu0 0
      %468 = vmatprep.subr.bf16.mxu0 0
      %469 = vmatpush1.bf16.msra.mxu0 0
      %470 = vmatprep.subr.bf16.mxu0 0
      %471 = vmatpush1.bf16.msra.mxu0 0
      %472 = vmatprep.subr.bf16.mxu0 0
      %473 = vmatpush1.bf16.msra.mxu0 0
      %474 = vmatprep.subr.bf16.mxu0 0
      %475 = vmatpush1.bf16.msra.mxu0 0
      %476 = vmatprep.subr.bf16.mxu0 0
      %477 = vmatpush1.bf16.msra.mxu0 0
      %478 = vmatprep.mubr.bf16.mxu0 0
      %479 = vmatmul.mubr.bf16.gmra.mrb[0].mxu0 %v444
      %v480 = vpop.f32.mrb[0].mxu0
      %v481 = vadd.f32 0.0, %v480
      %v482 = vpop.f32.mrb[0].mxu0
      %v483 = vadd.f32 0.0, %v482
      %v484 = vpop.f32.mrb[0].mxu0
      %v485 = vadd.f32 0.0, %v484
      %v486 = vpop.f32.mrb[0].mxu0
      %v487 = vadd.f32 0.0, %v486
      %488 = vdwg.mxu0
      %v495 = vunpack.c.l.b16 %v397
      %v496 = vunpack.c.h.b16 %v397
      %v497 = vunpack.c.l.b16 %v398
      %v498 = vunpack.c.h.b16 %v398
      %v499 = vunpack.c.l.b16 %v399
      %v500 = vunpack.c.h.b16 %v399
      %v501 = vunpack.c.l.b16 %v400
      %v502 = vunpack.c.h.b16 %v400
      %v503 = vunpack.c.l.b16 %v401
      %v504 = vunpack.c.h.b16 %v401
      %v505 = vunpack.c.l.b16 %v402
      %v506 = vunpack.c.h.b16 %v402
      %v507 = vpack.c.b16 %v497, %v495
      %v508 = vpack.c.b16 %v498, %v496
      %v509 = vpack.c.b16 %v501, %v499
      %v510 = vpack.c.b16 %v502, %v500
      %v511 = vpack.c.b16 %v505, %v503
      %v512 = vpack.c.b16 %v506, %v504
      %v520 = vsel %vm391, %v396, 0
      %522 = vmatprep.subr.bf16.mxu0 %v508
      %523 = vmatpush1.bf16.msra.mxu0 %v507
      %524 = vmatprep.subr.bf16.mxu0 %v510
      %525 = vmatpush1.bf16.msra.mxu0 %v509
      %526 = vmatprep.subr.bf16.mxu0 %v512
      %527 = vmatpush1.bf16.msra.mxu0 %v511
      %528 = vmatprep.subr.bf16.mxu0 0
      %529 = vmatpush1.bf16.msra.mxu0 0
      %530 = vmatprep.subr.bf16.mxu0 0
      %531 = vmatpush1.bf16.msra.mxu0 0
      %532 = vmatprep.subr.bf16.mxu0 0
      %533 = vmatpush1.bf16.msra.mxu0 0
      %534 = vmatprep.subr.bf16.mxu0 0
      %535 = vmatpush1.bf16.msra.mxu0 0
      %536 = vmatprep.subr.bf16.mxu0 0
      %537 = vmatpush1.bf16.msra.mxu0 0
      %538 = vmatprep.subr.bf16.mxu0 0
      %539 = vmatpush1.bf16.msra.mxu0 0
      %540 = vmatprep.subr.bf16.mxu0 0
      %541 = vmatpush1.bf16.msra.mxu0 0
      %542 = vmatprep.subr.bf16.mxu0 0
      %543 = vmatpush1.bf16.msra.mxu0 0
      %544 = vmatprep.subr.bf16.mxu0 0
      %545 = vmatpush1.bf16.msra.mxu0 0
      %546 = vmatprep.subr.bf16.mxu0 0
      %547 = vmatpush1.bf16.msra.mxu0 0
      %548 = vmatprep.subr.bf16.mxu0 0
      %549 = vmatpush1.bf16.msra.mxu0 0
      %550 = vmatprep.subr.bf16.mxu0 0
      %551 = vmatpush1.bf16.msra.mxu0 0
      %552 = vmatprep.subr.bf16.mxu0 0
      %553 = vmatpush1.bf16.msra.mxu0 0
      %554 = vmatprep.mubr.bf16.mxu0 0
      %555 = vmatmul.mubr.bf16.gmra.mrb[0].mxu0 %v520
      %v556 = vpop.f32.mrb[0].mxu0
      %v557 = vadd.f32 %v481, %v556
      %v558 = vpop.f32.mrb[0].mxu0
      %v559 = vadd.f32 %v483, %v558
      %v560 = vpop.f32.mrb[0].mxu0
      %v561 = vadd.f32 %v485, %v560
      %v562 = vpop.f32.mrb[0].mxu0
      %v563 = vadd.f32 %v487, %v562
      %564 = vdwg.mxu0
      %v565 = vld [vmem:[#allocation2 + $0x2] sm:$0xff]
      %v566 = vld [vmem:[#allocation2 + $0xa] sm:$0xff]
      %v567 = vpack.c.bf16 %v566, %v565
      %s568 = scalar_lea.vmem %s1, 96
      %v569 = vld [vmem:[%s568] sm:$0xff]
      %v570 = vld [vmem:[%s568 + $0x8] sm:$0xff]
      %v571 = vld [vmem:[%s568 + $0x10] sm:$0xff]
      %v572 = vld [vmem:[%s568 + $0x18] sm:$0xff]
      %v573 = vld [vmem:[%s568 + $0x20] sm:$0xff]
      %v574 = vld [vmem:[%s568 + $0x28] sm:$0xff]
      %v581 = vunpack.c.l.b16 %v569
      %v582 = vunpack.c.h.b16 %v569
      %v583 = vunpack.c.l.b16 %v570
      %v584 = vunpack.c.h.b16 %v570
      %v585 = vunpack.c.l.b16 %v571
      %v586 = vunpack.c.h.b16 %v571
      %v587 = vunpack.c.l.b16 %v572
      %v588 = vunpack.c.h.b16 %v572
      %v589 = vunpack.c.l.b16 %v573
      %v590 = vunpack.c.h.b16 %v573
      %v591 = vunpack.c.l.b16 %v574
      %v592 = vunpack.c.h.b16 %v574
      %v593 = vpack.c.b16 %v583, %v581
      %v594 = vpack.c.b16 %v584, %v582
      %v595 = vpack.c.b16 %v587, %v585
      %v596 = vpack.c.b16 %v588, %v586
      %v597 = vpack.c.b16 %v591, %v589
      %v598 = vpack.c.b16 %v592, %v590
      %v606 = vsel %vm391, %v567, 0
      %608 = vmatprep.subr.bf16.mxu0 %v594
      %609 = vmatpush1.bf16.msra.mxu0 %v593
      %610 = vmatprep.subr.bf16.mxu0 %v596
      %611 = vmatpush1.bf16.msra.mxu0 %v595
      %612 = vmatprep.subr.bf16.mxu0 %v598
      %613 = vmatpush1.bf16.msra.mxu0 %v597
      %614 = vmatprep.subr.bf16.mxu0 0
      %615 = vmatpush1.bf16.msra.mxu0 0
      %616 = vmatprep.subr.bf16.mxu0 0
      %617 = vmatpush1.bf16.msra.mxu0 0
      %618 = vmatprep.subr.bf16.mxu0 0
      %619 = vmatpush1.bf16.msra.mxu0 0
      %620 = vmatprep.subr.bf16.mxu0 0
      %621 = vmatpush1.bf16.msra.mxu0 0
      %622 = vmatprep.subr.bf16.mxu0 0
      %623 = vmatpush1.bf16.msra.mxu0 0
      %624 = vmatprep.subr.bf16.mxu0 0
      %625 = vmatpush1.bf16.msra.mxu0 0
      %626 = vmatprep.subr.bf16.mxu0 0
      %627 = vmatpush1.bf16.msra.mxu0 0
      %628 = vmatprep.subr.bf16.mxu0 0
      %629 = vmatpush1.bf16.msra.mxu0 0
      %630 = vmatprep.subr.bf16.mxu0 0
      %631 = vmatpush1.bf16.msra.mxu0 0
      %632 = vmatprep.subr.bf16.mxu0 0
      %633 = vmatpush1.bf16.msra.mxu0 0
      %634 = vmatprep.subr.bf16.mxu0 0
      %635 = vmatpush1.bf16.msra.mxu0 0
      %636 = vmatprep.subr.bf16.mxu0 0
      %637 = vmatpush1.bf16.msra.mxu0 0
      %638 = vmatprep.subr.bf16.mxu0 0
      %639 = vmatpush1.bf16.msra.mxu0 0
      %640 = vmatprep.mubr.bf16.mxu0 0
      %641 = vmatmul.mubr.bf16.gmra.mrb[0].mxu0 %v606
      %v642 = vpop.f32.mrb[0].mxu0
      %v643 = vadd.f32 0.0, %v642
      %v644 = vpop.f32.mrb[0].mxu0
      %v645 = vadd.f32 0.0, %v644
      %v646 = vpop.f32.mrb[0].mxu0
      %v647 = vadd.f32 0.0, %v646
      %v648 = vpop.f32.mrb[0].mxu0
      %v649 = vadd.f32 0.0, %v648
      %650 = vdwg.mxu0
      %v651 = vadd.f32 %v557, %v643
      %v652 = vadd.f32 %v559, %v645
      %v653 = vadd.f32 %v561, %v647
      %v654 = vadd.f32 %v563, %v649
      %v655 = vld [vmem:[%s7] ss:$8 sm:$0x3]
      %v657 = vlaneseq
      %v658 = vshrl.u32 %v657, 7
      %v659 = vsub.s32 0, %v658
      %v660 = vrot.slane %v655, %v659
      %v661 = vlaneseq
      %v662 = vshrl.u32 %v661, 7
      %v663 = vsub.s32 1, %v662
      %v664 = vrot.slane %v655, %v663
      %v667 = vadd.f32 %v651, %v660
      %v668 = vadd.f32 %v652, %v664
      %v669 = vadd.f32 %v653, %v660
      %v670 = vadd.f32 %v654, %v664
      %v671 = vmax.f32 %v667, 0.0
      %v672 = vmax.f32 %v668, 0.0
      %v673 = vmax.f32 %v669, 0.0
      %v674 = vmax.f32 %v670, 0.0
      %v675 = vlaneseq
      %vm676 = vcmp.ge.s32.totalorder %v675, 0
      %vm677 = vcmp.lt.s32.totalorder %v675, 256
      %vm678 = vmand %vm676, %vm677
      %679 = vst.msk [vmem:[#allocation3] ss:$8 sm:$0x3] %vm678, 0.0
      %680 = vst.msk [vmem:[#allocation3] ss:$8 sm:$0x0] %vm678, 0.0
      %s681 = scalar_lea.vmem [#allocation3], 33
      %682 = vst.msk [vmem:[%s681] ss:$8 sm:$0x3] %vm678, 0.0
      %683 = vst.msk [vmem:[%s681] ss:$8 sm:$0x0] %vm678, 0.0
      %vm688 = vcmask 1040384
      %v689 = vrot.slane %v671, 7
      %v690 = vrot.slane %v672, 7
      %v691 = vrot.slane %v673, 7
      %v692 = vsel %vm688, %v689, %v691
      %v693 = vrot.slane %v674, 7
      %v694 = vsel %vm688, %v690, %v693
      %701 = vst [vmem:[#allocation3] sm:$0xfe] %v689
      %702 = vst [vmem:[#allocation3 + $0x8] sm:$0xfe] %v690
      %703 = vst [vmem:[#allocation3 + $0x10] sm:$0xff] %v692
      %704 = vst [vmem:[#allocation3 + $0x18] sm:$0xff] %v694
      %705 = vst [vmem:[#allocation3 + $0x20] sm:$0x1] %v691
      %706 = vst [vmem:[#allocation3 + $0x28] sm:$0x1] %v693
      %v707 = vld [vmem:[#allocation3] sm:$0xff]
      %v708 = vld [vmem:[#allocation3 + $0x8] sm:$0xff]
      %v709 = vld [vmem:[#allocation3 + $0x10] sm:$0xff]
      %v710 = vld [vmem:[#allocation3 + $0x18] sm:$0xff]
      %v711 = vpack.c.bf16 %v709, %v707
      %v712 = vpack.c.bf16 %v710, %v708
      %v713 = vld [vmem:[%s2] sm:$0xff]
      %v714 = vld [vmem:[%s2 + $0x8] sm:$0xff]
      %v715 = vld [vmem:[%s2 + $0x10] sm:$0xff]
      %v716 = vld [vmem:[%s2 + $0x18] sm:$0xff]
      %v717 = vld [vmem:[%s2 + $0x20] sm:$0xff]
      %v718 = vld [vmem:[%s2 + $0x28] sm:$0xff]
      %v719 = vld [vmem:[%s2 + $0x30] sm:$0xff]
      %v720 = vld [vmem:[%s2 + $0x38] sm:$0xff]
      %v721 = vld [vmem:[%s2 + $0x40] sm:$0xff]
      %v722 = vld [vmem:[%s2 + $0x48] sm:$0xff]
      %v723 = vld [vmem:[%s2 + $0x50] sm:$0xff]
      %v724 = vld [vmem:[%s2 + $0x58] sm:$0xff]
      %v725 = vld [vmem:[%s2 + $0x60] sm:$0xff]
      %v726 = vld [vmem:[%s2 + $0x68] sm:$0xff]
      %v727 = vld [vmem:[%s2 + $0x70] sm:$0xff]
      %v728 = vld [vmem:[%s2 + $0x78] sm:$0xff]
      %v729 = vld [vmem:[%s2 + $0x80] sm:$0xff]
      %v730 = vld [vmem:[%s2 + $0x88] sm:$0xff]
      %v731 = vld [vmem:[%s2 + $0x90] sm:$0xff]
      %v732 = vld [vmem:[%s2 + $0x98] sm:$0xff]
      %v733 = vld [vmem:[%s2 + $0xa0] sm:$0xff]
      %v734 = vld [vmem:[%s2 + $0xa8] sm:$0xff]
      %v735 = vld [vmem:[%s2 + $0xb0] sm:$0xff]
      %v736 = vld [vmem:[%s2 + $0xb8] sm:$0xff]
      %v737 = vld [vmem:[%s2 + $0xc0] sm:$0xff]
      %v738 = vld [vmem:[%s2 + $0xc8] sm:$0xff]
      %v739 = vld [vmem:[%s2 + $0xd0] sm:$0xff]
      %v740 = vld [vmem:[%s2 + $0xd8] sm:$0xff]
      %v741 = vld [vmem:[%s2 + $0xe0] sm:$0xff]
      %v742 = vld [vmem:[%s2 + $0xe8] sm:$0xff]
      %v743 = vld [vmem:[%s2 + $0xf0] sm:$0xff]
      %v744 = vld [vmem:[%s2 + $0xf8] sm:$0xff]
      %v745 = vld [vmem:[#allocation3] sm:$0xfe]
      %v746 = vld [vmem:[#allocation3 + $0x8] sm:$0xfe]
      %v747 = vld [vmem:[#allocation3 + $0x20] sm:$0x1]
      %v748 = vld [vmem:[#allocation3 + $0x28] sm:$0x1]
      %v749 = vpack.c.bf16 %v709, %v745
      %v750 = vpack.c.bf16 %v710, %v746
      %v751 = vpack.c.bf16 %v747, %v747
      %v752 = vpack.c.bf16 %v748, %v748
      %s753 = scalar_lea.vmem %s2, 256
      %v754 = vld [vmem:[%s753] sm:$0xff]
      %v755 = vld [vmem:[%s753 + $0x8] sm:$0xff]
      %v756 = vld [vmem:[%s753 + $0x10] sm:$0xff]
      %v757 = vld [vmem:[%s753 + $0x18] sm:$0xff]
      %v758 = vld [vmem:[%s753 + $0x20] sm:$0xff]
      %v759 = vld [vmem:[%s753 + $0x28] sm:$0xff]
      %v760 = vld [vmem:[%s753 + $0x30] sm:$0xff]
      %v761 = vld [vmem:[%s753 + $0x38] sm:$0xff]
      %v762 = vld [vmem:[%s753 + $0x40] sm:$0xff]
      %v763 = vld [vmem:[%s753 + $0x48] sm:$0xff]
      %v764 = vld [vmem:[%s753 + $0x50] sm:$0xff]
      %v765 = vld [vmem:[%s753 + $0x58] sm:$0xff]
      %v766 = vld [vmem:[%s753 + $0x60] sm:$0xff]
      %v767 = vld [vmem:[%s753 + $0x68] sm:$0xff]
      %v768 = vld [vmem:[%s753 + $0x70] sm:$0xff]
      %v769 = vld [vmem:[%s753 + $0x78] sm:$0xff]
      %v770 = vld [vmem:[%s753 + $0x80] sm:$0xff]
      %v771 = vld [vmem:[%s753 + $0x88] sm:$0xff]
      %v772 = vld [vmem:[%s753 + $0x90] sm:$0xff]
      %v773 = vld [vmem:[%s753 + $0x98] sm:$0xff]
      %v774 = vld [vmem:[%s753 + $0xa0] sm:$0xff]
      %v775 = vld [vmem:[%s753 + $0xa8] sm:$0xff]
      %v776 = vld [vmem:[%s753 + $0xb0] sm:$0xff]
      %v777 = vld [vmem:[%s753 + $0xb8] sm:$0xff]
      %v778 = vld [vmem:[%s753 + $0xc0] sm:$0xff]
      %v779 = vld [vmem:[%s753 + $0xc8] sm:$0xff]
      %v780 = vld [vmem:[%s753 + $0xd0] sm:$0xff]
      %v781 = vld [vmem:[%s753 + $0xd8] sm:$0xff]
      %v782 = vld [vmem:[%s753 + $0xe0] sm:$0xff]
      %v783 = vld [vmem:[%s753 + $0xe8] sm:$0xff]
      %v784 = vld [vmem:[%s753 + $0xf0] sm:$0xff]
      %v785 = vld [vmem:[%s753 + $0xf8] sm:$0xff]
      %vm786 = vsmask.f32 7424
      %v788 = vshrl.u32 %v749, 16
      %v790 = vshll.u32 %v749, 16
      %v792 = vrot.slane %v790, 1
      %v793 = vor.u32 %v788, %v792
      %v795 = vshll.u32 %v751, 16
      %v797 = vrot.slane %v795, 1
      %v798 = vsel %vm786, %v793, %v797
      %v800 = vshrl.u32 %v750, 16
      %v802 = vshll.u32 %v750, 16
      %v804 = vrot.slane %v802, 1
      %v805 = vor.u32 %v800, %v804
      %v807 = vshll.u32 %v752, 16
      %v809 = vrot.slane %v807, 1
      %v810 = vsel %vm786, %v805, %v809
      %v845 = vunpack.c.l.b16 %v754
      %v846 = vunpack.c.h.b16 %v754
      %v847 = vunpack.c.l.b16 %v755
      %v848 = vunpack.c.h.b16 %v755
      %v849 = vunpack.c.l.b16 %v756
      %v850 = vunpack.c.h.b16 %v756
      %v851 = vunpack.c.l.b16 %v757
      %v852 = vunpack.c.h.b16 %v757
      %v853 = vunpack.c.l.b16 %v758
      %v854 = vunpack.c.h.b16 %v758
      %v855 = vunpack.c.l.b16 %v759
      %v856 = vunpack.c.h.b16 %v759
      %v857 = vunpack.c.l.b16 %v760
      %v858 = vunpack.c.h.b16 %v760
      %v859 = vunpack.c.l.b16 %v761
      %v860 = vunpack.c.h.b16 %v761
      %v861 = vunpack.c.l.b16 %v762
      %v862 = vunpack.c.h.b16 %v762
      %v863 = vunpack.c.l.b16 %v763
      %v864 = vunpack.c.h.b16 %v763
      %v865 = vunpack.c.l.b16 %v764
      %v866 = vunpack.c.h.b16 %v764
      %v867 = vunpack.c.l.b16 %v765
      %v868 = vunpack.c.h.b16 %v765
      %v869 = vunpack.c.l.b16 %v766
      %v870 = vunpack.c.h.b16 %v766
      %v871 = vunpack.c.l.b16 %v767
      %v872 = vunpack.c.h.b16 %v767
      %v873 = vunpack.c.l.b16 %v768
      %v874 = vunpack.c.h.b16 %v768
      %v875 = vunpack.c.l.b16 %v769
      %v876 = vunpack.c.h.b16 %v769
      %v877 = vunpack.c.l.b16 %v770
      %v878 = vunpack.c.h.b16 %v770
      %v879 = vunpack.c.l.b16 %v771
      %v880 = vunpack.c.h.b16 %v771
      %v881 = vunpack.c.l.b16 %v772
      %v882 = vunpack.c.h.b16 %v772
      %v883 = vunpack.c.l.b16 %v773
      %v884 = vunpack.c.h.b16 %v773
      %v885 = vunpack.c.l.b16 %v774
      %v886 = vunpack.c.h.b16 %v774
      %v887 = vunpack.c.l.b16 %v775
      %v888 = vunpack.c.h.b16 %v775
      %v889 = vunpack.c.l.b16 %v776
      %v890 = vunpack.c.h.b16 %v776
      %v891 = vunpack.c.l.b16 %v777
      %v892 = vunpack.c.h.b16 %v777
      %v893 = vunpack.c.l.b16 %v778
      %v894 = vunpack.c.h.b16 %v778
      %v895 = vunpack.c.l.b16 %v779
      %v896 = vunpack.c.h.b16 %v779
      %v897 = vunpack.c.l.b16 %v780
      %v898 = vunpack.c.h.b16 %v780
      %v899 = vunpack.c.l.b16 %v781
      %v900 = vunpack.c.h.b16 %v781
      %v901 = vunpack.c.l.b16 %v782
      %v902 = vunpack.c.h.b16 %v782
      %v903 = vunpack.c.l.b16 %v783
      %v904 = vunpack.c.h.b16 %v783
      %v905 = vunpack.c.l.b16 %v784
      %v906 = vunpack.c.h.b16 %v784
      %v907 = vunpack.c.l.b16 %v785
      %v908 = vunpack.c.h.b16 %v785
      %v909 = vpack.c.b16 %v847, %v845
      %v910 = vpack.c.b16 %v848, %v846
      %v911 = vpack.c.b16 %v851, %v849
      %v912 = vpack.c.b16 %v852, %v850
      %v913 = vpack.c.b16 %v855, %v853
      %v914 = vpack.c.b16 %v856, %v854
      %v915 = vpack.c.b16 %v859, %v857
      %v916 = vpack.c.b16 %v860, %v858
      %v917 = vpack.c.b16 %v863, %v861
      %v918 = vpack.c.b16 %v864, %v862
      %v919 = vpack.c.b16 %v867, %v865
      %v920 = vpack.c.b16 %v868, %v866
      %v921 = vpack.c.b16 %v871, %v869
      %v922 = vpack.c.b16 %v872, %v870
      %v923 = vpack.c.b16 %v875, %v873
      %v924 = vpack.c.b16 %v876, %v874
      %v925 = vpack.c.b16 %v879, %v877
      %v926 = vpack.c.b16 %v880, %v878
      %v927 = vpack.c.b16 %v883, %v881
      %v928 = vpack.c.b16 %v884, %v882
      %v929 = vpack.c.b16 %v887, %v885
      %v930 = vpack.c.b16 %v888, %v886
      %v931 = vpack.c.b16 %v891, %v889
      %v932 = vpack.c.b16 %v892, %v890
      %v933 = vpack.c.b16 %v895, %v893
      %v934 = vpack.c.b16 %v896, %v894
      %v935 = vpack.c.b16 %v899, %v897
      %v936 = vpack.c.b16 %v900, %v898
      %v937 = vpack.c.b16 %v903, %v901
      %v938 = vpack.c.b16 %v904, %v902
      %v939 = vpack.c.b16 %v907, %v905
      %v940 = vpack.c.b16 %v908, %v906
      %973 = vmatprep.subr.bf16.mxu0 %v910
      %974 = vmatpush1.bf16.msra.mxu0 %v909
      %975 = vmatprep.subr.bf16.mxu0 %v912
      %976 = vmatpush1.bf16.msra.mxu0 %v911
      %977 = vmatprep.subr.bf16.mxu0 %v914
      %978 = vmatpush1.bf16.msra.mxu0 %v913
      %979 = vmatprep.subr.bf16.mxu0 %v916
      %980 = vmatpush1.bf16.msra.mxu0 %v915
      %981 = vmatprep.subr.bf16.mxu0 %v918
      %982 = vmatpush1.bf16.msra.mxu0 %v917
      %983 = vmatprep.subr.bf16.mxu0 %v920
      %984 = vmatpush1.bf16.msra.mxu0 %v919
      %985 = vmatprep.subr.bf16.mxu0 %v922
      %986 = vmatpush1.bf16.msra.mxu0 %v921
      %987 = vmatprep.subr.bf16.mxu0 %v924
      %988 = vmatpush1.bf16.msra.mxu0 %v923
      %989 = vmatprep.subr.bf16.mxu0 %v926
      %990 = vmatpush1.bf16.msra.mxu0 %v925
      %991 = vmatprep.subr.bf16.mxu0 %v928
      %992 = vmatpush1.bf16.msra.mxu0 %v927
      %993 = vmatprep.subr.bf16.mxu0 %v930
      %994 = vmatpush1.bf16.msra.mxu0 %v929
      %995 = vmatprep.subr.bf16.mxu0 %v932
      %996 = vmatpush1.bf16.msra.mxu0 %v931
      %997 = vmatprep.subr.bf16.mxu0 %v934
      %998 = vmatpush1.bf16.msra.mxu0 %v933
      %999 = vmatprep.subr.bf16.mxu0 %v936
      %1000 = vmatpush1.bf16.msra.mxu0 %v935
      %1001 = vmatprep.subr.bf16.mxu0 %v938
      %1002 = vmatpush1.bf16.msra.mxu0 %v937
      %1003 = vmatprep.subr.bf16.mxu0 %v940
      %1004 = vmatpush1.bf16.msra.mxu0 %v939
      %1005 = vmatprep.mubr.bf16.mxu0 %v810
      %1006 = vmatmul.mubr.bf16.gmra.mrb[0].mxu0 %v798
      %v1007 = vpop.f32.mrb[0].mxu0
      %v1008 = vadd.f32 0.0, %v1007
      %v1009 = vpop.f32.mrb[0].mxu0
      %v1010 = vadd.f32 0.0, %v1009
      %v1011 = vpop.f32.mrb[0].mxu0
      %v1012 = vadd.f32 0.0, %v1011
      %v1013 = vpop.f32.mrb[0].mxu0
      %v1014 = vadd.f32 0.0, %v1013
      %1015 = vdwg.mxu0
      %v1048 = vunpack.c.l.b16 %v713
      %v1049 = vunpack.c.h.b16 %v713
      %v1050 = vunpack.c.l.b16 %v714
      %v1051 = vunpack.c.h.b16 %v714
      %v1052 = vunpack.c.l.b16 %v715
      %v1053 = vunpack.c.h.b16 %v715
      %v1054 = vunpack.c.l.b16 %v716
      %v1055 = vunpack.c.h.b16 %v716
      %v1056 = vunpack.c.l.b16 %v717
      %v1057 = vunpack.c.h.b16 %v717
      %v1058 = vunpack.c.l.b16 %v718
      %v1059 = vunpack.c.h.b16 %v718
      %v1060 = vunpack.c.l.b16 %v719
      %v1061 = vunpack.c.h.b16 %v719
      %v1062 = vunpack.c.l.b16 %v720
      %v1063 = vunpack.c.h.b16 %v720
      %v1064 = vunpack.c.l.b16 %v721
      %v1065 = vunpack.c.h.b16 %v721
      %v1066 = vunpack.c.l.b16 %v722
      %v1067 = vunpack.c.h.b16 %v722
      %v1068 = vunpack.c.l.b16 %v723
      %v1069 = vunpack.c.h.b16 %v723
      %v1070 = vunpack.c.l.b16 %v724
      %v1071 = vunpack.c.h.b16 %v724
      %v1072 = vunpack.c.l.b16 %v725
      %v1073 = vunpack.c.h.b16 %v725
      %v1074 = vunpack.c.l.b16 %v726
      %v1075 = vunpack.c.h.b16 %v726
      %v1076 = vunpack.c.l.b16 %v727
      %v1077 = vunpack.c.h.b16 %v727
      %v1078 = vunpack.c.l.b16 %v728
      %v1079 = vunpack.c.h.b16 %v728
      %v1080 = vunpack.c.l.b16 %v729
      %v1081 = vunpack.c.h.b16 %v729
      %v1082 = vunpack.c.l.b16 %v730
      %v1083 = vunpack.c.h.b16 %v730
      %v1084 = vunpack.c.l.b16 %v731
      %v1085 = vunpack.c.h.b16 %v731
      %v1086 = vunpack.c.l.b16 %v732
      %v1087 = vunpack.c.h.b16 %v732
      %v1088 = vunpack.c.l.b16 %v733
      %v1089 = vunpack.c.h.b16 %v733
      %v1090 = vunpack.c.l.b16 %v734
      %v1091 = vunpack.c.h.b16 %v734
      %v1092 = vunpack.c.l.b16 %v735
      %v1093 = vunpack.c.h.b16 %v735
      %v1094 = vunpack.c.l.b16 %v736
      %v1095 = vunpack.c.h.b16 %v736
      %v1096 = vunpack.c.l.b16 %v737
      %v1097 = vunpack.c.h.b16 %v737
      %v1098 = vunpack.c.l.b16 %v738
      %v1099 = vunpack.c.h.b16 %v738
      %v1100 = vunpack.c.l.b16 %v739
      %v1101 = vunpack.c.h.b16 %v739
      %v1102 = vunpack.c.l.b16 %v740
      %v1103 = vunpack.c.h.b16 %v740
      %v1104 = vunpack.c.l.b16 %v741
      %v1105 = vunpack.c.h.b16 %v741
      %v1106 = vunpack.c.l.b16 %v742
      %v1107 = vunpack.c.h.b16 %v742
      %v1108 = vunpack.c.l.b16 %v743
      %v1109 = vunpack.c.h.b16 %v743
      %v1110 = vunpack.c.l.b16 %v744
      %v1111 = vunpack.c.h.b16 %v744
      %v1112 = vpack.c.b16 %v1050, %v1048
      %v1113 = vpack.c.b16 %v1051, %v1049
      %v1114 = vpack.c.b16 %v1054, %v1052
      %v1115 = vpack.c.b16 %v1055, %v1053
      %v1116 = vpack.c.b16 %v1058, %v1056
      %v1117 = vpack.c.b16 %v1059, %v1057
      %v1118 = vpack.c.b16 %v1062, %v1060
      %v1119 = vpack.c.b16 %v1063, %v1061
      %v1120 = vpack.c.b16 %v1066, %v1064
      %v1121 = vpack.c.b16 %v1067, %v1065
      %v1122 = vpack.c.b16 %v1070, %v1068
      %v1123 = vpack.c.b16 %v1071, %v1069
      %v1124 = vpack.c.b16 %v1074, %v1072
      %v1125 = vpack.c.b16 %v1075, %v1073
      %v1126 = vpack.c.b16 %v1078, %v1076
      %v1127 = vpack.c.b16 %v1079, %v1077
      %v1128 = vpack.c.b16 %v1082, %v1080
      %v1129 = vpack.c.b16 %v1083, %v1081
      %v1130 = vpack.c.b16 %v1086, %v1084
      %v1131 = vpack.c.b16 %v1087, %v1085
      %v1132 = vpack.c.b16 %v1090, %v1088
      %v1133 = vpack.c.b16 %v1091, %v1089
      %v1134 = vpack.c.b16 %v1094, %v1092
      %v1135 = vpack.c.b16 %v1095, %v1093
      %v1136 = vpack.c.b16 %v1098, %v1096
      %v1137 = vpack.c.b16 %v1099, %v1097
      %v1138 = vpack.c.b16 %v1102, %v1100
      %v1139 = vpack.c.b16 %v1103, %v1101
      %v1140 = vpack.c.b16 %v1106, %v1104
      %v1141 = vpack.c.b16 %v1107, %v1105
      %v1142 = vpack.c.b16 %v1110, %v1108
      %v1143 = vpack.c.b16 %v1111, %v1109
      %1176 = vmatprep.subr.bf16.mxu0 %v1113
      %1177 = vmatpush1.bf16.msra.mxu0 %v1112
      %1178 = vmatprep.subr.bf16.mxu0 %v1115
      %1179 = vmatpush1.bf16.msra.mxu0 %v1114
      %1180 = vmatprep.subr.bf16.mxu0 %v1117
      %1181 = vmatpush1.bf16.msra.mxu0 %v1116
      %1182 = vmatprep.subr.bf16.mxu0 %v1119
      %1183 = vmatpush1.bf16.msra.mxu0 %v1118
      %1184 = vmatprep.subr.bf16.mxu0 %v1121
      %1185 = vmatpush1.bf16.msra.mxu0 %v1120
      %1186 = vmatprep.subr.bf16.mxu0 %v1123
      %1187 = vmatpush1.bf16.msra.mxu0 %v1122
      %1188 = vmatprep.subr.bf16.mxu0 %v1125
      %1189 = vmatpush1.bf16.msra.mxu0 %v1124
      %1190 = vmatprep.subr.bf16.mxu0 %v1127
      %1191 = vmatpush1.bf16.msra.mxu0 %v1126
      %1192 = vmatprep.subr.bf16.mxu0 %v1129
      %1193 = vmatpush1.bf16.msra.mxu0 %v1128
      %1194 = vmatprep.subr.bf16.mxu0 %v1131
      %1195 = vmatpush1.bf16.msra.mxu0 %v1130
      %1196 = vmatprep.subr.bf16.mxu0 %v1133
      %1197 = vmatpush1.bf16.msra.mxu0 %v1132
      %1198 = vmatprep.subr.bf16.mxu0 %v1135
      %1199 = vmatpush1.bf16.msra.mxu0 %v1134
      %1200 = vmatprep.subr.bf16.mxu0 %v1137
      %1201 = vmatpush1.bf16.msra.mxu0 %v1136
      %1202 = vmatprep.subr.bf16.mxu0 %v1139
      %1203 = vmatpush1.bf16.msra.mxu0 %v1138
      %1204 = vmatprep.subr.bf16.mxu0 %v1141
      %1205 = vmatpush1.bf16.msra.mxu0 %v1140
      %1206 = vmatprep.subr.bf16.mxu0 %v1143
      %1207 = vmatpush1.bf16.msra.mxu0 %v1142
      %1208 = vmatprep.mubr.bf16.mxu0 %v712
      %1209 = vmatmul.mubr.bf16.gmra.mrb[0].mxu0 %v711
      %v1210 = vpop.f32.mrb[0].mxu0
      %v1211 = vadd.f32 %v1008, %v1210
      %v1212 = vpop.f32.mrb[0].mxu0
      %v1213 = vadd.f32 %v1010, %v1212
      %v1214 = vpop.f32.mrb[0].mxu0
      %v1215 = vadd.f32 %v1012, %v1214
      %v1216 = vpop.f32.mrb[0].mxu0
      %v1217 = vadd.f32 %v1014, %v1216
      %1218 = vdwg.mxu0
      %v1219 = vld [vmem:[#allocation3] sm:$0xfc]
      %v1220 = vld [vmem:[#allocation3 + $0x8] sm:$0xfc]
      %v1221 = vld [vmem:[#allocation3 + $0x20] sm:$0x3]
      %v1222 = vld [vmem:[#allocation3 + $0x28] sm:$0x3]
      %v1223 = vpack.c.bf16 %v709, %v1219
      %v1224 = vpack.c.bf16 %v710, %v1220
      %v1225 = vpack.c.bf16 %v1221, %v1221
      %v1226 = vpack.c.bf16 %v1222, %v1222
      %s1227 = scalar_lea.vmem %s2, 512
      %v1228 = vld [vmem:[%s1227] sm:$0xff]
      %v1229 = vld [vmem:[%s1227 + $0x8] sm:$0xff]
      %v1230 = vld [vmem:[%s1227 + $0x10] sm:$0xff]
      %v1231 = vld [vmem:[%s1227 + $0x18] sm:$0xff]
      %v1232 = vld [vmem:[%s1227 + $0x20] sm:$0xff]
      %v1233 = vld [vmem:[%s1227 + $0x28] sm:$0xff]
      %v1234 = vld [vmem:[%s1227 + $0x30] sm:$0xff]
      %v1235 = vld [vmem:[%s1227 + $0x38] sm:$0xff]
      %v1236 = vld [vmem:[%s1227 + $0x40] sm:$0xff]
      %v1237 = vld [vmem:[%s1227 + $0x48] sm:$0xff]
      %v1238 = vld [vmem:[%s1227 + $0x50] sm:$0xff]
      %v1239 = vld [vmem:[%s1227 + $0x58] sm:$0xff]
      %v1240 = vld [vmem:[%s1227 + $0x60] sm:$0xff]
      %v1241 = vld [vmem:[%s1227 + $0x68] sm:$0xff]
      %v1242 = vld [vmem:[%s1227 + $0x70] sm:$0xff]
      %v1243 = vld [vmem:[%s1227 + $0x78] sm:$0xff]
      %v1244 = vld [vmem:[%s1227 + $0x80] sm:$0xff]
      %v1245 = vld [vmem:[%s1227 + $0x88] sm:$0xff]
      %v1246 = vld [vmem:[%s1227 + $0x90] sm:$0xff]
      %v1247 = vld [vmem:[%s1227 + $0x98] sm:$0xff]
      %v1248 = vld [vmem:[%s1227 + $0xa0] sm:$0xff]
      %v1249 = vld [vmem:[%s1227 + $0xa8] sm:$0xff]
      %v1250 = vld [vmem:[%s1227 + $0xb0] sm:$0xff]
      %v1251 = vld [vmem:[%s1227 + $0xb8] sm:$0xff]
      %v1252 = vld [vmem:[%s1227 + $0xc0] sm:$0xff]
      %v1253 = vld [vmem:[%s1227 + $0xc8] sm:$0xff]
      %v1254 = vld [vmem:[%s1227 + $0xd0] sm:$0xff]
      %v1255 = vld [vmem:[%s1227 + $0xd8] sm:$0xff]
      %v1256 = vld [vmem:[%s1227 + $0xe0] sm:$0xff]
      %v1257 = vld [vmem:[%s1227 + $0xe8] sm:$0xff]
      %v1258 = vld [vmem:[%s1227 + $0xf0] sm:$0xff]
      %v1259 = vld [vmem:[%s1227 + $0xf8] sm:$0xff]
      %vm1264 = vcmask 1046528
      %v1265 = vrot.slane %v1223, 1
      %v1266 = vrot.slane %v1225, 1
      %v1267 = vsel %vm1264, %v1265, %v1266
      %v1268 = vrot.slane %v1224, 1
      %v1269 = vrot.slane %v1226, 1
      %v1270 = vsel %vm1264, %v1268, %v1269
      %v1305 = vunpack.c.l.b16 %v1228
      %v1306 = vunpack.c.h.b16 %v1228
      %v1307 = vunpack.c.l.b16 %v1229
      %v1308 = vunpack.c.h.b16 %v1229
      %v1309 = vunpack.c.l.b16 %v1230
      %v1310 = vunpack.c.h.b16 %v1230
      %v1311 = vunpack.c.l.b16 %v1231
      %v1312 = vunpack.c.h.b16 %v1231
      %v1313 = vunpack.c.l.b16 %v1232
      %v1314 = vunpack.c.h.b16 %v1232
      %v1315 = vunpack.c.l.b16 %v1233
      %v1316 = vunpack.c.h.b16 %v1233
      %v1317 = vunpack.c.l.b16 %v1234
      %v1318 = vunpack.c.h.b16 %v1234
      %v1319 = vunpack.c.l.b16 %v1235
      %v1320 = vunpack.c.h.b16 %v1235
      %v1321 = vunpack.c.l.b16 %v1236
      %v1322 = vunpack.c.h.b16 %v1236
      %v1323 = vunpack.c.l.b16 %v1237
      %v1324 = vunpack.c.h.b16 %v1237
      %v1325 = vunpack.c.l.b16 %v1238
      %v1326 = vunpack.c.h.b16 %v1238
      %v1327 = vunpack.c.l.b16 %v1239
      %v1328 = vunpack.c.h.b16 %v1239
      %v1329 = vunpack.c.l.b16 %v1240
      %v1330 = vunpack.c.h.b16 %v1240
      %v1331 = vunpack.c.l.b16 %v1241
      %v1332 = vunpack.c.h.b16 %v1241
      %v1333 = vunpack.c.l.b16 %v1242
      %v1334 = vunpack.c.h.b16 %v1242
      %v1335 = vunpack.c.l.b16 %v1243
      %v1336 = vunpack.c.h.b16 %v1243
      %v1337 = vunpack.c.l.b16 %v1244
      %v1338 = vunpack.c.h.b16 %v1244
      %v1339 = vunpack.c.l.b16 %v1245
      %v1340 = vunpack.c.h.b16 %v1245
      %v1341 = vunpack.c.l.b16 %v1246
      %v1342 = vunpack.c.h.b16 %v1246
      %v1343 = vunpack.c.l.b16 %v1247
      %v1344 = vunpack.c.h.b16 %v1247
      %v1345 = vunpack.c.l.b16 %v1248
      %v1346 = vunpack.c.h.b16 %v1248
      %v1347 = vunpack.c.l.b16 %v1249
      %v1348 = vunpack.c.h.b16 %v1249
      %v1349 = vunpack.c.l.b16 %v1250
      %v1350 = vunpack.c.h.b16 %v1250
      %v1351 = vunpack.c.l.b16 %v1251
      %v1352 = vunpack.c.h.b16 %v1251
      %v1353 = vunpack.c.l.b16 %v1252
      %v1354 = vunpack.c.h.b16 %v1252
      %v1355 = vunpack.c.l.b16 %v1253
      %v1356 = vunpack.c.h.b16 %v1253
      %v1357 = vunpack.c.l.b16 %v1254
      %v1358 = vunpack.c.h.b16 %v1254
      %v1359 = vunpack.c.l.b16 %v1255
      %v1360 = vunpack.c.h.b16 %v1255
      %v1361 = vunpack.c.l.b16 %v1256
      %v1362 = vunpack.c.h.b16 %v1256
      %v1363 = vunpack.c.l.b16 %v1257
      %v1364 = vunpack.c.h.b16 %v1257
      %v1365 = vunpack.c.l.b16 %v1258
      %v1366 = vunpack.c.h.b16 %v1258
      %v1367 = vunpack.c.l.b16 %v1259
      %v1368 = vunpack.c.h.b16 %v1259
      %v1369 = vpack.c.b16 %v1307, %v1305
      %v1370 = vpack.c.b16 %v1308, %v1306
      %v1371 = vpack.c.b16 %v1311, %v1309
      %v1372 = vpack.c.b16 %v1312, %v1310
      %v1373 = vpack.c.b16 %v1315, %v1313
      %v1374 = vpack.c.b16 %v1316, %v1314
      %v1375 = vpack.c.b16 %v1319, %v1317
      %v1376 = vpack.c.b16 %v1320, %v1318
      %v1377 = vpack.c.b16 %v1323, %v1321
      %v1378 = vpack.c.b16 %v1324, %v1322
      %v1379 = vpack.c.b16 %v1327, %v1325
      %v1380 = vpack.c.b16 %v1328, %v1326
      %v1381 = vpack.c.b16 %v1331, %v1329
      %v1382 = vpack.c.b16 %v1332, %v1330
      %v1383 = vpack.c.b16 %v1335, %v1333
      %v1384 = vpack.c.b16 %v1336, %v1334
      %v1385 = vpack.c.b16 %v1339, %v1337
      %v1386 = vpack.c.b16 %v1340, %v1338
      %v1387 = vpack.c.b16 %v1343, %v1341
      %v1388 = vpack.c.b16 %v1344, %v1342
      %v1389 = vpack.c.b16 %v1347, %v1345
      %v1390 = vpack.c.b16 %v1348, %v1346
      %v1391 = vpack.c.b16 %v1351, %v1349
      %v1392 = vpack.c.b16 %v1352, %v1350
      %v1393 = vpack.c.b16 %v1355, %v1353
      %v1394 = vpack.c.b16 %v1356, %v1354
      %v1395 = vpack.c.b16 %v1359, %v1357
      %v1396 = vpack.c.b16 %v1360, %v1358
      %v1397 = vpack.c.b16 %v1363, %v1361
      %v1398 = vpack.c.b16 %v1364, %v1362
      %v1399 = vpack.c.b16 %v1367, %v1365
      %v1400 = vpack.c.b16 %v1368, %v1366
      %1433 = vmatprep.subr.bf16.mxu0 %v1370
      %1434 = vmatpush1.bf16.msra.mxu0 %v1369
      %1435 = vmatprep.subr.bf16.mxu0 %v1372
      %1436 = vmatpush1.bf16.msra.mxu0 %v1371
      %1437 = vmatprep.subr.bf16.mxu0 %v1374
      %1438 = vmatpush1.bf16.msra.mxu0 %v1373
      %1439 = vmatprep.subr.bf16.mxu0 %v1376
      %1440 = vmatpush1.bf16.msra.mxu0 %v1375
      %1441 = vmatprep.subr.bf16.mxu0 %v1378
      %1442 = vmatpush1.bf16.msra.mxu0 %v1377
      %1443 = vmatprep.subr.bf16.mxu0 %v1380
      %1444 = vmatpush1.bf16.msra.mxu0 %v1379
      %1445 = vmatprep.subr.bf16.mxu0 %v1382
      %1446 = vmatpush1.bf16.msra.mxu0 %v1381
      %1447 = vmatprep.subr.bf16.mxu0 %v1384
      %1448 = vmatpush1.bf16.msra.mxu0 %v1383
      %1449 = vmatprep.subr.bf16.mxu0 %v1386
      %1450 = vmatpush1.bf16.msra.mxu0 %v1385
      %1451 = vmatprep.subr.bf16.mxu0 %v1388
      %1452 = vmatpush1.bf16.msra.mxu0 %v1387
      %1453 = vmatprep.subr.bf16.mxu0 %v1390
      %1454 = vmatpush1.bf16.msra.mxu0 %v1389
      %1455 = vmatprep.subr.bf16.mxu0 %v1392
      %1456 = vmatpush1.bf16.msra.mxu0 %v1391
      %1457 = vmatprep.subr.bf16.mxu0 %v1394
      %1458 = vmatpush1.bf16.msra.mxu0 %v1393
      %1459 = vmatprep.subr.bf16.mxu0 %v1396
      %1460 = vmatpush1.bf16.msra.mxu0 %v1395
      %1461 = vmatprep.subr.bf16.mxu0 %v1398
      %1462 = vmatpush1.bf16.msra.mxu0 %v1397
      %1463 = vmatprep.subr.bf16.mxu0 %v1400
      %1464 = vmatpush1.bf16.msra.mxu0 %v1399
      %1465 = vmatprep.mubr.bf16.mxu0 %v1270
      %1466 = vmatmul.mubr.bf16.gmra.mrb[0].mxu0 %v1267
      %v1467 = vpop.f32.mrb[0].mxu0
      %v1468 = vadd.f32 0.0, %v1467
      %v1469 = vpop.f32.mrb[0].mxu0
      %v1470 = vadd.f32 0.0, %v1469
      %v1471 = vpop.f32.mrb[0].mxu0
      %v1472 = vadd.f32 0.0, %v1471
      %v1473 = vpop.f32.mrb[0].mxu0
      %v1474 = vadd.f32 0.0, %v1473
      %1475 = vdwg.mxu0
      %v1476 = vadd.f32 %v1211, %v1468
      %v1477 = vadd.f32 %v1213, %v1470
      %v1478 = vadd.f32 %v1215, %v1472
      %v1479 = vadd.f32 %v1217, %v1474
      %s1480 = scalar_lea.vmem %s7, 1
      %v1481 = vld [vmem:[%s1480] ss:$8 sm:$0x3]
      %v1483 = vlaneseq
      %v1484 = vshrl.u32 %v1483, 7
      %v1485 = vsub.s32 0, %v1484
      %v1486 = vrot.slane %v1481, %v1485
      %v1487 = vlaneseq
      %v1488 = vshrl.u32 %v1487, 7
      %v1489 = vsub.s32 1, %v1488
      %v1490 = vrot.slane %v1481, %v1489
      %v1493 = vadd.f32 %v1476, %v1486
      %v1494 = vadd.f32 %v1477, %v1490
      %v1495 = vadd.f32 %v1478, %v1486
      %v1496 = vadd.f32 %v1479, %v1490
      %v1497 = vmax.f32 %v1493, 0.0
      %v1498 = vmax.f32 %v1494, 0.0
      %v1499 = vmax.f32 %v1495, 0.0
      %v1500 = vmax.f32 %v1496, 0.0
      %1501 = vst [vmem:[%s374] sm:$0xff] %v1497
      %1502 = vst [vmem:[%s374 + $0x8] sm:$0xff] %v1498
      %1503 = vst [vmem:[%s374 + $0x10] sm:$0xff] %v1499
      %1504 = vst [vmem:[%s374 + $0x18] sm:$0xff] %v1500
      %v1509 = vcombine.low %v1497, %v1498
      %v1510 = vcombine.high %v1497, %v1498
      %v1512 = vunpack.c.l.s4 1983009808
      %v1513 = vunpack.c.0.s8 %v1512
      %v1514 = vlaneseq
      %v1515 = vshrl.u32 %v1514, 7
      %v1516 = vsub.s32 %v1513, %v1515
      %v1517 = vrot.slane %v1509, %v1516
      %v1519 = vunpack.c.l.s4 1983009808
      %v1520 = vunpack.c.0.s8 %v1519
      %v1521 = vlaneseq
      %v1522 = vshrl.u32 %v1521, 7
      %v1523 = vsub.s32 %v1520, %v1522
      %v1524 = vrot.slane %v1510, %v1523
      %v1525 = vcombine.high %v1517, %v1517
      %v1526 = vcombine.high %v1524, %v1524
      %v1527 = vcombine.low %v1499, %v1500
      %v1528 = vcombine.high %v1499, %v1500
      %v1530 = vunpack.c.l.s4 1983009808
      %v1531 = vunpack.c.0.s8 %v1530
      %v1532 = vlaneseq
      %v1533 = vshrl.u32 %v1532, 7
      %v1534 = vsub.s32 %v1531, %v1533
      %v1535 = vrot.slane %v1527, %v1534
      %v1537 = vunpack.c.l.s4 1983009808
      %v1538 = vunpack.c.0.s8 %v1537
      %v1539 = vlaneseq
      %v1540 = vshrl.u32 %v1539, 7
      %v1541 = vsub.s32 %v1538, %v1540
      %v1542 = vrot.slane %v1528, %v1541
      %v1543 = vcombine.high %v1535, %v1535
      %v1544 = vcombine.high %v1542, %v1542
      %v1546 = vunpack.c.l.s4 1983009808
      %v1547 = vunpack.c.0.s8 %v1546
      %v1548 = vlaneseq
      %v1549 = vshrl.u32 %v1548, 7
      %v1550 = vsub.s32 %v1547, %v1549
      %v1551 = vrot.slane %v1517, %v1550
      %v1552 = vcombine.high %v1551, %v1551
      %v1554 = vunpack.c.l.s4 1983009808
      %v1555 = vunpack.c.0.s8 %v1554
      %v1556 = vlaneseq
      %v1557 = vshrl.u32 %v1556, 7
      %v1558 = vsub.s32 %v1555, %v1557
      %v1559 = vrot.slane %v1525, %v1558
      %v1560 = vcombine.high %v1559, %v1559
      %v1562 = vunpack.c.l.s4 1983009808
      %v1563 = vunpack.c.0.s8 %v1562
      %v1564 = vlaneseq
      %v1565 = vshrl.u32 %v1564, 7
      %v1566 = vsub.s32 %v1563, %v1565
      %v1567 = vrot.slane %v1524, %v1566
      %v1568 = vcombine.high %v1567, %v1567
      %v1570 = vunpack.c.l.s4 1983009808
      %v1571 = vunpack.c.0.s8 %v1570
      %v1572 = vlaneseq
      %v1573 = vshrl.u32 %v1572, 7
      %v1574 = vsub.s32 %v1571, %v1573
      %v1575 = vrot.slane %v1526, %v1574
      %v1576 = vcombine.high %v1575, %v1575
      %v1578 = vunpack.c.l.s4 1983009808
      %v1579 = vunpack.c.0.s8 %v1578
      %v1580 = vlaneseq
      %v1581 = vshrl.u32 %v1580, 7
      %v1582 = vsub.s32 %v1579, %v1581
      %v1583 = vrot.slane %v1535, %v1582
      %v1584 = vcombine.high %v1583, %v1583
      %v1586 = vunpack.c.l.s4 1983009808
      %v1587 = vunpack.c.0.s8 %v1586
      %v1588 = vlaneseq
      %v1589 = vshrl.u32 %v1588, 7
      %v1590 = vsub.s32 %v1587, %v1589
      %v1591 = vrot.slane %v1543, %v1590
      %v1592 = vcombine.high %v1591, %v1591
      %v1594 = vunpack.c.l.s4 1983009808
      %v1595 = vunpack.c.0.s8 %v1594
      %v1596 = vlaneseq
      %v1597 = vshrl.u32 %v1596, 7
      %v1598 = vsub.s32 %v1595, %v1597
      %v1599 = vrot.slane %v1542, %v1598
      %v1600 = vcombine.high %v1599, %v1599
      %v1602 = vunpack.c.l.s4 1983009808
      %v1603 = vunpack.c.0.s8 %v1602
      %v1604 = vlaneseq
      %v1605 = vshrl.u32 %v1604, 7
      %v1606 = vsub.s32 %v1603, %v1605
      %v1607 = vrot.slane %v1544, %v1606
      %v1608 = vcombine.high %v1607, %v1607
      %vm1625 = vcmask 1041408
      %v1626 = vsel %vm1625, %v1551, -inf
      %v1627 = vrot.slane %v1626, 4
      %v1628 = vmax.f32 %v1626, %v1627
      %v1629 = vrot.slane %v1628, 2
      %v1630 = vmax.f32 %v1628, %v1629
      %v1631 = vrot.slane %v1630, 1
      %v1632 = vmax.f32 %v1630, %v1631
      %v1633 = vsel %vm1625, %v1552, -inf
      %v1634 = vrot.slane %v1633, 4
      %v1635 = vmax.f32 %v1633, %v1634
      %v1636 = vrot.slane %v1635, 2
      %v1637 = vmax.f32 %v1635, %v1636
      %v1638 = vrot.slane %v1637, 1
      %v1639 = vmax.f32 %v1637, %v1638
      %v1640 = vsel %vm1625, %v1559, -inf
      %v1641 = vrot.slane %v1640, 4
      %v1642 = vmax.f32 %v1640, %v1641
      %v1643 = vrot.slane %v1642, 2
      %v1644 = vmax.f32 %v1642, %v1643
      %v1645 = vrot.slane %v1644, 1
      %v1646 = vmax.f32 %v1644, %v1645
      %v1647 = vsel %vm1625, %v1560, -inf
      %v1648 = vrot.slane %v1647, 4
      %v1649 = vmax.f32 %v1647, %v1648
      %v1650 = vrot.slane %v1649, 2
      %v1651 = vmax.f32 %v1649, %v1650
      %v1652 = vrot.slane %v1651, 1
      %v1653 = vmax.f32 %v1651, %v1652
      %v1654 = vsel %vm1625, %v1567, -inf
      %v1655 = vrot.slane %v1654, 4
      %v1656 = vmax.f32 %v1654, %v1655
      %v1657 = vrot.slane %v1656, 2
      %v1658 = vmax.f32 %v1656, %v1657
      %v1659 = vrot.slane %v1658, 1
      %v1660 = vmax.f32 %v1658, %v1659
      %v1661 = vsel %vm1625, %v1568, -inf
      %v1662 = vrot.slane %v1661, 4
      %v1663 = vmax.f32 %v1661, %v1662
      %v1664 = vrot.slane %v1663, 2
      %v1665 = vmax.f32 %v1663, %v1664
      %v1666 = vrot.slane %v1665, 1
      %v1667 = vmax.f32 %v1665, %v1666
      %v1668 = vsel %vm1625, %v1575, -inf
      %v1669 = vrot.slane %v1668, 4
      %v1670 = vmax.f32 %v1668, %v1669
      %v1671 = vrot.slane %v1670, 2
      %v1672 = vmax.f32 %v1670, %v1671
      %v1673 = vrot.slane %v1672, 1
      %v1674 = vmax.f32 %v1672, %v1673
      %v1675 = vsel %vm1625, %v1576, -inf
      %v1676 = vrot.slane %v1675, 4
      %v1677 = vmax.f32 %v1675, %v1676
      %v1678 = vrot.slane %v1677, 2
      %v1679 = vmax.f32 %v1677, %v1678
      %v1680 = vrot.slane %v1679, 1
      %v1681 = vmax.f32 %v1679, %v1680
      %v1682 = vsel %vm1625, %v1583, -inf
      %v1683 = vrot.slane %v1682, 4
      %v1684 = vmax.f32 %v1682, %v1683
      %v1685 = vrot.slane %v1684, 2
      %v1686 = vmax.f32 %v1684, %v1685
      %v1687 = vrot.slane %v1686, 1
      %v1688 = vmax.f32 %v1686, %v1687
      %v1689 = vsel %vm1625, %v1584, -inf
      %v1690 = vrot.slane %v1689, 4
      %v1691 = vmax.f32 %v1689, %v1690
      %v1692 = vrot.slane %v1691, 2
      %v1693 = vmax.f32 %v1691, %v1692
      %v1694 = vrot.slane %v1693, 1
      %v1695 = vmax.f32 %v1693, %v1694
      %v1696 = vsel %vm1625, %v1591, -inf
      %v1697 = vrot.slane %v1696, 4
      %v1698 = vmax.f32 %v1696, %v1697
      %v1699 = vrot.slane %v1698, 2
      %v1700 = vmax.f32 %v1698, %v1699
      %v1701 = vrot.slane %v1700, 1
      %v1702 = vmax.f32 %v1700, %v1701
      %v1703 = vsel %vm1625, %v1592, -inf
      %v1704 = vrot.slane %v1703, 4
      %v1705 = vmax.f32 %v1703, %v1704
      %v1706 = vrot.slane %v1705, 2
      %v1707 = vmax.f32 %v1705, %v1706
      %v1708 = vrot.slane %v1707, 1
      %v1709 = vmax.f32 %v1707, %v1708
      %v1710 = vsel %vm1625, %v1599, -inf
      %v1711 = vrot.slane %v1710, 4
      %v1712 = vmax.f32 %v1710, %v1711
      %v1713 = vrot.slane %v1712, 2
      %v1714 = vmax.f32 %v1712, %v1713
      %v1715 = vrot.slane %v1714, 1
      %v1716 = vmax.f32 %v1714, %v1715
      %v1717 = vsel %vm1625, %v1600, -inf
      %v1718 = vrot.slane %v1717, 4
      %v1719 = vmax.f32 %v1717, %v1718
      %v1720 = vrot.slane %v1719, 2
      %v1721 = vmax.f32 %v1719, %v1720
      %v1722 = vrot.slane %v1721, 1
      %v1723 = vmax.f32 %v1721, %v1722
      %v1724 = vsel %vm1625, %v1607, -inf
      %v1725 = vrot.slane %v1724, 4
      %v1726 = vmax.f32 %v1724, %v1725
      %v1727 = vrot.slane %v1726, 2
      %v1728 = vmax.f32 %v1726, %v1727
      %v1729 = vrot.slane %v1728, 1
      %v1730 = vmax.f32 %v1728, %v1729
      %v1731 = vsel %vm1625, %v1608, -inf
      %v1732 = vrot.slane %v1731, 4
      %v1733 = vmax.f32 %v1731, %v1732
      %v1734 = vrot.slane %v1733, 2
      %v1735 = vmax.f32 %v1733, %v1734
      %v1736 = vrot.slane %v1735, 1
      %v1737 = vmax.f32 %v1735, %v1736
      %1738 = vst [vmem:[#allocation4] sm:$0x1] 0.0
      %1739 = vst [vmem:[#allocation4 + $0x9] sm:$0x1] 0.0
      %1748 = vrot.lane.b32.xlu0 %v1632, 112
      %v1749 = vpop.permute.xlu0 %1748
      %1750 = vrot.lane.b32.xlu0 %v1646, 112
      %v1751 = vpop.permute.xlu0 %1750
      %1752 = vrot.lane.b32.xlu0 %v1660, 112
      %v1753 = vpop.permute.xlu0 %1752
      %1754 = vrot.lane.b32.xlu0 %v1674, 112
      %v1755 = vpop.permute.xlu0 %1754
      %1756 = vrot.lane.b32.xlu0 %v1688, 112
      %v1757 = vpop.permute.xlu0 %1756
      %1758 = vrot.lane.b32.xlu0 %v1702, 112
      %v1759 = vpop.permute.xlu0 %1758
      %1760 = vrot.lane.b32.xlu0 %v1716, 112
      %v1761 = vpop.permute.xlu0 %1760
      %1762 = vrot.lane.b32.xlu0 %v1730, 112
      %v1763 = vpop.permute.xlu0 %1762
      %v1772 = vmax.f32 %v1632, %v1749
      %v1773 = vmax.f32 %v1646, %v1751
      %v1774 = vmax.f32 %v1660, %v1753
      %v1775 = vmax.f32 %v1674, %v1755
      %v1776 = vmax.f32 %v1688, %v1757
      %v1777 = vmax.f32 %v1702, %v1759
      %v1778 = vmax.f32 %v1716, %v1761
      %v1779 = vmax.f32 %v1730, %v1763
      %v1788 = vrot.slane %v1773, 7
      %vm1789 = vcmask 1041409
      %v1790 = vsel %vm1789, %v1788, %v1772
      %v1791 = vrot.slane %v1774, 6
      %vm1792 = vcmask 1042434
      %v1793 = vsel %vm1792, %v1791, %v1790
      %v1794 = vrot.slane %v1775, 5
      %vm1795 = vcmask 1043459
      %v1796 = vsel %vm1795, %v1794, %v1793
      %v1797 = vrot.slane %v1776, 4
      %vm1798 = vcmask 1044484
      %v1799 = vsel %vm1798, %v1797, %v1796
      %v1800 = vrot.slane %v1777, 3
      %vm1801 = vcmask 1045509
      %v1802 = vsel %vm1801, %v1800, %v1799
      %v1803 = vrot.slane %v1778, 2
      %vm1804 = vcmask 1046534
      %v1805 = vsel %vm1804, %v1803, %v1802
      %v1806 = vrot.slane %v1779, 1
      %vm1807 = vcmask 1047559
      %v1808 = vsel %vm1807, %v1806, %v1805
      %vm1810 = vcmask 130048
      %1811 = vst.msk [vmem:[#allocation4 + $0x1] sm:$0xff] %vm1810, %v1808
      %1812 = vrot.lane.b32.xlu0 %v1808, 112
      %v1813 = vpop.permute.xlu0 %1812
      %vm1815 = vcmask 261248
      %1816 = vst.msk [vmem:[#allocation4 + $0x1] sm:$0xff] %vm1815, %v1813
      %1817 = vrot.lane.b32.xlu0 %v1808, 96
      %v1818 = vpop.permute.xlu0 %1817
      %vm1820 = vcmask 392448
      %1821 = vst.msk [vmem:[#allocation4 + $0x1] sm:$0xff] %vm1820, %v1818
      %1822 = vrot.lane.b32.xlu0 %v1808, 80
      %v1823 = vpop.permute.xlu0 %1822
      %vm1825 = vcmask 523648
      %1826 = vst.msk [vmem:[#allocation4 + $0x1] sm:$0xff] %vm1825, %v1823
      %1835 = vrot.lane.b32.xlu0 %v1639, 112
      %v1836 = vpop.permute.xlu0 %1835
      %1837 = vrot.lane.b32.xlu0 %v1653, 112
      %v1838 = vpop.permute.xlu0 %1837
      %1839 = vrot.lane.b32.xlu0 %v1667, 112
      %v1840 = vpop.permute.xlu0 %1839
      %1841 = vrot.lane.b32.xlu0 %v1681, 112
      %v1842 = vpop.permute.xlu0 %1841
      %1843 = vrot.lane.b32.xlu0 %v1695, 112
      %v1844 = vpop.permute.xlu0 %1843
      %1845 = vrot.lane.b32.xlu0 %v1709, 112
      %v1846 = vpop.permute.xlu0 %1845
      %1847 = vrot.lane.b32.xlu0 %v1723, 112
      %v1848 = vpop.permute.xlu0 %1847
      %1849 = vrot.lane.b32.xlu0 %v1737, 112
      %v1850 = vpop.permute.xlu0 %1849
      %v1859 = vmax.f32 %v1639, %v1836
      %v1860 = vmax.f32 %v1653, %v1838
      %v1861 = vmax.f32 %v1667, %v1840
      %v1862 = vmax.f32 %v1681, %v1842
      %v1863 = vmax.f32 %v1695, %v1844
      %v1864 = vmax.f32 %v1709, %v1846
      %v1865 = vmax.f32 %v1723, %v1848
      %v1866 = vmax.f32 %v1737, %v1850
      %v1875 = vrot.slane %v1860, 7
      %v1876 = vsel %vm1789, %v1875, %v1859
      %v1877 = vrot.slane %v1861, 6
      %v1878 = vsel %vm1792, %v1877, %v1876
      %v1879 = vrot.slane %v1862, 5
      %v1880 = vsel %vm1795, %v1879, %v1878
      %v1881 = vrot.slane %v1863, 4
      %v1882 = vsel %vm1798, %v1881, %v1880
      %v1883 = vrot.slane %v1864, 3
      %v1884 = vsel %vm1801, %v1883, %v1882
      %v1885 = vrot.slane %v1865, 2
      %v1886 = vsel %vm1804, %v1885, %v1884
      %v1887 = vrot.slane %v1866, 1
      %v1888 = vsel %vm1807, %v1887, %v1886
      %1889 = vrot.lane.b32.xlu0 %v1888, 64
      %v1890 = vpop.permute.xlu0 %1889
      %vm1892 = vcmask 654848
      %1893 = vst.msk [vmem:[#allocation4 + $0x1] sm:$0xff] %vm1892, %v1890
      %1894 = vrot.lane.b32.xlu0 %v1888, 48
      %v1895 = vpop.permute.xlu0 %1894
      %vm1897 = vcmask 786048
      %1898 = vst.msk [vmem:[#allocation4 + $0x1] sm:$0xff] %vm1897, %v1895
      %1899 = vrot.lane.b32.xlu0 %v1888, 32
      %v1900 = vpop.permute.xlu0 %1899
      %vm1902 = vcmask 917248
      %1903 = vst.msk [vmem:[#allocation4 + $0x1] sm:$0xff] %vm1902, %v1900
      %1904 = vrot.lane.b32.xlu0 %v1888, 16
      %v1905 = vpop.permute.xlu0 %1904
      %vm1907 = vcmask 1048448
      %1908 = vst.msk [vmem:[#allocation4 + $0x1] sm:$0xff] %vm1907, %v1905
      %v1909 = vld [vmem:[#allocation4] sm:$0xff]
      %v1910 = vpack.c.bf16 %v1909, %v1909
      %v1911 = vld [vmem:[%s3] sm:$0xff]
      %v1912 = vld [vmem:[%s3 + $0x8] sm:$0xff]
      %v1913 = vld [vmem:[%s3 + $0x10] sm:$0xff]
      %v1914 = vld [vmem:[%s3 + $0x18] sm:$0xff]
      %v1915 = vld [vmem:[%s3 + $0x20] sm:$0xff]
      %v1916 = vld [vmem:[%s3 + $0x28] sm:$0xff]
      %v1917 = vld [vmem:[%s3 + $0x30] sm:$0xff]
      %v1918 = vld [vmem:[%s3 + $0x38] sm:$0xff]
      %v1919 = vld [vmem:[%s3 + $0x40] sm:$0xff]
      %v1920 = vld [vmem:[%s3 + $0x48] sm:$0xff]
      %v1921 = vld [vmem:[%s3 + $0x50] sm:$0xff]
      %v1922 = vld [vmem:[%s3 + $0x58] sm:$0xff]
      %v1923 = vld [vmem:[%s3 + $0x60] sm:$0xff]
      %v1924 = vld [vmem:[%s3 + $0x68] sm:$0xff]
      %v1925 = vld [vmem:[%s3 + $0x70] sm:$0xff]
      %v1926 = vld [vmem:[%s3 + $0x78] sm:$0xff]
      %v1927 = vld [vmem:[#allocation4 + $0x1] sm:$0xff]
      %v1928 = vpack.c.bf16 %v1927, %v1927
      %s1929 = scalar_lea.vmem %s3, 128
      %v1930 = vld [vmem:[%s1929] sm:$0xff]
      %v1931 = vld [vmem:[%s1929 + $0x8] sm:$0xff]
      %v1932 = vld [vmem:[%s1929 + $0x10] sm:$0xff]
      %v1933 = vld [vmem:[%s1929 + $0x18] sm:$0xff]
      %v1934 = vld [vmem:[%s1929 + $0x20] sm:$0xff]
      %v1935 = vld [vmem:[%s1929 + $0x28] sm:$0xff]
      %v1936 = vld [vmem:[%s1929 + $0x30] sm:$0xff]
      %v1937 = vld [vmem:[%s1929 + $0x38] sm:$0xff]
      %v1938 = vld [vmem:[%s1929 + $0x40] sm:$0xff]
      %v1939 = vld [vmem:[%s1929 + $0x48] sm:$0xff]
      %v1940 = vld [vmem:[%s1929 + $0x50] sm:$0xff]
      %v1941 = vld [vmem:[%s1929 + $0x58] sm:$0xff]
      %v1942 = vld [vmem:[%s1929 + $0x60] sm:$0xff]
      %v1943 = vld [vmem:[%s1929 + $0x68] sm:$0xff]
      %v1944 = vld [vmem:[%s1929 + $0x70] sm:$0xff]
      %v1945 = vld [vmem:[%s1929 + $0x78] sm:$0xff]
      %v1962 = vunpack.c.l.b16 %v1930
      %v1963 = vunpack.c.h.b16 %v1930
      %v1964 = vunpack.c.l.b16 %v1931
      %v1965 = vunpack.c.h.b16 %v1931
      %v1966 = vunpack.c.l.b16 %v1932
      %v1967 = vunpack.c.h.b16 %v1932
      %v1968 = vunpack.c.l.b16 %v1933
      %v1969 = vunpack.c.h.b16 %v1933
      %v1970 = vunpack.c.l.b16 %v1934
      %v1971 = vunpack.c.h.b16 %v1934
      %v1972 = vunpack.c.l.b16 %v1935
      %v1973 = vunpack.c.h.b16 %v1935
      %v1974 = vunpack.c.l.b16 %v1936
      %v1975 = vunpack.c.h.b16 %v1936
      %v1976 = vunpack.c.l.b16 %v1937
      %v1977 = vunpack.c.h.b16 %v1937
      %v1978 = vunpack.c.l.b16 %v1938
      %v1979 = vunpack.c.h.b16 %v1938
      %v1980 = vunpack.c.l.b16 %v1939
      %v1981 = vunpack.c.h.b16 %v1939
      %v1982 = vunpack.c.l.b16 %v1940
      %v1983 = vunpack.c.h.b16 %v1940
      %v1984 = vunpack.c.l.b16 %v1941
      %v1985 = vunpack.c.h.b16 %v1941
      %v1986 = vunpack.c.l.b16 %v1942
      %v1987 = vunpack.c.h.b16 %v1942
      %v1988 = vunpack.c.l.b16 %v1943
      %v1989 = vunpack.c.h.b16 %v1943
      %v1990 = vunpack.c.l.b16 %v1944
      %v1991 = vunpack.c.h.b16 %v1944
      %v1992 = vunpack.c.l.b16 %v1945
      %v1993 = vunpack.c.h.b16 %v1945
      %v1994 = vpack.c.b16 %v1964, %v1962
      %v1995 = vpack.c.b16 %v1965, %v1963
      %v1996 = vpack.c.b16 %v1968, %v1966
      %v1997 = vpack.c.b16 %v1969, %v1967
      %v1998 = vpack.c.b16 %v1972, %v1970
      %v1999 = vpack.c.b16 %v1973, %v1971
      %v2000 = vpack.c.b16 %v1976, %v1974
      %v2001 = vpack.c.b16 %v1977, %v1975
      %v2002 = vpack.c.b16 %v1980, %v1978
      %v2003 = vpack.c.b16 %v1981, %v1979
      %v2004 = vpack.c.b16 %v1984, %v1982
      %v2005 = vpack.c.b16 %v1985, %v1983
      %v2006 = vpack.c.b16 %v1988, %v1986
      %v2007 = vpack.c.b16 %v1989, %v1987
      %v2008 = vpack.c.b16 %v1992, %v1990
      %v2009 = vpack.c.b16 %v1993, %v1991
      %2026 = vmatprep.subr.bf16.mxu0 %v1995
      %2027 = vmatpush1.bf16.msra.mxu0 %v1994
      %2028 = vmatprep.subr.bf16.mxu0 %v1997
      %2029 = vmatpush1.bf16.msra.mxu0 %v1996
      %2030 = vmatprep.subr.bf16.mxu0 %v1999
      %2031 = vmatpush1.bf16.msra.mxu0 %v1998
      %2032 = vmatprep.subr.bf16.mxu0 %v2001
      %2033 = vmatpush1.bf16.msra.mxu0 %v2000
      %2034 = vmatprep.subr.bf16.mxu0 %v2003
      %2035 = vmatpush1.bf16.msra.mxu0 %v2002
      %2036 = vmatprep.subr.bf16.mxu0 %v2005
      %2037 = vmatpush1.bf16.msra.mxu0 %v2004
      %2038 = vmatprep.subr.bf16.mxu0 %v2007
      %2039 = vmatpush1.bf16.msra.mxu0 %v2006
      %2040 = vmatprep.subr.bf16.mxu0 %v2009
      %2041 = vmatpush1.bf16.msra.mxu0 %v2008
      %2042 = vmatprep.subr.bf16.mxu0 0
      %2043 = vmatpush1.bf16.msra.mxu0 0
      %2044 = vmatprep.subr.bf16.mxu0 0
      %2045 = vmatpush1.bf16.msra.mxu0 0
      %2046 = vmatprep.subr.bf16.mxu0 0
      %2047 = vmatpush1.bf16.msra.mxu0 0
      %2048 = vmatprep.subr.bf16.mxu0 0
      %2049 = vmatpush1.bf16.msra.mxu0 0
      %2050 = vmatprep.subr.bf16.mxu0 0
      %2051 = vmatpush1.bf16.msra.mxu0 0
      %2052 = vmatprep.subr.bf16.mxu0 0
      %2053 = vmatpush1.bf16.msra.mxu0 0
      %2054 = vmatprep.subr.bf16.mxu0 0
      %2055 = vmatpush1.bf16.msra.mxu0 0
      %2056 = vmatprep.subr.bf16.mxu0 0
      %2057 = vmatpush1.bf16.msra.mxu0 0
      %2058 = vmatprep.mubr.bf16.mxu0 0
      %2059 = vmatmul.mubr.bf16.gmra.mrb[0].mxu0 %v1928
      %v2060 = vpop.f32.mrb[0].mxu0
      %v2061 = vadd.f32 0.0, %v2060
      %v2062 = vpop.f32.mrb[0].mxu0
      %v2063 = vadd.f32 0.0, %v2062
      %v2064 = vpop.f32.mrb[0].mxu0
      %v2065 = vpop.f32.mrb[0].mxu0
      %2066 = vdwg.mxu0
      %v2083 = vunpack.c.l.b16 %v1911
      %v2084 = vunpack.c.h.b16 %v1911
      %v2085 = vunpack.c.l.b16 %v1912
      %v2086 = vunpack.c.h.b16 %v1912
      %v2087 = vunpack.c.l.b16 %v1913
      %v2088 = vunpack.c.h.b16 %v1913
      %v2089 = vunpack.c.l.b16 %v1914
      %v2090 = vunpack.c.h.b16 %v1914
      %v2091 = vunpack.c.l.b16 %v1915
      %v2092 = vunpack.c.h.b16 %v1915
      %v2093 = vunpack.c.l.b16 %v1916
      %v2094 = vunpack.c.h.b16 %v1916
      %v2095 = vunpack.c.l.b16 %v1917
      %v2096 = vunpack.c.h.b16 %v1917
      %v2097 = vunpack.c.l.b16 %v1918
      %v2098 = vunpack.c.h.b16 %v1918
      %v2099 = vunpack.c.l.b16 %v1919
      %v2100 = vunpack.c.h.b16 %v1919
      %v2101 = vunpack.c.l.b16 %v1920
      %v2102 = vunpack.c.h.b16 %v1920
      %v2103 = vunpack.c.l.b16 %v1921
      %v2104 = vunpack.c.h.b16 %v1921
      %v2105 = vunpack.c.l.b16 %v1922
      %v2106 = vunpack.c.h.b16 %v1922
      %v2107 = vunpack.c.l.b16 %v1923
      %v2108 = vunpack.c.h.b16 %v1923
      %v2109 = vunpack.c.l.b16 %v1924
      %v2110 = vunpack.c.h.b16 %v1924
      %v2111 = vunpack.c.l.b16 %v1925
      %v2112 = vunpack.c.h.b16 %v1925
      %v2113 = vunpack.c.l.b16 %v1926
      %v2114 = vunpack.c.h.b16 %v1926
      %v2115 = vpack.c.b16 %v2085, %v2083
      %v2116 = vpack.c.b16 %v2086, %v2084
      %v2117 = vpack.c.b16 %v2089, %v2087
      %v2118 = vpack.c.b16 %v2090, %v2088
      %v2119 = vpack.c.b16 %v2093, %v2091
      %v2120 = vpack.c.b16 %v2094, %v2092
      %v2121 = vpack.c.b16 %v2097, %v2095
      %v2122 = vpack.c.b16 %v2098, %v2096
      %v2123 = vpack.c.b16 %v2101, %v2099
      %v2124 = vpack.c.b16 %v2102, %v2100
      %v2125 = vpack.c.b16 %v2105, %v2103
      %v2126 = vpack.c.b16 %v2106, %v2104
      %v2127 = vpack.c.b16 %v2109, %v2107
      %v2128 = vpack.c.b16 %v2110, %v2108
      %v2129 = vpack.c.b16 %v2113, %v2111
      %v2130 = vpack.c.b16 %v2114, %v2112
      %2147 = vmatprep.subr.bf16.mxu0 %v2116
      %2148 = vmatpush1.bf16.msra.mxu0 %v2115
      %2149 = vmatprep.subr.bf16.mxu0 %v2118
      %2150 = vmatpush1.bf16.msra.mxu0 %v2117
      %2151 = vmatprep.subr.bf16.mxu0 %v2120
      %2152 = vmatpush1.bf16.msra.mxu0 %v2119
      %2153 = vmatprep.subr.bf16.mxu0 %v2122
      %2154 = vmatpush1.bf16.msra.mxu0 %v2121
      %2155 = vmatprep.subr.bf16.mxu0 %v2124
      %2156 = vmatpush1.bf16.msra.mxu0 %v2123
      %2157 = vmatprep.subr.bf16.mxu0 %v2126
      %2158 = vmatpush1.bf16.msra.mxu0 %v2125
      %2159 = vmatprep.subr.bf16.mxu0 %v2128
      %2160 = vmatpush1.bf16.msra.mxu0 %v2127
      %2161 = vmatprep.subr.bf16.mxu0 %v2130
      %2162 = vmatpush1.bf16.msra.mxu0 %v2129
      %2163 = vmatprep.subr.bf16.mxu0 0
      %2164 = vmatpush1.bf16.msra.mxu0 0
      %2165 = vmatprep.subr.bf16.mxu0 0
      %2166 = vmatpush1.bf16.msra.mxu0 0
      %2167 = vmatprep.subr.bf16.mxu0 0
      %2168 = vmatpush1.bf16.msra.mxu0 0
      %2169 = vmatprep.subr.bf16.mxu0 0
      %2170 = vmatpush1.bf16.msra.mxu0 0
      %2171 = vmatprep.subr.bf16.mxu0 0
      %2172 = vmatpush1.bf16.msra.mxu0 0
      %2173 = vmatprep.subr.bf16.mxu0 0
      %2174 = vmatpush1.bf16.msra.mxu0 0
      %2175 = vmatprep.subr.bf16.mxu0 0
      %2176 = vmatpush1.bf16.msra.mxu0 0
      %2177 = vmatprep.subr.bf16.mxu0 0
      %2178 = vmatpush1.bf16.msra.mxu0 0
      %2179 = vmatprep.mubr.bf16.mxu0 0
      %2180 = vmatmul.mubr.bf16.gmra.mrb[0].mxu0 %v1910
      %v2181 = vpop.f32.mrb[0].mxu0
      %v2182 = vadd.f32 %v2061, %v2181
      %v2183 = vpop.f32.mrb[0].mxu0
      %v2184 = vadd.f32 %v2063, %v2183
      %v2185 = vpop.f32.mrb[0].mxu0
      %v2186 = vpop.f32.mrb[0].mxu0
      %2187 = vdwg.mxu0
      %v2188 = vld [vmem:[#allocation4 + $0x2] sm:$0xff]
      %v2189 = vpack.c.bf16 %v2188, %v2188
      %s2190 = scalar_lea.vmem %s3, 256
      %v2191 = vld [vmem:[%s2190] sm:$0xff]
      %v2192 = vld [vmem:[%s2190 + $0x8] sm:$0xff]
      %v2193 = vld [vmem:[%s2190 + $0x10] sm:$0xff]
      %v2194 = vld [vmem:[%s2190 + $0x18] sm:$0xff]
      %v2195 = vld [vmem:[%s2190 + $0x20] sm:$0xff]
      %v2196 = vld [vmem:[%s2190 + $0x28] sm:$0xff]
      %v2197 = vld [vmem:[%s2190 + $0x30] sm:$0xff]
      %v2198 = vld [vmem:[%s2190 + $0x38] sm:$0xff]
      %v2199 = vld [vmem:[%s2190 + $0x40] sm:$0xff]
      %v2200 = vld [vmem:[%s2190 + $0x48] sm:$0xff]
      %v2201 = vld [vmem:[%s2190 + $0x50] sm:$0xff]
      %v2202 = vld [vmem:[%s2190 + $0x58] sm:$0xff]
      %v2203 = vld [vmem:[%s2190 + $0x60] sm:$0xff]
      %v2204 = vld [vmem:[%s2190 + $0x68] sm:$0xff]
      %v2205 = vld [vmem:[%s2190 + $0x70] sm:$0xff]
      %v2206 = vld [vmem:[%s2190 + $0x78] sm:$0xff]
      %v2223 = vunpack.c.l.b16 %v2191
      %v2224 = vunpack.c.h.b16 %v2191
      %v2225 = vunpack.c.l.b16 %v2192
      %v2226 = vunpack.c.h.b16 %v2192
      %v2227 = vunpack.c.l.b16 %v2193
      %v2228 = vunpack.c.h.b16 %v2193
      %v2229 = vunpack.c.l.b16 %v2194
      %v2230 = vunpack.c.h.b16 %v2194
      %v2231 = vunpack.c.l.b16 %v2195
      %v2232 = vunpack.c.h.b16 %v2195
      %v2233 = vunpack.c.l.b16 %v2196
      %v2234 = vunpack.c.h.b16 %v2196
      %v2235 = vunpack.c.l.b16 %v2197
      %v2236 = vunpack.c.h.b16 %v2197
      %v2237 = vunpack.c.l.b16 %v2198
      %v2238 = vunpack.c.h.b16 %v2198
      %v2239 = vunpack.c.l.b16 %v2199
      %v2240 = vunpack.c.h.b16 %v2199
      %v2241 = vunpack.c.l.b16 %v2200
      %v2242 = vunpack.c.h.b16 %v2200
      %v2243 = vunpack.c.l.b16 %v2201
      %v2244 = vunpack.c.h.b16 %v2201
      %v2245 = vunpack.c.l.b16 %v2202
      %v2246 = vunpack.c.h.b16 %v2202
      %v2247 = vunpack.c.l.b16 %v2203
      %v2248 = vunpack.c.h.b16 %v2203
      %v2249 = vunpack.c.l.b16 %v2204
      %v2250 = vunpack.c.h.b16 %v2204
      %v2251 = vunpack.c.l.b16 %v2205
      %v2252 = vunpack.c.h.b16 %v2205
      %v2253 = vunpack.c.l.b16 %v2206
      %v2254 = vunpack.c.h.b16 %v2206
      %v2255 = vpack.c.b16 %v2225, %v2223
      %v2256 = vpack.c.b16 %v2226, %v2224
      %v2257 = vpack.c.b16 %v2229, %v2227
      %v2258 = vpack.c.b16 %v2230, %v2228
      %v2259 = vpack.c.b16 %v2233, %v2231
      %v2260 = vpack.c.b16 %v2234, %v2232
      %v2261 = vpack.c.b16 %v2237, %v2235
      %v2262 = vpack.c.b16 %v2238, %v2236
      %v2263 = vpack.c.b16 %v2241, %v2239
      %v2264 = vpack.c.b16 %v2242, %v2240
      %v2265 = vpack.c.b16 %v2245, %v2243
      %v2266 = vpack.c.b16 %v2246, %v2244
      %v2267 = vpack.c.b16 %v2249, %v2247
      %v2268 = vpack.c.b16 %v2250, %v2248
      %v2269 = vpack.c.b16 %v2253, %v2251
      %v2270 = vpack.c.b16 %v2254, %v2252
      %2287 = vmatprep.subr.bf16.mxu0 %v2256
      %2288 = vmatpush1.bf16.msra.mxu0 %v2255
      %2289 = vmatprep.subr.bf16.mxu0 %v2258
      %2290 = vmatpush1.bf16.msra.mxu0 %v2257
      %2291 = vmatprep.subr.bf16.mxu0 %v2260
      %2292 = vmatpush1.bf16.msra.mxu0 %v2259
      %2293 = vmatprep.subr.bf16.mxu0 %v2262
      %2294 = vmatpush1.bf16.msra.mxu0 %v2261
      %2295 = vmatprep.subr.bf16.mxu0 %v2264
      %2296 = vmatpush1.bf16.msra.mxu0 %v2263
      %2297 = vmatprep.subr.bf16.mxu0 %v2266
      %2298 = vmatpush1.bf16.msra.mxu0 %v2265
      %2299 = vmatprep.subr.bf16.mxu0 %v2268
      %2300 = vmatpush1.bf16.msra.mxu0 %v2267
      %2301 = vmatprep.subr.bf16.mxu0 %v2270
      %2302 = vmatpush1.bf16.msra.mxu0 %v2269
      %2303 = vmatprep.subr.bf16.mxu0 0
      %2304 = vmatpush1.bf16.msra.mxu0 0
      %2305 = vmatprep.subr.bf16.mxu0 0
      %2306 = vmatpush1.bf16.msra.mxu0 0
      %2307 = vmatprep.subr.bf16.mxu0 0
      %2308 = vmatpush1.bf16.msra.mxu0 0
      %2309 = vmatprep.subr.bf16.mxu0 0
      %2310 = vmatpush1.bf16.msra.mxu0 0
      %2311 = vmatprep.subr.bf16.mxu0 0
      %2312 = vmatpush1.bf16.msra.mxu0 0
      %2313 = vmatprep.subr.bf16.mxu0 0
      %2314 = vmatpush1.bf16.msra.mxu0 0
      %2315 = vmatprep.subr.bf16.mxu0 0
      %2316 = vmatpush1.bf16.msra.mxu0 0
      %2317 = vmatprep.subr.bf16.mxu0 0
      %2318 = vmatpush1.bf16.msra.mxu0 0
      %2319 = vmatprep.mubr.bf16.mxu0 0
      %2320 = vmatmul.mubr.bf16.gmra.mrb[0].mxu0 %v2189
      %v2321 = vpop.f32.mrb[0].mxu0
      %v2322 = vadd.f32 0.0, %v2321
      %v2323 = vpop.f32.mrb[0].mxu0
      %v2324 = vadd.f32 0.0, %v2323
      %v2325 = vpop.f32.mrb[0].mxu0
      %v2326 = vpop.f32.mrb[0].mxu0
      %2327 = vdwg.mxu0
      %v2328 = vadd.f32 %v2182, %v2322
      %v2329 = vadd.f32 %v2184, %v2324
      %s2330 = scalar_lea.vmem %s7, 2
      %v2331 = vld [vmem:[%s2330] ss:$8 sm:$0x3]
      %v2333 = vlaneseq
      %v2334 = vshrl.u32 %v2333, 7
      %v2335 = vsub.s32 0, %v2334
      %v2336 = vrot.slane %v2331, %v2335
      %v2337 = vlaneseq
      %v2338 = vshrl.u32 %v2337, 7
      %v2339 = vsub.s32 1, %v2338
      %v2340 = vrot.slane %v2331, %v2339
      %v2343 = vadd.f32 %v2328, %v2336
      %v2344 = vadd.f32 %v2329, %v2340
      %v2345 = vmax.f32 %v2343, 0.0
      %v2346 = vmax.f32 %v2344, 0.0
      %2347 = vst.msk [vmem:[#allocation5] ss:$8 sm:$0x3] %vm678, 0.0
      %2348 = vst.msk [vmem:[#allocation5] ss:$8 sm:$0x0] %vm678, 0.0
      %s2349 = scalar_lea.vmem [#allocation5], 17
      %2350 = vst.msk [vmem:[%s2349] ss:$8 sm:$0x3] %vm678, 0.0
      %2351 = vst.msk [vmem:[%s2349] ss:$8 sm:$0x0] %vm678, 0.0
      %v2354 = vrot.slane %v2345, 7
      %v2355 = vrot.slane %v2346, 7
      %2358 = vst [vmem:[#allocation5] sm:$0xfe] %v2354
      %2359 = vst [vmem:[#allocation5 + $0x8] sm:$0xfe] %v2355
      %2360 = vst [vmem:[#allocation5 + $0x10] sm:$0x1] %v2354
      %2361 = vst [vmem:[#allocation5 + $0x18] sm:$0x1] %v2355
      %v2362 = vld [vmem:[#allocation5] sm:$0xff]
      %v2363 = vld [vmem:[#allocation5 + $0x8] sm:$0xff]
      %v2364 = vpack.c.bf16 %v2362, %v2362
      %v2365 = vpack.c.bf16 %v2363, %v2363
      %v2366 = vld [vmem:[%s4] sm:$0xff]
      %v2367 = vld [vmem:[%s4 + $0x8] sm:$0xff]
      %v2368 = vld [vmem:[%s4 + $0x10] sm:$0xff]
      %v2369 = vld [vmem:[%s4 + $0x18] sm:$0xff]
      %v2370 = vld [vmem:[%s4 + $0x20] sm:$0xff]
      %v2371 = vld [vmem:[%s4 + $0x28] sm:$0xff]
      %v2372 = vld [vmem:[%s4 + $0x30] sm:$0xff]
      %v2373 = vld [vmem:[%s4 + $0x38] sm:$0xff]
      %v2374 = vld [vmem:[%s4 + $0x40] sm:$0xff]
      %v2375 = vld [vmem:[%s4 + $0x48] sm:$0xff]
      %v2376 = vld [vmem:[%s4 + $0x50] sm:$0xff]
      %v2377 = vld [vmem:[%s4 + $0x58] sm:$0xff]
      %v2378 = vld [vmem:[%s4 + $0x60] sm:$0xff]
      %v2379 = vld [vmem:[%s4 + $0x68] sm:$0xff]
      %v2380 = vld [vmem:[%s4 + $0x70] sm:$0xff]
      %v2381 = vld [vmem:[%s4 + $0x78] sm:$0xff]
      %v2382 = vld [vmem:[%s4 + $0x80] sm:$0xff]
      %v2383 = vld [vmem:[%s4 + $0x88] sm:$0xff]
      %v2384 = vld [vmem:[%s4 + $0x90] sm:$0xff]
      %v2385 = vld [vmem:[%s4 + $0x98] sm:$0xff]
      %v2386 = vld [vmem:[%s4 + $0xa0] sm:$0xff]
      %v2387 = vld [vmem:[%s4 + $0xa8] sm:$0xff]
      %v2388 = vld [vmem:[%s4 + $0xb0] sm:$0xff]
      %v2389 = vld [vmem:[%s4 + $0xb8] sm:$0xff]
      %v2390 = vld [vmem:[%s4 + $0xc0] sm:$0xff]
      %v2391 = vld [vmem:[%s4 + $0xc8] sm:$0xff]
      %v2392 = vld [vmem:[%s4 + $0xd0] sm:$0xff]
      %v2393 = vld [vmem:[%s4 + $0xd8] sm:$0xff]
      %v2394 = vld [vmem:[%s4 + $0xe0] sm:$0xff]
      %v2395 = vld [vmem:[%s4 + $0xe8] sm:$0xff]
      %v2396 = vld [vmem:[%s4 + $0xf0] sm:$0xff]
      %v2397 = vld [vmem:[%s4 + $0xf8] sm:$0xff]
      %v2398 = vld [vmem:[#allocation5] sm:$0xfe]
      %v2399 = vld [vmem:[#allocation5 + $0x8] sm:$0xfe]
      %v2400 = vld [vmem:[#allocation5 + $0x10] sm:$0x1]
      %v2401 = vld [vmem:[#allocation5 + $0x18] sm:$0x1]
      %v2402 = vpack.c.bf16 %v2400, %v2398
      %v2403 = vpack.c.bf16 %v2401, %v2399
      %s2404 = scalar_lea.vmem %s4, 256
      %v2405 = vld [vmem:[%s2404] sm:$0xff]
      %v2406 = vld [vmem:[%s2404 + $0x8] sm:$0xff]
      %v2407 = vld [vmem:[%s2404 + $0x10] sm:$0xff]
      %v2408 = vld [vmem:[%s2404 + $0x18] sm:$0xff]
      %v2409 = vld [vmem:[%s2404 + $0x20] sm:$0xff]
      %v2410 = vld [vmem:[%s2404 + $0x28] sm:$0xff]
      %v2411 = vld [vmem:[%s2404 + $0x30] sm:$0xff]
      %v2412 = vld [vmem:[%s2404 + $0x38] sm:$0xff]
      %v2413 = vld [vmem:[%s2404 + $0x40] sm:$0xff]
      %v2414 = vld [vmem:[%s2404 + $0x48] sm:$0xff]
      %v2415 = vld [vmem:[%s2404 + $0x50] sm:$0xff]
      %v2416 = vld [vmem:[%s2404 + $0x58] sm:$0xff]
      %v2417 = vld [vmem:[%s2404 + $0x60] sm:$0xff]
      %v2418 = vld [vmem:[%s2404 + $0x68] sm:$0xff]
      %v2419 = vld [vmem:[%s2404 + $0x70] sm:$0xff]
      %v2420 = vld [vmem:[%s2404 + $0x78] sm:$0xff]
      %v2421 = vld [vmem:[%s2404 + $0x80] sm:$0xff]
      %v2422 = vld [vmem:[%s2404 + $0x88] sm:$0xff]
      %v2423 = vld [vmem:[%s2404 + $0x90] sm:$0xff]
      %v2424 = vld [vmem:[%s2404 + $0x98] sm:$0xff]
      %v2425 = vld [vmem:[%s2404 + $0xa0] sm:$0xff]
      %v2426 = vld [vmem:[%s2404 + $0xa8] sm:$0xff]
      %v2427 = vld [vmem:[%s2404 + $0xb0] sm:$0xff]
      %v2428 = vld [vmem:[%s2404 + $0xb8] sm:$0xff]
      %v2429 = vld [vmem:[%s2404 + $0xc0] sm:$0xff]
      %v2430 = vld [vmem:[%s2404 + $0xc8] sm:$0xff]
      %v2431 = vld [vmem:[%s2404 + $0xd0] sm:$0xff]
      %v2432 = vld [vmem:[%s2404 + $0xd8] sm:$0xff]
      %v2433 = vld [vmem:[%s2404 + $0xe0] sm:$0xff]
      %v2434 = vld [vmem:[%s2404 + $0xe8] sm:$0xff]
      %v2435 = vld [vmem:[%s2404 + $0xf0] sm:$0xff]
      %v2436 = vld [vmem:[%s2404 + $0xf8] sm:$0xff]
      %v2438 = vshrl.u32 %v2402, 16
      %v2440 = vshll.u32 %v2402, 16
      %v2442 = vrot.slane %v2440, 1
      %v2443 = vor.u32 %v2438, %v2442
      %v2445 = vshrl.u32 %v2403, 16
      %v2447 = vshll.u32 %v2403, 16
      %v2449 = vrot.slane %v2447, 1
      %v2450 = vor.u32 %v2445, %v2449
      %v2485 = vunpack.c.l.b16 %v2405
      %v2486 = vunpack.c.h.b16 %v2405
      %v2487 = vunpack.c.l.b16 %v2406
      %v2488 = vunpack.c.h.b16 %v2406
      %v2489 = vunpack.c.l.b16 %v2407
      %v2490 = vunpack.c.h.b16 %v2407
      %v2491 = vunpack.c.l.b16 %v2408
      %v2492 = vunpack.c.h.b16 %v2408
      %v2493 = vunpack.c.l.b16 %v2409
      %v2494 = vunpack.c.h.b16 %v2409
      %v2495 = vunpack.c.l.b16 %v2410
      %v2496 = vunpack.c.h.b16 %v2410
      %v2497 = vunpack.c.l.b16 %v2411
      %v2498 = vunpack.c.h.b16 %v2411
      %v2499 = vunpack.c.l.b16 %v2412
      %v2500 = vunpack.c.h.b16 %v2412
      %v2501 = vunpack.c.l.b16 %v2413
      %v2502 = vunpack.c.h.b16 %v2413
      %v2503 = vunpack.c.l.b16 %v2414
      %v2504 = vunpack.c.h.b16 %v2414
      %v2505 = vunpack.c.l.b16 %v2415
      %v2506 = vunpack.c.h.b16 %v2415
      %v2507 = vunpack.c.l.b16 %v2416
      %v2508 = vunpack.c.h.b16 %v2416
      %v2509 = vunpack.c.l.b16 %v2417
      %v2510 = vunpack.c.h.b16 %v2417
      %v2511 = vunpack.c.l.b16 %v2418
      %v2512 = vunpack.c.h.b16 %v2418
      %v2513 = vunpack.c.l.b16 %v2419
      %v2514 = vunpack.c.h.b16 %v2419
      %v2515 = vunpack.c.l.b16 %v2420
      %v2516 = vunpack.c.h.b16 %v2420
      %v2517 = vunpack.c.l.b16 %v2421
      %v2518 = vunpack.c.h.b16 %v2421
      %v2519 = vunpack.c.l.b16 %v2422
      %v2520 = vunpack.c.h.b16 %v2422
      %v2521 = vunpack.c.l.b16 %v2423
      %v2522 = vunpack.c.h.b16 %v2423
      %v2523 = vunpack.c.l.b16 %v2424
      %v2524 = vunpack.c.h.b16 %v2424
      %v2525 = vunpack.c.l.b16 %v2425
      %v2526 = vunpack.c.h.b16 %v2425
      %v2527 = vunpack.c.l.b16 %v2426
      %v2528 = vunpack.c.h.b16 %v2426
      %v2529 = vunpack.c.l.b16 %v2427
      %v2530 = vunpack.c.h.b16 %v2427
      %v2531 = vunpack.c.l.b16 %v2428
      %v2532 = vunpack.c.h.b16 %v2428
      %v2533 = vunpack.c.l.b16 %v2429
      %v2534 = vunpack.c.h.b16 %v2429
      %v2535 = vunpack.c.l.b16 %v2430
      %v2536 = vunpack.c.h.b16 %v2430
      %v2537 = vunpack.c.l.b16 %v2431
      %v2538 = vunpack.c.h.b16 %v2431
      %v2539 = vunpack.c.l.b16 %v2432
      %v2540 = vunpack.c.h.b16 %v2432
      %v2541 = vunpack.c.l.b16 %v2433
      %v2542 = vunpack.c.h.b16 %v2433
      %v2543 = vunpack.c.l.b16 %v2434
      %v2544 = vunpack.c.h.b16 %v2434
      %v2545 = vunpack.c.l.b16 %v2435
      %v2546 = vunpack.c.h.b16 %v2435
      %v2547 = vunpack.c.l.b16 %v2436
      %v2548 = vunpack.c.h.b16 %v2436
      %v2549 = vpack.c.b16 %v2487, %v2485
      %v2550 = vpack.c.b16 %v2488, %v2486
      %v2551 = vpack.c.b16 %v2491, %v2489
      %v2552 = vpack.c.b16 %v2492, %v2490
      %v2553 = vpack.c.b16 %v2495, %v2493
      %v2554 = vpack.c.b16 %v2496, %v2494
      %v2555 = vpack.c.b16 %v2499, %v2497
      %v2556 = vpack.c.b16 %v2500, %v2498
      %v2557 = vpack.c.b16 %v2503, %v2501
      %v2558 = vpack.c.b16 %v2504, %v2502
      %v2559 = vpack.c.b16 %v2507, %v2505
      %v2560 = vpack.c.b16 %v2508, %v2506
      %v2561 = vpack.c.b16 %v2511, %v2509
      %v2562 = vpack.c.b16 %v2512, %v2510
      %v2563 = vpack.c.b16 %v2515, %v2513
      %v2564 = vpack.c.b16 %v2516, %v2514
      %v2565 = vpack.c.b16 %v2519, %v2517
      %v2566 = vpack.c.b16 %v2520, %v2518
      %v2567 = vpack.c.b16 %v2523, %v2521
      %v2568 = vpack.c.b16 %v2524, %v2522
      %v2569 = vpack.c.b16 %v2527, %v2525
      %v2570 = vpack.c.b16 %v2528, %v2526
      %v2571 = vpack.c.b16 %v2531, %v2529
      %v2572 = vpack.c.b16 %v2532, %v2530
      %v2573 = vpack.c.b16 %v2535, %v2533
      %v2574 = vpack.c.b16 %v2536, %v2534
      %v2575 = vpack.c.b16 %v2539, %v2537
      %v2576 = vpack.c.b16 %v2540, %v2538
      %v2577 = vpack.c.b16 %v2543, %v2541
      %v2578 = vpack.c.b16 %v2544, %v2542
      %v2579 = vpack.c.b16 %v2547, %v2545
      %v2580 = vpack.c.b16 %v2548, %v2546
      %2613 = vmatprep.subr.bf16.mxu0 %v2550
      %2614 = vmatpush1.bf16.msra.mxu0 %v2549
      %2615 = vmatprep.subr.bf16.mxu0 %v2552
      %2616 = vmatpush1.bf16.msra.mxu0 %v2551
      %2617 = vmatprep.subr.bf16.mxu0 %v2554
      %2618 = vmatpush1.bf16.msra.mxu0 %v2553
      %2619 = vmatprep.subr.bf16.mxu0 %v2556
      %2620 = vmatpush1.bf16.msra.mxu0 %v2555
      %2621 = vmatprep.subr.bf16.mxu0 %v2558
      %2622 = vmatpush1.bf16.msra.mxu0 %v2557
      %2623 = vmatprep.subr.bf16.mxu0 %v2560
      %2624 = vmatpush1.bf16.msra.mxu0 %v2559
      %2625 = vmatprep.subr.bf16.mxu0 %v2562
      %2626 = vmatpush1.bf16.msra.mxu0 %v2561
      %2627 = vmatprep.subr.bf16.mxu0 %v2564
      %2628 = vmatpush1.bf16.msra.mxu0 %v2563
      %2629 = vmatprep.subr.bf16.mxu0 %v2566
      %2630 = vmatpush1.bf16.msra.mxu0 %v2565
      %2631 = vmatprep.subr.bf16.mxu0 %v2568
      %2632 = vmatpush1.bf16.msra.mxu0 %v2567
      %2633 = vmatprep.subr.bf16.mxu0 %v2570
      %2634 = vmatpush1.bf16.msra.mxu0 %v2569
      %2635 = vmatprep.subr.bf16.mxu0 %v2572
      %2636 = vmatpush1.bf16.msra.mxu0 %v2571
      %2637 = vmatprep.subr.bf16.mxu0 %v2574
      %2638 = vmatpush1.bf16.msra.mxu0 %v2573
      %2639 = vmatprep.subr.bf16.mxu0 %v2576
      %2640 = vmatpush1.bf16.msra.mxu0 %v2575
      %2641 = vmatprep.subr.bf16.mxu0 %v2578
      %2642 = vmatpush1.bf16.msra.mxu0 %v2577
      %2643 = vmatprep.subr.bf16.mxu0 %v2580
      %2644 = vmatpush1.bf16.msra.mxu0 %v2579
      %2645 = vmatprep.mubr.bf16.mxu0 %v2450
      %2646 = vmatmul.mubr.bf16.gmra.mrb[0].mxu0 %v2443
      %v2647 = vpop.f32.mrb[0].mxu0
      %v2648 = vadd.f32 0.0, %v2647
      %v2649 = vpop.f32.mrb[0].mxu0
      %v2650 = vadd.f32 0.0, %v2649
      %v2651 = vpop.f32.mrb[0].mxu0
      %v2652 = vpop.f32.mrb[0].mxu0
      %2653 = vdwg.mxu0
      %v2686 = vunpack.c.l.b16 %v2366
      %v2687 = vunpack.c.h.b16 %v2366
      %v2688 = vunpack.c.l.b16 %v2367
      %v2689 = vunpack.c.h.b16 %v2367
      %v2690 = vunpack.c.l.b16 %v2368
      %v2691 = vunpack.c.h.b16 %v2368
      %v2692 = vunpack.c.l.b16 %v2369
      %v2693 = vunpack.c.h.b16 %v2369
      %v2694 = vunpack.c.l.b16 %v2370
      %v2695 = vunpack.c.h.b16 %v2370
      %v2696 = vunpack.c.l.b16 %v2371
      %v2697 = vunpack.c.h.b16 %v2371
      %v2698 = vunpack.c.l.b16 %v2372
      %v2699 = vunpack.c.h.b16 %v2372
      %v2700 = vunpack.c.l.b16 %v2373
      %v2701 = vunpack.c.h.b16 %v2373
      %v2702 = vunpack.c.l.b16 %v2374
      %v2703 = vunpack.c.h.b16 %v2374
      %v2704 = vunpack.c.l.b16 %v2375
      %v2705 = vunpack.c.h.b16 %v2375
      %v2706 = vunpack.c.l.b16 %v2376
      %v2707 = vunpack.c.h.b16 %v2376
      %v2708 = vunpack.c.l.b16 %v2377
      %v2709 = vunpack.c.h.b16 %v2377
      %v2710 = vunpack.c.l.b16 %v2378
      %v2711 = vunpack.c.h.b16 %v2378
      %v2712 = vunpack.c.l.b16 %v2379
      %v2713 = vunpack.c.h.b16 %v2379
      %v2714 = vunpack.c.l.b16 %v2380
      %v2715 = vunpack.c.h.b16 %v2380
      %v2716 = vunpack.c.l.b16 %v2381
      %v2717 = vunpack.c.h.b16 %v2381
      %v2718 = vunpack.c.l.b16 %v2382
      %v2719 = vunpack.c.h.b16 %v2382
      %v2720 = vunpack.c.l.b16 %v2383
      %v2721 = vunpack.c.h.b16 %v2383
      %v2722 = vunpack.c.l.b16 %v2384
      %v2723 = vunpack.c.h.b16 %v2384
      %v2724 = vunpack.c.l.b16 %v2385
      %v2725 = vunpack.c.h.b16 %v2385
      %v2726 = vunpack.c.l.b16 %v2386
      %v2727 = vunpack.c.h.b16 %v2386
      %v2728 = vunpack.c.l.b16 %v2387
      %v2729 = vunpack.c.h.b16 %v2387
      %v2730 = vunpack.c.l.b16 %v2388
      %v2731 = vunpack.c.h.b16 %v2388
      %v2732 = vunpack.c.l.b16 %v2389
      %v2733 = vunpack.c.h.b16 %v2389
      %v2734 = vunpack.c.l.b16 %v2390
      %v2735 = vunpack.c.h.b16 %v2390
      %v2736 = vunpack.c.l.b16 %v2391
      %v2737 = vunpack.c.h.b16 %v2391
      %v2738 = vunpack.c.l.b16 %v2392
      %v2739 = vunpack.c.h.b16 %v2392
      %v2740 = vunpack.c.l.b16 %v2393
      %v2741 = vunpack.c.h.b16 %v2393
      %v2742 = vunpack.c.l.b16 %v2394
      %v2743 = vunpack.c.h.b16 %v2394
      %v2744 = vunpack.c.l.b16 %v2395
      %v2745 = vunpack.c.h.b16 %v2395
      %v2746 = vunpack.c.l.b16 %v2396
      %v2747 = vunpack.c.h.b16 %v2396
      %v2748 = vunpack.c.l.b16 %v2397
      %v2749 = vunpack.c.h.b16 %v2397
      %v2750 = vpack.c.b16 %v2688, %v2686
      %v2751 = vpack.c.b16 %v2689, %v2687
      %v2752 = vpack.c.b16 %v2692, %v2690
      %v2753 = vpack.c.b16 %v2693, %v2691
      %v2754 = vpack.c.b16 %v2696, %v2694
      %v2755 = vpack.c.b16 %v2697, %v2695
      %v2756 = vpack.c.b16 %v2700, %v2698
      %v2757 = vpack.c.b16 %v2701, %v2699
      %v2758 = vpack.c.b16 %v2704, %v2702
      %v2759 = vpack.c.b16 %v2705, %v2703
      %v2760 = vpack.c.b16 %v2708, %v2706
      %v2761 = vpack.c.b16 %v2709, %v2707
      %v2762 = vpack.c.b16 %v2712, %v2710
      %v2763 = vpack.c.b16 %v2713, %v2711
      %v2764 = vpack.c.b16 %v2716, %v2714
      %v2765 = vpack.c.b16 %v2717, %v2715
      %v2766 = vpack.c.b16 %v2720, %v2718
      %v2767 = vpack.c.b16 %v2721, %v2719
      %v2768 = vpack.c.b16 %v2724, %v2722
      %v2769 = vpack.c.b16 %v2725, %v2723
      %v2770 = vpack.c.b16 %v2728, %v2726
      %v2771 = vpack.c.b16 %v2729, %v2727
      %v2772 = vpack.c.b16 %v2732, %v2730
      %v2773 = vpack.c.b16 %v2733, %v2731
      %v2774 = vpack.c.b16 %v2736, %v2734
      %v2775 = vpack.c.b16 %v2737, %v2735
      %v2776 = vpack.c.b16 %v2740, %v2738
      %v2777 = vpack.c.b16 %v2741, %v2739
      %v2778 = vpack.c.b16 %v2744, %v2742
      %v2779 = vpack.c.b16 %v2745, %v2743
      %v2780 = vpack.c.b16 %v2748, %v2746
      %v2781 = vpack.c.b16 %v2749, %v2747
      %2814 = vmatprep.subr.bf16.mxu0 %v2751
      %2815 = vmatpush1.bf16.msra.mxu0 %v2750
      %2816 = vmatprep.subr.bf16.mxu0 %v2753
      %2817 = vmatpush1.bf16.msra.mxu0 %v2752
      %2818 = vmatprep.subr.bf16.mxu0 %v2755
      %2819 = vmatpush1.bf16.msra.mxu0 %v2754
      %2820 = vmatprep.subr.bf16.mxu0 %v2757
      %2821 = vmatpush1.bf16.msra.mxu0 %v2756
      %2822 = vmatprep.subr.bf16.mxu0 %v2759
      %2823 = vmatpush1.bf16.msra.mxu0 %v2758
      %2824 = vmatprep.subr.bf16.mxu0 %v2761
      %2825 = vmatpush1.bf16.msra.mxu0 %v2760
      %2826 = vmatprep.subr.bf16.mxu0 %v2763
      %2827 = vmatpush1.bf16.msra.mxu0 %v2762
      %2828 = vmatprep.subr.bf16.mxu0 %v2765
      %2829 = vmatpush1.bf16.msra.mxu0 %v2764
      %2830 = vmatprep.subr.bf16.mxu0 %v2767
      %2831 = vmatpush1.bf16.msra.mxu0 %v2766
      %2832 = vmatprep.subr.bf16.mxu0 %v2769
      %2833 = vmatpush1.bf16.msra.mxu0 %v2768
      %2834 = vmatprep.subr.bf16.mxu0 %v2771
      %2835 = vmatpush1.bf16.msra.mxu0 %v2770
      %2836 = vmatprep.subr.bf16.mxu0 %v2773
      %2837 = vmatpush1.bf16.msra.mxu0 %v2772
      %2838 = vmatprep.subr.bf16.mxu0 %v2775
      %2839 = vmatpush1.bf16.msra.mxu0 %v2774
      %2840 = vmatprep.subr.bf16.mxu0 %v2777
      %2841 = vmatpush1.bf16.msra.mxu0 %v2776
      %2842 = vmatprep.subr.bf16.mxu0 %v2779
      %2843 = vmatpush1.bf16.msra.mxu0 %v2778
      %2844 = vmatprep.subr.bf16.mxu0 %v2781
      %2845 = vmatpush1.bf16.msra.mxu0 %v2780
      %2846 = vmatprep.mubr.bf16.mxu0 %v2365
      %2847 = vmatmul.mubr.bf16.gmra.mrb[0].mxu0 %v2364
      %v2848 = vpop.f32.mrb[0].mxu0
      %v2849 = vadd.f32 %v2648, %v2848
      %v2850 = vpop.f32.mrb[0].mxu0
      %v2851 = vadd.f32 %v2650, %v2850
      %v2852 = vpop.f32.mrb[0].mxu0
      %v2853 = vpop.f32.mrb[0].mxu0
      %2854 = vdwg.mxu0
      %v2855 = vld [vmem:[#allocation5] sm:$0xfc]
      %v2856 = vld [vmem:[#allocation5 + $0x8] sm:$0xfc]
      %v2857 = vld [vmem:[#allocation5 + $0x10] sm:$0x3]
      %v2858 = vld [vmem:[#allocation5 + $0x18] sm:$0x3]
      %v2859 = vpack.c.bf16 %v2857, %v2855
      %v2860 = vpack.c.bf16 %v2858, %v2856
      %s2861 = scalar_lea.vmem %s4, 512
      %v2862 = vld [vmem:[%s2861] sm:$0xff]
      %v2863 = vld [vmem:[%s2861 + $0x8] sm:$0xff]
      %v2864 = vld [vmem:[%s2861 + $0x10] sm:$0xff]
      %v2865 = vld [vmem:[%s2861 + $0x18] sm:$0xff]
      %v2866 = vld [vmem:[%s2861 + $0x20] sm:$0xff]
      %v2867 = vld [vmem:[%s2861 + $0x28] sm:$0xff]
      %v2868 = vld [vmem:[%s2861 + $0x30] sm:$0xff]
      %v2869 = vld [vmem:[%s2861 + $0x38] sm:$0xff]
      %v2870 = vld [vmem:[%s2861 + $0x40] sm:$0xff]
      %v2871 = vld [vmem:[%s2861 + $0x48] sm:$0xff]
      %v2872 = vld [vmem:[%s2861 + $0x50] sm:$0xff]
      %v2873 = vld [vmem:[%s2861 + $0x58] sm:$0xff]
      %v2874 = vld [vmem:[%s2861 + $0x60] sm:$0xff]
      %v2875 = vld [vmem:[%s2861 + $0x68] sm:$0xff]
      %v2876 = vld [vmem:[%s2861 + $0x70] sm:$0xff]
      %v2877 = vld [vmem:[%s2861 + $0x78] sm:$0xff]
      %v2878 = vld [vmem:[%s2861 + $0x80] sm:$0xff]
      %v2879 = vld [vmem:[%s2861 + $0x88] sm:$0xff]
      %v2880 = vld [vmem:[%s2861 + $0x90] sm:$0xff]
      %v2881 = vld [vmem:[%s2861 + $0x98] sm:$0xff]
      %v2882 = vld [vmem:[%s2861 + $0xa0] sm:$0xff]
      %v2883 = vld [vmem:[%s2861 + $0xa8] sm:$0xff]
      %v2884 = vld [vmem:[%s2861 + $0xb0] sm:$0xff]
      %v2885 = vld [vmem:[%s2861 + $0xb8] sm:$0xff]
      %v2886 = vld [vmem:[%s2861 + $0xc0] sm:$0xff]
      %v2887 = vld [vmem:[%s2861 + $0xc8] sm:$0xff]
      %v2888 = vld [vmem:[%s2861 + $0xd0] sm:$0xff]
      %v2889 = vld [vmem:[%s2861 + $0xd8] sm:$0xff]
      %v2890 = vld [vmem:[%s2861 + $0xe0] sm:$0xff]
      %v2891 = vld [vmem:[%s2861 + $0xe8] sm:$0xff]
      %v2892 = vld [vmem:[%s2861 + $0xf0] sm:$0xff]
      %v2893 = vld [vmem:[%s2861 + $0xf8] sm:$0xff]
      %v2896 = vrot.slane %v2859, 1
      %v2897 = vrot.slane %v2860, 1
      %v2932 = vunpack.c.l.b16 %v2862
      %v2933 = vunpack.c.h.b16 %v2862
      %v2934 = vunpack.c.l.b16 %v2863
      %v2935 = vunpack.c.h.b16 %v2863
      %v2936 = vunpack.c.l.b16 %v2864
      %v2937 = vunpack.c.h.b16 %v2864
      %v2938 = vunpack.c.l.b16 %v2865
      %v2939 = vunpack.c.h.b16 %v2865
      %v2940 = vunpack.c.l.b16 %v2866
      %v2941 = vunpack.c.h.b16 %v2866
      %v2942 = vunpack.c.l.b16 %v2867
      %v2943 = vunpack.c.h.b16 %v2867
      %v2944 = vunpack.c.l.b16 %v2868
      %v2945 = vunpack.c.h.b16 %v2868
      %v2946 = vunpack.c.l.b16 %v2869
      %v2947 = vunpack.c.h.b16 %v2869
      %v2948 = vunpack.c.l.b16 %v2870
      %v2949 = vunpack.c.h.b16 %v2870
      %v2950 = vunpack.c.l.b16 %v2871
      %v2951 = vunpack.c.h.b16 %v2871
      %v2952 = vunpack.c.l.b16 %v2872
      %v2953 = vunpack.c.h.b16 %v2872
      %v2954 = vunpack.c.l.b16 %v2873
      %v2955 = vunpack.c.h.b16 %v2873
      %v2956 = vunpack.c.l.b16 %v2874
      %v2957 = vunpack.c.h.b16 %v2874
      %v2958 = vunpack.c.l.b16 %v2875
      %v2959 = vunpack.c.h.b16 %v2875
      %v2960 = vunpack.c.l.b16 %v2876
      %v2961 = vunpack.c.h.b16 %v2876
      %v2962 = vunpack.c.l.b16 %v2877
      %v2963 = vunpack.c.h.b16 %v2877
      %v2964 = vunpack.c.l.b16 %v2878
      %v2965 = vunpack.c.h.b16 %v2878
      %v2966 = vunpack.c.l.b16 %v2879
      %v2967 = vunpack.c.h.b16 %v2879
      %v2968 = vunpack.c.l.b16 %v2880
      %v2969 = vunpack.c.h.b16 %v2880
      %v2970 = vunpack.c.l.b16 %v2881
      %v2971 = vunpack.c.h.b16 %v2881
      %v2972 = vunpack.c.l.b16 %v2882
      %v2973 = vunpack.c.h.b16 %v2882
      %v2974 = vunpack.c.l.b16 %v2883
      %v2975 = vunpack.c.h.b16 %v2883
      %v2976 = vunpack.c.l.b16 %v2884
      %v2977 = vunpack.c.h.b16 %v2884
      %v2978 = vunpack.c.l.b16 %v2885
      %v2979 = vunpack.c.h.b16 %v2885
      %v2980 = vunpack.c.l.b16 %v2886
      %v2981 = vunpack.c.h.b16 %v2886
      %v2982 = vunpack.c.l.b16 %v2887
      %v2983 = vunpack.c.h.b16 %v2887
      %v2984 = vunpack.c.l.b16 %v2888
      %v2985 = vunpack.c.h.b16 %v2888
      %v2986 = vunpack.c.l.b16 %v2889
      %v2987 = vunpack.c.h.b16 %v2889
      %v2988 = vunpack.c.l.b16 %v2890
      %v2989 = vunpack.c.h.b16 %v2890
      %v2990 = vunpack.c.l.b16 %v2891
      %v2991 = vunpack.c.h.b16 %v2891
      %v2992 = vunpack.c.l.b16 %v2892
      %v2993 = vunpack.c.h.b16 %v2892
      %v2994 = vunpack.c.l.b16 %v2893
      %v2995 = vunpack.c.h.b16 %v2893
      %v2996 = vpack.c.b16 %v2934, %v2932
      %v2997 = vpack.c.b16 %v2935, %v2933
      %v2998 = vpack.c.b16 %v2938, %v2936
      %v2999 = vpack.c.b16 %v2939, %v2937
      %v3000 = vpack.c.b16 %v2942, %v2940
      %v3001 = vpack.c.b16 %v2943, %v2941
      %v3002 = vpack.c.b16 %v2946, %v2944
      %v3003 = vpack.c.b16 %v2947, %v2945
      %v3004 = vpack.c.b16 %v2950, %v2948
      %v3005 = vpack.c.b16 %v2951, %v2949
      %v3006 = vpack.c.b16 %v2954, %v2952
      %v3007 = vpack.c.b16 %v2955, %v2953
      %v3008 = vpack.c.b16 %v2958, %v2956
      %v3009 = vpack.c.b16 %v2959, %v2957
      %v3010 = vpack.c.b16 %v2962, %v2960
      %v3011 = vpack.c.b16 %v2963, %v2961
      %v3012 = vpack.c.b16 %v2966, %v2964
      %v3013 = vpack.c.b16 %v2967, %v2965
      %v3014 = vpack.c.b16 %v2970, %v2968
      %v3015 = vpack.c.b16 %v2971, %v2969
      %v3016 = vpack.c.b16 %v2974, %v2972
      %v3017 = vpack.c.b16 %v2975, %v2973
      %v3018 = vpack.c.b16 %v2978, %v2976
      %v3019 = vpack.c.b16 %v2979, %v2977
      %v3020 = vpack.c.b16 %v2982, %v2980
      %v3021 = vpack.c.b16 %v2983, %v2981
      %v3022 = vpack.c.b16 %v2986, %v2984
      %v3023 = vpack.c.b16 %v2987, %v2985
      %v3024 = vpack.c.b16 %v2990, %v2988
      %v3025 = vpack.c.b16 %v2991, %v2989
      %v3026 = vpack.c.b16 %v2994, %v2992
      %v3027 = vpack.c.b16 %v2995, %v2993
      %3060 = vmatprep.subr.bf16.mxu0 %v2997
      %3061 = vmatpush1.bf16.msra.mxu0 %v2996
      %3062 = vmatprep.subr.bf16.mxu0 %v2999
      %3063 = vmatpush1.bf16.msra.mxu0 %v2998
      %3064 = vmatprep.subr.bf16.mxu0 %v3001
      %3065 = vmatpush1.bf16.msra.mxu0 %v3000
      %3066 = vmatprep.subr.bf16.mxu0 %v3003
      %3067 = vmatpush1.bf16.msra.mxu0 %v3002
      %3068 = vmatprep.subr.bf16.mxu0 %v3005
      %3069 = vmatpush1.bf16.msra.mxu0 %v3004
      %3070 = vmatprep.subr.bf16.mxu0 %v3007
      %3071 = vmatpush1.bf16.msra.mxu0 %v3006
      %3072 = vmatprep.subr.bf16.mxu0 %v3009
      %3073 = vmatpush1.bf16.msra.mxu0 %v3008
      %3074 = vmatprep.subr.bf16.mxu0 %v3011
      %3075 = vmatpush1.bf16.msra.mxu0 %v3010
      %3076 = vmatprep.subr.bf16.mxu0 %v3013
      %3077 = vmatpush1.bf16.msra.mxu0 %v3012
      %3078 = vmatprep.subr.bf16.mxu0 %v3015
      %3079 = vmatpush1.bf16.msra.mxu0 %v3014
      %3080 = vmatprep.subr.bf16.mxu0 %v3017
      %3081 = vmatpush1.bf16.msra.mxu0 %v3016
      %3082 = vmatprep.subr.bf16.mxu0 %v3019
      %3083 = vmatpush1.bf16.msra.mxu0 %v3018
      %3084 = vmatprep.subr.bf16.mxu0 %v3021
      %3085 = vmatpush1.bf16.msra.mxu0 %v3020
      %3086 = vmatprep.subr.bf16.mxu0 %v3023
      %3087 = vmatpush1.bf16.msra.mxu0 %v3022
      %3088 = vmatprep.subr.bf16.mxu0 %v3025
      %3089 = vmatpush1.bf16.msra.mxu0 %v3024
      %3090 = vmatprep.subr.bf16.mxu0 %v3027
      %3091 = vmatpush1.bf16.msra.mxu0 %v3026
      %3092 = vmatprep.mubr.bf16.mxu0 %v2897
      %3093 = vmatmul.mubr.bf16.gmra.mrb[0].mxu0 %v2896
      %v3094 = vpop.f32.mrb[0].mxu0
      %v3095 = vadd.f32 0.0, %v3094
      %v3096 = vpop.f32.mrb[0].mxu0
      %v3097 = vadd.f32 0.0, %v3096
      %v3098 = vpop.f32.mrb[0].mxu0
      %v3099 = vpop.f32.mrb[0].mxu0
      %3100 = vdwg.mxu0
      %v3101 = vadd.f32 %v2849, %v3095
      %v3102 = vadd.f32 %v2851, %v3097
      %s3103 = scalar_lea.vmem %s7, 3
      %v3104 = vld [vmem:[%s3103] ss:$8 sm:$0x3]
      %v3106 = vlaneseq
      %v3107 = vshrl.u32 %v3106, 7
      %v3108 = vsub.s32 0, %v3107
      %v3109 = vrot.slane %v3104, %v3108
      %v3110 = vlaneseq
      %v3111 = vshrl.u32 %v3110, 7
      %v3112 = vsub.s32 1, %v3111
      %v3113 = vrot.slane %v3104, %v3112
      %v3116 = vadd.f32 %v3101, %v3109
      %v3117 = vadd.f32 %v3102, %v3113
      %v3118 = vmax.f32 %v3116, 0.0
      %v3119 = vmax.f32 %v3117, 0.0
      %3120 = vst [vmem:[%s379] sm:$0xff] %v3118
      %3121 = vst [vmem:[%s379 + $0x8] sm:$0xff] %v3119
      %v3124 = vcombine.low %v3118, %v3119
      %v3125 = vcombine.high %v3118, %v3119
      %v3127 = vunpack.c.l.s4 1983009808
      %v3128 = vunpack.c.0.s8 %v3127
      %v3129 = vlaneseq
      %v3130 = vshrl.u32 %v3129, 7
      %v3131 = vsub.s32 %v3128, %v3130
      %v3132 = vrot.slane %v3124, %v3131
      %v3134 = vunpack.c.l.s4 1983009808
      %v3135 = vunpack.c.0.s8 %v3134
      %v3136 = vlaneseq
      %v3137 = vshrl.u32 %v3136, 7
      %v3138 = vsub.s32 %v3135, %v3137
      %v3139 = vrot.slane %v3125, %v3138
      %v3140 = vcombine.high %v3132, %v3132
      %v3141 = vcombine.high %v3139, %v3139
      %v3143 = vunpack.c.l.s4 1983009808
      %v3144 = vunpack.c.0.s8 %v3143
      %v3145 = vlaneseq
      %v3146 = vshrl.u32 %v3145, 7
      %v3147 = vsub.s32 %v3144, %v3146
      %v3148 = vrot.slane %v3132, %v3147
      %v3149 = vcombine.high %v3148, %v3148
      %v3151 = vunpack.c.l.s4 1983009808
      %v3152 = vunpack.c.0.s8 %v3151
      %v3153 = vlaneseq
      %v3154 = vshrl.u32 %v3153, 7
      %v3155 = vsub.s32 %v3152, %v3154
      %v3156 = vrot.slane %v3140, %v3155
      %v3157 = vcombine.high %v3156, %v3156
      %v3159 = vunpack.c.l.s4 1983009808
      %v3160 = vunpack.c.0.s8 %v3159
      %v3161 = vlaneseq
      %v3162 = vshrl.u32 %v3161, 7
      %v3163 = vsub.s32 %v3160, %v3162
      %v3164 = vrot.slane %v3139, %v3163
      %v3165 = vcombine.high %v3164, %v3164
      %v3167 = vunpack.c.l.s4 1983009808
      %v3168 = vunpack.c.0.s8 %v3167
      %v3169 = vlaneseq
      %v3170 = vshrl.u32 %v3169, 7
      %v3171 = vsub.s32 %v3168, %v3170
      %v3172 = vrot.slane %v3141, %v3171
      %v3173 = vcombine.high %v3172, %v3172
      %v3182 = vsel %vm1625, %v3148, -inf
      %v3183 = vrot.slane %v3182, 4
      %v3184 = vmax.f32 %v3182, %v3183
      %v3185 = vrot.slane %v3184, 2
      %v3186 = vmax.f32 %v3184, %v3185
      %v3187 = vrot.slane %v3186, 1
      %v3188 = vmax.f32 %v3186, %v3187
      %v3189 = vsel %vm1625, %v3149, -inf
      %v3190 = vrot.slane %v3189, 4
      %v3191 = vmax.f32 %v3189, %v3190
      %v3192 = vrot.slane %v3191, 2
      %v3193 = vmax.f32 %v3191, %v3192
      %v3194 = vrot.slane %v3193, 1
      %v3195 = vmax.f32 %v3193, %v3194
      %v3196 = vsel %vm1625, %v3156, -inf
      %v3197 = vrot.slane %v3196, 4
      %v3198 = vmax.f32 %v3196, %v3197
      %v3199 = vrot.slane %v3198, 2
      %v3200 = vmax.f32 %v3198, %v3199
      %v3201 = vrot.slane %v3200, 1
      %v3202 = vmax.f32 %v3200, %v3201
      %v3203 = vsel %vm1625, %v3157, -inf
      %v3204 = vrot.slane %v3203, 4
      %v3205 = vmax.f32 %v3203, %v3204
      %v3206 = vrot.slane %v3205, 2
      %v3207 = vmax.f32 %v3205, %v3206
      %v3208 = vrot.slane %v3207, 1
      %v3209 = vmax.f32 %v3207, %v3208
      %v3210 = vsel %vm1625, %v3164, -inf
      %v3211 = vrot.slane %v3210, 4
      %v3212 = vmax.f32 %v3210, %v3211
      %v3213 = vrot.slane %v3212, 2
      %v3214 = vmax.f32 %v3212, %v3213
      %v3215 = vrot.slane %v3214, 1
      %v3216 = vmax.f32 %v3214, %v3215
      %v3217 = vsel %vm1625, %v3165, -inf
      %v3218 = vrot.slane %v3217, 4
      %v3219 = vmax.f32 %v3217, %v3218
      %v3220 = vrot.slane %v3219, 2
      %v3221 = vmax.f32 %v3219, %v3220
      %v3222 = vrot.slane %v3221, 1
      %v3223 = vmax.f32 %v3221, %v3222
      %v3224 = vsel %vm1625, %v3172, -inf
      %v3225 = vrot.slane %v3224, 4
      %v3226 = vmax.f32 %v3224, %v3225
      %v3227 = vrot.slane %v3226, 2
      %v3228 = vmax.f32 %v3226, %v3227
      %v3229 = vrot.slane %v3228, 1
      %v3230 = vmax.f32 %v3228, %v3229
      %v3231 = vsel %vm1625, %v3173, -inf
      %v3232 = vrot.slane %v3231, 4
      %v3233 = vmax.f32 %v3231, %v3232
      %v3234 = vrot.slane %v3233, 2
      %v3235 = vmax.f32 %v3233, %v3234
      %v3236 = vrot.slane %v3235, 1
      %v3237 = vmax.f32 %v3235, %v3236
      %3238 = vst [vmem:[#allocation6] sm:$0x1] 0.0
      %3239 = vst [vmem:[#allocation6 + $0x5] sm:$0x1] 0.0
      %3244 = vrot.lane.b32.xlu0 %v3188, 96
      %v3245 = vpop.permute.xlu0 %3244
      %3246 = vrot.lane.b32.xlu0 %v3202, 96
      %v3247 = vpop.permute.xlu0 %3246
      %3248 = vrot.lane.b32.xlu0 %v3216, 96
      %v3249 = vpop.permute.xlu0 %3248
      %3250 = vrot.lane.b32.xlu0 %v3230, 96
      %v3251 = vpop.permute.xlu0 %3250
      %v3256 = vmax.f32 %v3188, %v3245
      %v3257 = vmax.f32 %v3202, %v3247
      %v3258 = vmax.f32 %v3216, %v3249
      %v3259 = vmax.f32 %v3230, %v3251
      %v3264 = vrot.slane %v3257, 7
      %v3265 = vsel %vm1789, %v3264, %v3256
      %v3266 = vrot.slane %v3258, 6
      %v3267 = vsel %vm1792, %v3266, %v3265
      %v3268 = vrot.slane %v3259, 5
      %v3269 = vsel %vm1795, %v3268, %v3267
      %vm3271 = vcmask 257024
      %3272 = vst.msk [vmem:[#allocation6 + $0x1] sm:$0xf] %vm3271, %v3269
      %3273 = vrot.lane.b32.xlu0 %v3269, 96
      %v3274 = vpop.permute.xlu0 %3273
      %vm3276 = vcmask 519424
      %3277 = vst.msk [vmem:[#allocation6 + $0x1] sm:$0xf] %vm3276, %v3274
      %3282 = vrot.lane.b32.xlu0 %v3195, 96
      %v3283 = vpop.permute.xlu0 %3282
      %3284 = vrot.lane.b32.xlu0 %v3209, 96
      %v3285 = vpop.permute.xlu0 %3284
      %3286 = vrot.lane.b32.xlu0 %v3223, 96
      %v3287 = vpop.permute.xlu0 %3286
      %3288 = vrot.lane.b32.xlu0 %v3237, 96
      %v3289 = vpop.permute.xlu0 %3288
      %v3294 = vmax.f32 %v3195, %v3283
      %v3295 = vmax.f32 %v3209, %v3285
      %v3296 = vmax.f32 %v3223, %v3287
      %v3297 = vmax.f32 %v3237, %v3289
      %v3302 = vrot.slane %v3295, 7
      %v3303 = vsel %vm1789, %v3302, %v3294
      %v3304 = vrot.slane %v3296, 6
      %v3305 = vsel %vm1792, %v3304, %v3303
      %v3306 = vrot.slane %v3297, 5
      %v3307 = vsel %vm1795, %v3306, %v3305
      %3308 = vrot.lane.b32.xlu0 %v3307, 64
      %v3309 = vpop.permute.xlu0 %3308
      %vm3311 = vcmask 781824
      %3312 = vst.msk [vmem:[#allocation6 + $0x1] sm:$0xf] %vm3311, %v3309
      %3313 = vrot.lane.b32.xlu0 %v3307, 32
      %v3314 = vpop.permute.xlu0 %3313
      %vm3316 = vcmask 1044224
      %3317 = vst.msk [vmem:[#allocation6 + $0x1] sm:$0xf] %vm3316, %v3314
      %v3318 = vld [vmem:[#allocation6] sm:$0xf]
      %v3319 = vpack.c.bf16 %v3318, %v3318
      %v3320 = vld [vmem:[%s5] sm:$0xff]
      %v3321 = vld [vmem:[%s5 + $0x8] sm:$0xff]
      %v3322 = vld [vmem:[%s5 + $0x10] sm:$0xff]
      %v3323 = vld [vmem:[%s5 + $0x18] sm:$0xff]
      %v3324 = vld [vmem:[%s5 + $0x20] sm:$0xff]
      %v3325 = vld [vmem:[%s5 + $0x28] sm:$0xff]
      %v3326 = vld [vmem:[%s5 + $0x30] sm:$0xff]
      %v3327 = vld [vmem:[%s5 + $0x38] sm:$0xff]
      %v3328 = vld [vmem:[%s5 + $0x40] sm:$0xff]
      %v3329 = vld [vmem:[%s5 + $0x48] sm:$0xff]
      %v3330 = vld [vmem:[%s5 + $0x50] sm:$0xff]
      %v3331 = vld [vmem:[%s5 + $0x58] sm:$0xff]
      %v3332 = vld [vmem:[%s5 + $0x60] sm:$0xff]
      %v3333 = vld [vmem:[%s5 + $0x68] sm:$0xff]
      %v3334 = vld [vmem:[%s5 + $0x70] sm:$0xff]
      %v3335 = vld [vmem:[%s5 + $0x78] sm:$0xff]
      %v3336 = vld [vmem:[#allocation6 + $0x1] sm:$0xf]
      %v3337 = vpack.c.bf16 %v3336, %v3336
      %s3338 = scalar_lea.vmem %s5, 128
      %v3339 = vld [vmem:[%s3338] sm:$0xff]
      %v3340 = vld [vmem:[%s3338 + $0x8] sm:$0xff]
      %v3341 = vld [vmem:[%s3338 + $0x10] sm:$0xff]
      %v3342 = vld [vmem:[%s3338 + $0x18] sm:$0xff]
      %v3343 = vld [vmem:[%s3338 + $0x20] sm:$0xff]
      %v3344 = vld [vmem:[%s3338 + $0x28] sm:$0xff]
      %v3345 = vld [vmem:[%s3338 + $0x30] sm:$0xff]
      %v3346 = vld [vmem:[%s3338 + $0x38] sm:$0xff]
      %v3347 = vld [vmem:[%s3338 + $0x40] sm:$0xff]
      %v3348 = vld [vmem:[%s3338 + $0x48] sm:$0xff]
      %v3349 = vld [vmem:[%s3338 + $0x50] sm:$0xff]
      %v3350 = vld [vmem:[%s3338 + $0x58] sm:$0xff]
      %v3351 = vld [vmem:[%s3338 + $0x60] sm:$0xff]
      %v3352 = vld [vmem:[%s3338 + $0x68] sm:$0xff]
      %v3353 = vld [vmem:[%s3338 + $0x70] sm:$0xff]
      %v3354 = vld [vmem:[%s3338 + $0x78] sm:$0xff]
      %v3371 = vunpack.c.l.b16 %v3339
      %v3372 = vunpack.c.h.b16 %v3339
      %v3373 = vunpack.c.l.b16 %v3340
      %v3374 = vunpack.c.h.b16 %v3340
      %v3375 = vunpack.c.l.b16 %v3341
      %v3376 = vunpack.c.h.b16 %v3341
      %v3377 = vunpack.c.l.b16 %v3342
      %v3378 = vunpack.c.h.b16 %v3342
      %v3379 = vunpack.c.l.b16 %v3343
      %v3380 = vunpack.c.h.b16 %v3343
      %v3381 = vunpack.c.l.b16 %v3344
      %v3382 = vunpack.c.h.b16 %v3344
      %v3383 = vunpack.c.l.b16 %v3345
      %v3384 = vunpack.c.h.b16 %v3345
      %v3385 = vunpack.c.l.b16 %v3346
      %v3386 = vunpack.c.h.b16 %v3346
      %v3387 = vunpack.c.l.b16 %v3347
      %v3388 = vunpack.c.h.b16 %v3347
      %v3389 = vunpack.c.l.b16 %v3348
      %v3390 = vunpack.c.h.b16 %v3348
      %v3391 = vunpack.c.l.b16 %v3349
      %v3392 = vunpack.c.h.b16 %v3349
      %v3393 = vunpack.c.l.b16 %v3350
      %v3394 = vunpack.c.h.b16 %v3350
      %v3395 = vunpack.c.l.b16 %v3351
      %v3396 = vunpack.c.h.b16 %v3351
      %v3397 = vunpack.c.l.b16 %v3352
      %v3398 = vunpack.c.h.b16 %v3352
      %v3399 = vunpack.c.l.b16 %v3353
      %v3400 = vunpack.c.h.b16 %v3353
      %v3401 = vunpack.c.l.b16 %v3354
      %v3402 = vunpack.c.h.b16 %v3354
      %v3403 = vpack.c.b16 %v3373, %v3371
      %v3404 = vpack.c.b16 %v3374, %v3372
      %v3405 = vpack.c.b16 %v3377, %v3375
      %v3406 = vpack.c.b16 %v3378, %v3376
      %v3407 = vpack.c.b16 %v3381, %v3379
      %v3408 = vpack.c.b16 %v3382, %v3380
      %v3409 = vpack.c.b16 %v3385, %v3383
      %v3410 = vpack.c.b16 %v3386, %v3384
      %v3411 = vpack.c.b16 %v3389, %v3387
      %v3412 = vpack.c.b16 %v3390, %v3388
      %v3413 = vpack.c.b16 %v3393, %v3391
      %v3414 = vpack.c.b16 %v3394, %v3392
      %v3415 = vpack.c.b16 %v3397, %v3395
      %v3416 = vpack.c.b16 %v3398, %v3396
      %v3417 = vpack.c.b16 %v3401, %v3399
      %v3418 = vpack.c.b16 %v3402, %v3400
      %3435 = vmatprep.subr.bf16.mxu0 %v3404
      %3436 = vmatpush1.bf16.msra.mxu0 %v3403
      %3437 = vmatprep.subr.bf16.mxu0 %v3406
      %3438 = vmatpush1.bf16.msra.mxu0 %v3405
      %3439 = vmatprep.subr.bf16.mxu0 %v3408
      %3440 = vmatpush1.bf16.msra.mxu0 %v3407
      %3441 = vmatprep.subr.bf16.mxu0 %v3410
      %3442 = vmatpush1.bf16.msra.mxu0 %v3409
      %3443 = vmatprep.subr.bf16.mxu0 %v3412
      %3444 = vmatpush1.bf16.msra.mxu0 %v3411
      %3445 = vmatprep.subr.bf16.mxu0 %v3414
      %3446 = vmatpush1.bf16.msra.mxu0 %v3413
      %3447 = vmatprep.subr.bf16.mxu0 %v3416
      %3448 = vmatpush1.bf16.msra.mxu0 %v3415
      %3449 = vmatprep.subr.bf16.mxu0 %v3418
      %3450 = vmatpush1.bf16.msra.mxu0 %v3417
      %3451 = vmatprep.subr.bf16.mxu0 0
      %3452 = vmatpush1.bf16.msra.mxu0 0
      %3453 = vmatprep.subr.bf16.mxu0 0
      %3454 = vmatpush1.bf16.msra.mxu0 0
      %3455 = vmatprep.subr.bf16.mxu0 0
      %3456 = vmatpush1.bf16.msra.mxu0 0
      %3457 = vmatprep.subr.bf16.mxu0 0
      %3458 = vmatpush1.bf16.msra.mxu0 0
      %3459 = vmatprep.subr.bf16.mxu0 0
      %3460 = vmatpush1.bf16.msra.mxu0 0
      %3461 = vmatprep.subr.bf16.mxu0 0
      %3462 = vmatpush1.bf16.msra.mxu0 0
      %3463 = vmatprep.subr.bf16.mxu0 0
      %3464 = vmatpush1.bf16.msra.mxu0 0
      %3465 = vmatprep.subr.bf16.mxu0 0
      %3466 = vmatpush1.bf16.msra.mxu0 0
      %3467 = vmatprep.mubr.bf16.mxu0 0
      %3468 = vmatmul.mubr.bf16.gmra.mrb[0].mxu0 %v3337
      %v3469 = vpop.f32.mrb[0].mxu0
      %v3470 = vadd.f32 0.0, %v3469
      %v3471 = vpop.f32.mrb[0].mxu0
      %v3472 = vadd.f32 0.0, %v3471
      %v3473 = vpop.f32.mrb[0].mxu0
      %v3474 = vpop.f32.mrb[0].mxu0
      %3475 = vdwg.mxu0
      %v3492 = vunpack.c.l.b16 %v3320
      %v3493 = vunpack.c.h.b16 %v3320
      %v3494 = vunpack.c.l.b16 %v3321
      %v3495 = vunpack.c.h.b16 %v3321
      %v3496 = vunpack.c.l.b16 %v3322
      %v3497 = vunpack.c.h.b16 %v3322
      %v3498 = vunpack.c.l.b16 %v3323
      %v3499 = vunpack.c.h.b16 %v3323
      %v3500 = vunpack.c.l.b16 %v3324
      %v3501 = vunpack.c.h.b16 %v3324
      %v3502 = vunpack.c.l.b16 %v3325
      %v3503 = vunpack.c.h.b16 %v3325
      %v3504 = vunpack.c.l.b16 %v3326
      %v3505 = vunpack.c.h.b16 %v3326
      %v3506 = vunpack.c.l.b16 %v3327
      %v3507 = vunpack.c.h.b16 %v3327
      %v3508 = vunpack.c.l.b16 %v3328
      %v3509 = vunpack.c.h.b16 %v3328
      %v3510 = vunpack.c.l.b16 %v3329
      %v3511 = vunpack.c.h.b16 %v3329
      %v3512 = vunpack.c.l.b16 %v3330
      %v3513 = vunpack.c.h.b16 %v3330
      %v3514 = vunpack.c.l.b16 %v3331
      %v3515 = vunpack.c.h.b16 %v3331
      %v3516 = vunpack.c.l.b16 %v3332
      %v3517 = vunpack.c.h.b16 %v3332
      %v3518 = vunpack.c.l.b16 %v3333
      %v3519 = vunpack.c.h.b16 %v3333
      %v3520 = vunpack.c.l.b16 %v3334
      %v3521 = vunpack.c.h.b16 %v3334
      %v3522 = vunpack.c.l.b16 %v3335
      %v3523 = vunpack.c.h.b16 %v3335
      %v3524 = vpack.c.b16 %v3494, %v3492
      %v3525 = vpack.c.b16 %v3495, %v3493
      %v3526 = vpack.c.b16 %v3498, %v3496
      %v3527 = vpack.c.b16 %v3499, %v3497
      %v3528 = vpack.c.b16 %v3502, %v3500
      %v3529 = vpack.c.b16 %v3503, %v3501
      %v3530 = vpack.c.b16 %v3506, %v3504
      %v3531 = vpack.c.b16 %v3507, %v3505
      %v3532 = vpack.c.b16 %v3510, %v3508
      %v3533 = vpack.c.b16 %v3511, %v3509
      %v3534 = vpack.c.b16 %v3514, %v3512
      %v3535 = vpack.c.b16 %v3515, %v3513
      %v3536 = vpack.c.b16 %v3518, %v3516
      %v3537 = vpack.c.b16 %v3519, %v3517
      %v3538 = vpack.c.b16 %v3522, %v3520
      %v3539 = vpack.c.b16 %v3523, %v3521
      %3556 = vmatprep.subr.bf16.mxu0 %v3525
      %3557 = vmatpush1.bf16.msra.mxu0 %v3524
      %3558 = vmatprep.subr.bf16.mxu0 %v3527
      %3559 = vmatpush1.bf16.msra.mxu0 %v3526
      %3560 = vmatprep.subr.bf16.mxu0 %v3529
      %3561 = vmatpush1.bf16.msra.mxu0 %v3528
      %3562 = vmatprep.subr.bf16.mxu0 %v3531
      %3563 = vmatpush1.bf16.msra.mxu0 %v3530
      %3564 = vmatprep.subr.bf16.mxu0 %v3533
      %3565 = vmatpush1.bf16.msra.mxu0 %v3532
      %3566 = vmatprep.subr.bf16.mxu0 %v3535
      %3567 = vmatpush1.bf16.msra.mxu0 %v3534
      %3568 = vmatprep.subr.bf16.mxu0 %v3537
      %3569 = vmatpush1.bf16.msra.mxu0 %v3536
      %3570 = vmatprep.subr.bf16.mxu0 %v3539
      %3571 = vmatpush1.bf16.msra.mxu0 %v3538
      %3572 = vmatprep.subr.bf16.mxu0 0
      %3573 = vmatpush1.bf16.msra.mxu0 0
      %3574 = vmatprep.subr.bf16.mxu0 0
      %3575 = vmatpush1.bf16.msra.mxu0 0
      %3576 = vmatprep.subr.bf16.mxu0 0
      %3577 = vmatpush1.bf16.msra.mxu0 0
      %3578 = vmatprep.subr.bf16.mxu0 0
      %3579 = vmatpush1.bf16.msra.mxu0 0
      %3580 = vmatprep.subr.bf16.mxu0 0
      %3581 = vmatpush1.bf16.msra.mxu0 0
      %3582 = vmatprep.subr.bf16.mxu0 0
      %3583 = vmatpush1.bf16.msra.mxu0 0
      %3584 = vmatprep.subr.bf16.mxu0 0
      %3585 = vmatpush1.bf16.msra.mxu0 0
      %3586 = vmatprep.subr.bf16.mxu0 0
      %3587 = vmatpush1.bf16.msra.mxu0 0
      %3588 = vmatprep.mubr.bf16.mxu0 0
      %3589 = vmatmul.mubr.bf16.gmra.mrb[0].mxu0 %v3319
      %v3590 = vpop.f32.mrb[0].mxu0
      %v3591 = vadd.f32 %v3470, %v3590
      %v3592 = vpop.f32.mrb[0].mxu0
      %v3593 = vadd.f32 %v3472, %v3592
      %v3594 = vpop.f32.mrb[0].mxu0
      %v3595 = vpop.f32.mrb[0].mxu0
      %3596 = vdwg.mxu0
      %v3597 = vld [vmem:[#allocation6 + $0x2] sm:$0xf]
      %v3598 = vpack.c.bf16 %v3597, %v3597
      %s3599 = scalar_lea.vmem %s5, 256
      %v3600 = vld [vmem:[%s3599] sm:$0xff]
      %v3601 = vld [vmem:[%s3599 + $0x8] sm:$0xff]
      %v3602 = vld [vmem:[%s3599 + $0x10] sm:$0xff]
      %v3603 = vld [vmem:[%s3599 + $0x18] sm:$0xff]
      %v3604 = vld [vmem:[%s3599 + $0x20] sm:$0xff]
      %v3605 = vld [vmem:[%s3599 + $0x28] sm:$0xff]
      %v3606 = vld [vmem:[%s3599 + $0x30] sm:$0xff]
      %v3607 = vld [vmem:[%s3599 + $0x38] sm:$0xff]
      %v3608 = vld [vmem:[%s3599 + $0x40] sm:$0xff]
      %v3609 = vld [vmem:[%s3599 + $0x48] sm:$0xff]
      %v3610 = vld [vmem:[%s3599 + $0x50] sm:$0xff]
      %v3611 = vld [vmem:[%s3599 + $0x58] sm:$0xff]
      %v3612 = vld [vmem:[%s3599 + $0x60] sm:$0xff]
      %v3613 = vld [vmem:[%s3599 + $0x68] sm:$0xff]
      %v3614 = vld [vmem:[%s3599 + $0x70] sm:$0xff]
      %v3615 = vld [vmem:[%s3599 + $0x78] sm:$0xff]
      %v3632 = vunpack.c.l.b16 %v3600
      %v3633 = vunpack.c.h.b16 %v3600
      %v3634 = vunpack.c.l.b16 %v3601
      %v3635 = vunpack.c.h.b16 %v3601
      %v3636 = vunpack.c.l.b16 %v3602
      %v3637 = vunpack.c.h.b16 %v3602
      %v3638 = vunpack.c.l.b16 %v3603
      %v3639 = vunpack.c.h.b16 %v3603
      %v3640 = vunpack.c.l.b16 %v3604
      %v3641 = vunpack.c.h.b16 %v3604
      %v3642 = vunpack.c.l.b16 %v3605
      %v3643 = vunpack.c.h.b16 %v3605
      %v3644 = vunpack.c.l.b16 %v3606
      %v3645 = vunpack.c.h.b16 %v3606
      %v3646 = vunpack.c.l.b16 %v3607
      %v3647 = vunpack.c.h.b16 %v3607
      %v3648 = vunpack.c.l.b16 %v3608
      %v3649 = vunpack.c.h.b16 %v3608
      %v3650 = vunpack.c.l.b16 %v3609
      %v3651 = vunpack.c.h.b16 %v3609
      %v3652 = vunpack.c.l.b16 %v3610
      %v3653 = vunpack.c.h.b16 %v3610
      %v3654 = vunpack.c.l.b16 %v3611
      %v3655 = vunpack.c.h.b16 %v3611
      %v3656 = vunpack.c.l.b16 %v3612
      %v3657 = vunpack.c.h.b16 %v3612
      %v3658 = vunpack.c.l.b16 %v3613
      %v3659 = vunpack.c.h.b16 %v3613
      %v3660 = vunpack.c.l.b16 %v3614
      %v3661 = vunpack.c.h.b16 %v3614
      %v3662 = vunpack.c.l.b16 %v3615
      %v3663 = vunpack.c.h.b16 %v3615
      %v3664 = vpack.c.b16 %v3634, %v3632
      %v3665 = vpack.c.b16 %v3635, %v3633
      %v3666 = vpack.c.b16 %v3638, %v3636
      %v3667 = vpack.c.b16 %v3639, %v3637
      %v3668 = vpack.c.b16 %v3642, %v3640
      %v3669 = vpack.c.b16 %v3643, %v3641
      %v3670 = vpack.c.b16 %v3646, %v3644
      %v3671 = vpack.c.b16 %v3647, %v3645
      %v3672 = vpack.c.b16 %v3650, %v3648
      %v3673 = vpack.c.b16 %v3651, %v3649
      %v3674 = vpack.c.b16 %v3654, %v3652
      %v3675 = vpack.c.b16 %v3655, %v3653
      %v3676 = vpack.c.b16 %v3658, %v3656
      %v3677 = vpack.c.b16 %v3659, %v3657
      %v3678 = vpack.c.b16 %v3662, %v3660
      %v3679 = vpack.c.b16 %v3663, %v3661
      %3696 = vmatprep.subr.bf16.mxu0 %v3665
      %3697 = vmatpush1.bf16.msra.mxu0 %v3664
      %3698 = vmatprep.subr.bf16.mxu0 %v3667
      %3699 = vmatpush1.bf16.msra.mxu0 %v3666
      %3700 = vmatprep.subr.bf16.mxu0 %v3669
      %3701 = vmatpush1.bf16.msra.mxu0 %v3668
      %3702 = vmatprep.subr.bf16.mxu0 %v3671
      %3703 = vmatpush1.bf16.msra.mxu0 %v3670
      %3704 = vmatprep.subr.bf16.mxu0 %v3673
      %3705 = vmatpush1.bf16.msra.mxu0 %v3672
      %3706 = vmatprep.subr.bf16.mxu0 %v3675
      %3707 = vmatpush1.bf16.msra.mxu0 %v3674
      %3708 = vmatprep.subr.bf16.mxu0 %v3677
      %3709 = vmatpush1.bf16.msra.mxu0 %v3676
      %3710 = vmatprep.subr.bf16.mxu0 %v3679
      %3711 = vmatpush1.bf16.msra.mxu0 %v3678
      %3712 = vmatprep.subr.bf16.mxu0 0
      %3713 = vmatpush1.bf16.msra.mxu0 0
      %3714 = vmatprep.subr.bf16.mxu0 0
      %3715 = vmatpush1.bf16.msra.mxu0 0
      %3716 = vmatprep.subr.bf16.mxu0 0
      %3717 = vmatpush1.bf16.msra.mxu0 0
      %3718 = vmatprep.subr.bf16.mxu0 0
      %3719 = vmatpush1.bf16.msra.mxu0 0
      %3720 = vmatprep.subr.bf16.mxu0 0
      %3721 = vmatpush1.bf16.msra.mxu0 0
      %3722 = vmatprep.subr.bf16.mxu0 0
      %3723 = vmatpush1.bf16.msra.mxu0 0
      %3724 = vmatprep.subr.bf16.mxu0 0
      %3725 = vmatpush1.bf16.msra.mxu0 0
      %3726 = vmatprep.subr.bf16.mxu0 0
      %3727 = vmatpush1.bf16.msra.mxu0 0
      %3728 = vmatprep.mubr.bf16.mxu0 0
      %3729 = vmatmul.mubr.bf16.gmra.mrb[0].mxu0 %v3598
      %v3730 = vpop.f32.mrb[0].mxu0
      %v3731 = vadd.f32 0.0, %v3730
      %v3732 = vpop.f32.mrb[0].mxu0
      %v3733 = vadd.f32 0.0, %v3732
      %v3734 = vpop.f32.mrb[0].mxu0
      %v3735 = vpop.f32.mrb[0].mxu0
      %3736 = vdwg.mxu0
      %v3737 = vadd.f32 %v3591, %v3731
      %v3738 = vadd.f32 %v3593, %v3733
      %s3739 = scalar_lea.vmem %s7, 4
      %v3740 = vld [vmem:[%s3739] ss:$8 sm:$0x3]
      %v3742 = vlaneseq
      %v3743 = vshrl.u32 %v3742, 7
      %v3744 = vsub.s32 0, %v3743
      %v3745 = vrot.slane %v3740, %v3744
      %v3746 = vlaneseq
      %v3747 = vshrl.u32 %v3746, 7
      %v3748 = vsub.s32 1, %v3747
      %v3749 = vrot.slane %v3740, %v3748
      %v3752 = vadd.f32 %v3737, %v3745
      %v3753 = vadd.f32 %v3738, %v3749
      %v3754 = vmax.f32 %v3752, 0.0
      %v3755 = vmax.f32 %v3753, 0.0
      %3756 = vst.msk [vmem:[#allocation7] ss:$8 sm:$0x3] %vm678, 0.0
      %3757 = vst.msk [vmem:[#allocation7] ss:$8 sm:$0x0] %vm678, 0.0
      %s3758 = scalar_lea.vmem [#allocation7], 5
      %3759 = vst.msk [vmem:[%s3758] ss:$8 sm:$0x3] %vm678, 0.0
      %3760 = vst.msk [vmem:[%s3758] ss:$8 sm:$0x0] %vm678, 0.0
      %v3763 = vrot.slane %v3754, 7
      %v3764 = vrot.slane %v3755, 7
      %3767 = vst [vmem:[#allocation7] sm:$0x1e] %v3763
      %3768 = vst [vmem:[#allocation7 + $0x8] sm:$0x1e] %v3764
      %v3769 = vld [vmem:[#allocation7] sm:$0xf]
      %v3770 = vld [vmem:[#allocation7 + $0x8] sm:$0xf]
      %v3771 = vpack.c.bf16 %v3769, %v3769
      %v3772 = vpack.c.bf16 %v3770, %v3770
      %v3773 = vld [vmem:[%s6] sm:$0xff]
      %v3774 = vld [vmem:[%s6 + $0x8] sm:$0xff]
      %v3775 = vld [vmem:[%s6 + $0x10] sm:$0xff]
      %v3776 = vld [vmem:[%s6 + $0x18] sm:$0xff]
      %v3777 = vld [vmem:[%s6 + $0x20] sm:$0xff]
      %v3778 = vld [vmem:[%s6 + $0x28] sm:$0xff]
      %v3779 = vld [vmem:[%s6 + $0x30] sm:$0xff]
      %v3780 = vld [vmem:[%s6 + $0x38] sm:$0xff]
      %v3781 = vld [vmem:[%s6 + $0x40] sm:$0xff]
      %v3782 = vld [vmem:[%s6 + $0x48] sm:$0xff]
      %v3783 = vld [vmem:[%s6 + $0x50] sm:$0xff]
      %v3784 = vld [vmem:[%s6 + $0x58] sm:$0xff]
      %v3785 = vld [vmem:[%s6 + $0x60] sm:$0xff]
      %v3786 = vld [vmem:[%s6 + $0x68] sm:$0xff]
      %v3787 = vld [vmem:[%s6 + $0x70] sm:$0xff]
      %v3788 = vld [vmem:[%s6 + $0x78] sm:$0xff]
      %v3789 = vld [vmem:[%s6 + $0x80] sm:$0xff]
      %v3790 = vld [vmem:[%s6 + $0x88] sm:$0xff]
      %v3791 = vld [vmem:[%s6 + $0x90] sm:$0xff]
      %v3792 = vld [vmem:[%s6 + $0x98] sm:$0xff]
      %v3793 = vld [vmem:[%s6 + $0xa0] sm:$0xff]
      %v3794 = vld [vmem:[%s6 + $0xa8] sm:$0xff]
      %v3795 = vld [vmem:[%s6 + $0xb0] sm:$0xff]
      %v3796 = vld [vmem:[%s6 + $0xb8] sm:$0xff]
      %v3797 = vld [vmem:[%s6 + $0xc0] sm:$0xff]
      %v3798 = vld [vmem:[%s6 + $0xc8] sm:$0xff]
      %v3799 = vld [vmem:[%s6 + $0xd0] sm:$0xff]
      %v3800 = vld [vmem:[%s6 + $0xd8] sm:$0xff]
      %v3801 = vld [vmem:[%s6 + $0xe0] sm:$0xff]
      %v3802 = vld [vmem:[%s6 + $0xe8] sm:$0xff]
      %v3803 = vld [vmem:[%s6 + $0xf0] sm:$0xff]
      %v3804 = vld [vmem:[%s6 + $0xf8] sm:$0xff]
      %v3805 = vld [vmem:[#allocation7] sm:$0x1e]
      %v3806 = vld [vmem:[#allocation7 + $0x8] sm:$0x1e]
      %v3807 = vpack.c.bf16 %v3805, %v3805
      %v3808 = vpack.c.bf16 %v3806, %v3806
      %s3809 = scalar_lea.vmem %s6, 256
      %v3810 = vld [vmem:[%s3809] sm:$0xff]
      %v3811 = vld [vmem:[%s3809 + $0x8] sm:$0xff]
      %v3812 = vld [vmem:[%s3809 + $0x10] sm:$0xff]
      %v3813 = vld [vmem:[%s3809 + $0x18] sm:$0xff]
      %v3814 = vld [vmem:[%s3809 + $0x20] sm:$0xff]
      %v3815 = vld [vmem:[%s3809 + $0x28] sm:$0xff]
      %v3816 = vld [vmem:[%s3809 + $0x30] sm:$0xff]
      %v3817 = vld [vmem:[%s3809 + $0x38] sm:$0xff]
      %v3818 = vld [vmem:[%s3809 + $0x40] sm:$0xff]
      %v3819 = vld [vmem:[%s3809 + $0x48] sm:$0xff]
      %v3820 = vld [vmem:[%s3809 + $0x50] sm:$0xff]
      %v3821 = vld [vmem:[%s3809 + $0x58] sm:$0xff]
      %v3822 = vld [vmem:[%s3809 + $0x60] sm:$0xff]
      %v3823 = vld [vmem:[%s3809 + $0x68] sm:$0xff]
      %v3824 = vld [vmem:[%s3809 + $0x70] sm:$0xff]
      %v3825 = vld [vmem:[%s3809 + $0x78] sm:$0xff]
      %v3826 = vld [vmem:[%s3809 + $0x80] sm:$0xff]
      %v3827 = vld [vmem:[%s3809 + $0x88] sm:$0xff]
      %v3828 = vld [vmem:[%s3809 + $0x90] sm:$0xff]
      %v3829 = vld [vmem:[%s3809 + $0x98] sm:$0xff]
      %v3830 = vld [vmem:[%s3809 + $0xa0] sm:$0xff]
      %v3831 = vld [vmem:[%s3809 + $0xa8] sm:$0xff]
      %v3832 = vld [vmem:[%s3809 + $0xb0] sm:$0xff]
      %v3833 = vld [vmem:[%s3809 + $0xb8] sm:$0xff]
      %v3834 = vld [vmem:[%s3809 + $0xc0] sm:$0xff]
      %v3835 = vld [vmem:[%s3809 + $0xc8] sm:$0xff]
      %v3836 = vld [vmem:[%s3809 + $0xd0] sm:$0xff]
      %v3837 = vld [vmem:[%s3809 + $0xd8] sm:$0xff]
      %v3838 = vld [vmem:[%s3809 + $0xe0] sm:$0xff]
      %v3839 = vld [vmem:[%s3809 + $0xe8] sm:$0xff]
      %v3840 = vld [vmem:[%s3809 + $0xf0] sm:$0xff]
      %v3841 = vld [vmem:[%s3809 + $0xf8] sm:$0xff]
      %v3843 = vshrl.u32 %v3807, 16
      %v3845 = vshll.u32 %v3807, 16
      %v3847 = vrot.slane %v3845, 1
      %v3848 = vor.u32 %v3843, %v3847
      %v3850 = vshrl.u32 %v3808, 16
      %v3852 = vshll.u32 %v3808, 16
      %v3854 = vrot.slane %v3852, 1
      %v3855 = vor.u32 %v3850, %v3854
      %v3890 = vunpack.c.l.b16 %v3810
      %v3891 = vunpack.c.h.b16 %v3810
      %v3892 = vunpack.c.l.b16 %v3811
      %v3893 = vunpack.c.h.b16 %v3811
      %v3894 = vunpack.c.l.b16 %v3812
      %v3895 = vunpack.c.h.b16 %v3812
      %v3896 = vunpack.c.l.b16 %v3813
      %v3897 = vunpack.c.h.b16 %v3813
      %v3898 = vunpack.c.l.b16 %v3814
      %v3899 = vunpack.c.h.b16 %v3814
      %v3900 = vunpack.c.l.b16 %v3815
      %v3901 = vunpack.c.h.b16 %v3815
      %v3902 = vunpack.c.l.b16 %v3816
      %v3903 = vunpack.c.h.b16 %v3816
      %v3904 = vunpack.c.l.b16 %v3817
      %v3905 = vunpack.c.h.b16 %v3817
      %v3906 = vunpack.c.l.b16 %v3818
      %v3907 = vunpack.c.h.b16 %v3818
      %v3908 = vunpack.c.l.b16 %v3819
      %v3909 = vunpack.c.h.b16 %v3819
      %v3910 = vunpack.c.l.b16 %v3820
      %v3911 = vunpack.c.h.b16 %v3820
      %v3912 = vunpack.c.l.b16 %v3821
      %v3913 = vunpack.c.h.b16 %v3821
      %v3914 = vunpack.c.l.b16 %v3822
      %v3915 = vunpack.c.h.b16 %v3822
      %v3916 = vunpack.c.l.b16 %v3823
      %v3917 = vunpack.c.h.b16 %v3823
      %v3918 = vunpack.c.l.b16 %v3824
      %v3919 = vunpack.c.h.b16 %v3824
      %v3920 = vunpack.c.l.b16 %v3825
      %v3921 = vunpack.c.h.b16 %v3825
      %v3922 = vunpack.c.l.b16 %v3826
      %v3923 = vunpack.c.h.b16 %v3826
      %v3924 = vunpack.c.l.b16 %v3827
      %v3925 = vunpack.c.h.b16 %v3827
      %v3926 = vunpack.c.l.b16 %v3828
      %v3927 = vunpack.c.h.b16 %v3828
      %v3928 = vunpack.c.l.b16 %v3829
      %v3929 = vunpack.c.h.b16 %v3829
      %v3930 = vunpack.c.l.b16 %v3830
      %v3931 = vunpack.c.h.b16 %v3830
      %v3932 = vunpack.c.l.b16 %v3831
      %v3933 = vunpack.c.h.b16 %v3831
      %v3934 = vunpack.c.l.b16 %v3832
      %v3935 = vunpack.c.h.b16 %v3832
      %v3936 = vunpack.c.l.b16 %v3833
      %v3937 = vunpack.c.h.b16 %v3833
      %v3938 = vunpack.c.l.b16 %v3834
      %v3939 = vunpack.c.h.b16 %v3834
      %v3940 = vunpack.c.l.b16 %v3835
      %v3941 = vunpack.c.h.b16 %v3835
      %v3942 = vunpack.c.l.b16 %v3836
      %v3943 = vunpack.c.h.b16 %v3836
      %v3944 = vunpack.c.l.b16 %v3837
      %v3945 = vunpack.c.h.b16 %v3837
      %v3946 = vunpack.c.l.b16 %v3838
      %v3947 = vunpack.c.h.b16 %v3838
      %v3948 = vunpack.c.l.b16 %v3839
      %v3949 = vunpack.c.h.b16 %v3839
      %v3950 = vunpack.c.l.b16 %v3840
      %v3951 = vunpack.c.h.b16 %v3840
      %v3952 = vunpack.c.l.b16 %v3841
      %v3953 = vunpack.c.h.b16 %v3841
      %v3954 = vpack.c.b16 %v3892, %v3890
      %v3955 = vpack.c.b16 %v3893, %v3891
      %v3956 = vpack.c.b16 %v3896, %v3894
      %v3957 = vpack.c.b16 %v3897, %v3895
      %v3958 = vpack.c.b16 %v3900, %v3898
      %v3959 = vpack.c.b16 %v3901, %v3899
      %v3960 = vpack.c.b16 %v3904, %v3902
      %v3961 = vpack.c.b16 %v3905, %v3903
      %v3962 = vpack.c.b16 %v3908, %v3906
      %v3963 = vpack.c.b16 %v3909, %v3907
      %v3964 = vpack.c.b16 %v3912, %v3910
      %v3965 = vpack.c.b16 %v3913, %v3911
      %v3966 = vpack.c.b16 %v3916, %v3914
      %v3967 = vpack.c.b16 %v3917, %v3915
      %v3968 = vpack.c.b16 %v3920, %v3918
      %v3969 = vpack.c.b16 %v3921, %v3919
      %v3970 = vpack.c.b16 %v3924, %v3922
      %v3971 = vpack.c.b16 %v3925, %v3923
      %v3972 = vpack.c.b16 %v3928, %v3926
      %v3973 = vpack.c.b16 %v3929, %v3927
      %v3974 = vpack.c.b16 %v3932, %v3930
      %v3975 = vpack.c.b16 %v3933, %v3931
      %v3976 = vpack.c.b16 %v3936, %v3934
      %v3977 = vpack.c.b16 %v3937, %v3935
      %v3978 = vpack.c.b16 %v3940, %v3938
      %v3979 = vpack.c.b16 %v3941, %v3939
      %v3980 = vpack.c.b16 %v3944, %v3942
      %v3981 = vpack.c.b16 %v3945, %v3943
      %v3982 = vpack.c.b16 %v3948, %v3946
      %v3983 = vpack.c.b16 %v3949, %v3947
      %v3984 = vpack.c.b16 %v3952, %v3950
      %v3985 = vpack.c.b16 %v3953, %v3951
      %4018 = vmatprep.subr.bf16.mxu0 %v3955
      %4019 = vmatpush1.bf16.msra.mxu0 %v3954
      %4020 = vmatprep.subr.bf16.mxu0 %v3957
      %4021 = vmatpush1.bf16.msra.mxu0 %v3956
      %4022 = vmatprep.subr.bf16.mxu0 %v3959
      %4023 = vmatpush1.bf16.msra.mxu0 %v3958
      %4024 = vmatprep.subr.bf16.mxu0 %v3961
      %4025 = vmatpush1.bf16.msra.mxu0 %v3960
      %4026 = vmatprep.subr.bf16.mxu0 %v3963
      %4027 = vmatpush1.bf16.msra.mxu0 %v3962
      %4028 = vmatprep.subr.bf16.mxu0 %v3965
      %4029 = vmatpush1.bf16.msra.mxu0 %v3964
      %4030 = vmatprep.subr.bf16.mxu0 %v3967
      %4031 = vmatpush1.bf16.msra.mxu0 %v3966
      %4032 = vmatprep.subr.bf16.mxu0 %v3969
      %4033 = vmatpush1.bf16.msra.mxu0 %v3968
      %4034 = vmatprep.subr.bf16.mxu0 %v3971
      %4035 = vmatpush1.bf16.msra.mxu0 %v3970
      %4036 = vmatprep.subr.bf16.mxu0 %v3973
      %4037 = vmatpush1.bf16.msra.mxu0 %v3972
      %4038 = vmatprep.subr.bf16.mxu0 %v3975
      %4039 = vmatpush1.bf16.msra.mxu0 %v3974
      %4040 = vmatprep.subr.bf16.mxu0 %v3977
      %4041 = vmatpush1.bf16.msra.mxu0 %v3976
      %4042 = vmatprep.subr.bf16.mxu0 %v3979
      %4043 = vmatpush1.bf16.msra.mxu0 %v3978
      %4044 = vmatprep.subr.bf16.mxu0 %v3981
      %4045 = vmatpush1.bf16.msra.mxu0 %v3980
      %4046 = vmatprep.subr.bf16.mxu0 %v3983
      %4047 = vmatpush1.bf16.msra.mxu0 %v3982
      %4048 = vmatprep.subr.bf16.mxu0 %v3985
      %4049 = vmatpush1.bf16.msra.mxu0 %v3984
      %4050 = vmatprep.mubr.bf16.mxu0 %v3855
      %4051 = vmatmul.mubr.bf16.gmra.mrb[0].mxu0 %v3848
      %v4052 = vpop.f32.mrb[0].mxu0
      %v4053 = vadd.f32 0.0, %v4052
      %v4054 = vpop.f32.mrb[0].mxu0
      %v4055 = vadd.f32 0.0, %v4054
      %v4056 = vpop.f32.mrb[0].mxu0
      %v4057 = vpop.f32.mrb[0].mxu0
      %4058 = vdwg.mxu0
      %v4091 = vunpack.c.l.b16 %v3773
      %v4092 = vunpack.c.h.b16 %v3773
      %v4093 = vunpack.c.l.b16 %v3774
      %v4094 = vunpack.c.h.b16 %v3774
      %v4095 = vunpack.c.l.b16 %v3775
      %v4096 = vunpack.c.h.b16 %v3775
      %v4097 = vunpack.c.l.b16 %v3776
      %v4098 = vunpack.c.h.b16 %v3776
      %v4099 = vunpack.c.l.b16 %v3777
      %v4100 = vunpack.c.h.b16 %v3777
      %v4101 = vunpack.c.l.b16 %v3778
      %v4102 = vunpack.c.h.b16 %v3778
      %v4103 = vunpack.c.l.b16 %v3779
      %v4104 = vunpack.c.h.b16 %v3779
      %v4105 = vunpack.c.l.b16 %v3780
      %v4106 = vunpack.c.h.b16 %v3780
      %v4107 = vunpack.c.l.b16 %v3781
      %v4108 = vunpack.c.h.b16 %v3781
      %v4109 = vunpack.c.l.b16 %v3782
      %v4110 = vunpack.c.h.b16 %v3782
      %v4111 = vunpack.c.l.b16 %v3783
      %v4112 = vunpack.c.h.b16 %v3783
      %v4113 = vunpack.c.l.b16 %v3784
      %v4114 = vunpack.c.h.b16 %v3784
      %v4115 = vunpack.c.l.b16 %v3785
      %v4116 = vunpack.c.h.b16 %v3785
      %v4117 = vunpack.c.l.b16 %v3786
      %v4118 = vunpack.c.h.b16 %v3786
      %v4119 = vunpack.c.l.b16 %v3787
      %v4120 = vunpack.c.h.b16 %v3787
      %v4121 = vunpack.c.l.b16 %v3788
      %v4122 = vunpack.c.h.b16 %v3788
      %v4123 = vunpack.c.l.b16 %v3789
      %v4124 = vunpack.c.h.b16 %v3789
      %v4125 = vunpack.c.l.b16 %v3790
      %v4126 = vunpack.c.h.b16 %v3790
      %v4127 = vunpack.c.l.b16 %v3791
      %v4128 = vunpack.c.h.b16 %v3791
      %v4129 = vunpack.c.l.b16 %v3792
      %v4130 = vunpack.c.h.b16 %v3792
      %v4131 = vunpack.c.l.b16 %v3793
      %v4132 = vunpack.c.h.b16 %v3793
      %v4133 = vunpack.c.l.b16 %v3794
      %v4134 = vunpack.c.h.b16 %v3794
      %v4135 = vunpack.c.l.b16 %v3795
      %v4136 = vunpack.c.h.b16 %v3795
      %v4137 = vunpack.c.l.b16 %v3796
      %v4138 = vunpack.c.h.b16 %v3796
      %v4139 = vunpack.c.l.b16 %v3797
      %v4140 = vunpack.c.h.b16 %v3797
      %v4141 = vunpack.c.l.b16 %v3798
      %v4142 = vunpack.c.h.b16 %v3798
      %v4143 = vunpack.c.l.b16 %v3799
      %v4144 = vunpack.c.h.b16 %v3799
      %v4145 = vunpack.c.l.b16 %v3800
      %v4146 = vunpack.c.h.b16 %v3800
      %v4147 = vunpack.c.l.b16 %v3801
      %v4148 = vunpack.c.h.b16 %v3801
      %v4149 = vunpack.c.l.b16 %v3802
      %v4150 = vunpack.c.h.b16 %v3802
      %v4151 = vunpack.c.l.b16 %v3803
      %v4152 = vunpack.c.h.b16 %v3803
      %v4153 = vunpack.c.l.b16 %v3804
      %v4154 = vunpack.c.h.b16 %v3804
      %v4155 = vpack.c.b16 %v4093, %v4091
      %v4156 = vpack.c.b16 %v4094, %v4092
      %v4157 = vpack.c.b16 %v4097, %v4095
      %v4158 = vpack.c.b16 %v4098, %v4096
      %v4159 = vpack.c.b16 %v4101, %v4099
      %v4160 = vpack.c.b16 %v4102, %v4100
      %v4161 = vpack.c.b16 %v4105, %v4103
      %v4162 = vpack.c.b16 %v4106, %v4104
      %v4163 = vpack.c.b16 %v4109, %v4107
      %v4164 = vpack.c.b16 %v4110, %v4108
      %v4165 = vpack.c.b16 %v4113, %v4111
      %v4166 = vpack.c.b16 %v4114, %v4112
      %v4167 = vpack.c.b16 %v4117, %v4115
      %v4168 = vpack.c.b16 %v4118, %v4116
      %v4169 = vpack.c.b16 %v4121, %v4119
      %v4170 = vpack.c.b16 %v4122, %v4120
      %v4171 = vpack.c.b16 %v4125, %v4123
      %v4172 = vpack.c.b16 %v4126, %v4124
      %v4173 = vpack.c.b16 %v4129, %v4127
      %v4174 = vpack.c.b16 %v4130, %v4128
      %v4175 = vpack.c.b16 %v4133, %v4131
      %v4176 = vpack.c.b16 %v4134, %v4132
      %v4177 = vpack.c.b16 %v4137, %v4135
      %v4178 = vpack.c.b16 %v4138, %v4136
      %v4179 = vpack.c.b16 %v4141, %v4139
      %v4180 = vpack.c.b16 %v4142, %v4140
      %v4181 = vpack.c.b16 %v4145, %v4143
      %v4182 = vpack.c.b16 %v4146, %v4144
      %v4183 = vpack.c.b16 %v4149, %v4147
      %v4184 = vpack.c.b16 %v4150, %v4148
      %v4185 = vpack.c.b16 %v4153, %v4151
      %v4186 = vpack.c.b16 %v4154, %v4152
      %4219 = vmatprep.subr.bf16.mxu0 %v4156
      %4220 = vmatpush1.bf16.msra.mxu0 %v4155
      %4221 = vmatprep.subr.bf16.mxu0 %v4158
      %4222 = vmatpush1.bf16.msra.mxu0 %v4157
      %4223 = vmatprep.subr.bf16.mxu0 %v4160
      %4224 = vmatpush1.bf16.msra.mxu0 %v4159
      %4225 = vmatprep.subr.bf16.mxu0 %v4162
      %4226 = vmatpush1.bf16.msra.mxu0 %v4161
      %4227 = vmatprep.subr.bf16.mxu0 %v4164
      %4228 = vmatpush1.bf16.msra.mxu0 %v4163
      %4229 = vmatprep.subr.bf16.mxu0 %v4166
      %4230 = vmatpush1.bf16.msra.mxu0 %v4165
      %4231 = vmatprep.subr.bf16.mxu0 %v4168
      %4232 = vmatpush1.bf16.msra.mxu0 %v4167
      %4233 = vmatprep.subr.bf16.mxu0 %v4170
      %4234 = vmatpush1.bf16.msra.mxu0 %v4169
      %4235 = vmatprep.subr.bf16.mxu0 %v4172
      %4236 = vmatpush1.bf16.msra.mxu0 %v4171
      %4237 = vmatprep.subr.bf16.mxu0 %v4174
      %4238 = vmatpush1.bf16.msra.mxu0 %v4173
      %4239 = vmatprep.subr.bf16.mxu0 %v4176
      %4240 = vmatpush1.bf16.msra.mxu0 %v4175
      %4241 = vmatprep.subr.bf16.mxu0 %v4178
      %4242 = vmatpush1.bf16.msra.mxu0 %v4177
      %4243 = vmatprep.subr.bf16.mxu0 %v4180
      %4244 = vmatpush1.bf16.msra.mxu0 %v4179
      %4245 = vmatprep.subr.bf16.mxu0 %v4182
      %4246 = vmatpush1.bf16.msra.mxu0 %v4181
      %4247 = vmatprep.subr.bf16.mxu0 %v4184
      %4248 = vmatpush1.bf16.msra.mxu0 %v4183
      %4249 = vmatprep.subr.bf16.mxu0 %v4186
      %4250 = vmatpush1.bf16.msra.mxu0 %v4185
      %4251 = vmatprep.mubr.bf16.mxu0 %v3772
      %4252 = vmatmul.mubr.bf16.gmra.mrb[0].mxu0 %v3771
      %v4253 = vpop.f32.mrb[0].mxu0
      %v4254 = vadd.f32 %v4053, %v4253
      %v4255 = vpop.f32.mrb[0].mxu0
      %v4256 = vadd.f32 %v4055, %v4255
      %v4257 = vpop.f32.mrb[0].mxu0
      %v4258 = vpop.f32.mrb[0].mxu0
      %4259 = vdwg.mxu0
      %v4260 = vld [vmem:[#allocation7] sm:$0x3c]
      %v4261 = vld [vmem:[#allocation7 + $0x8] sm:$0x3c]
      %v4262 = vpack.c.bf16 %v4260, %v4260
      %v4263 = vpack.c.bf16 %v4261, %v4261
      %s4264 = scalar_lea.vmem %s6, 512
      %v4265 = vld [vmem:[%s4264] sm:$0xff]
      %v4266 = vld [vmem:[%s4264 + $0x8] sm:$0xff]
      %v4267 = vld [vmem:[%s4264 + $0x10] sm:$0xff]
      %v4268 = vld [vmem:[%s4264 + $0x18] sm:$0xff]
      %v4269 = vld [vmem:[%s4264 + $0x20] sm:$0xff]
      %v4270 = vld [vmem:[%s4264 + $0x28] sm:$0xff]
      %v4271 = vld [vmem:[%s4264 + $0x30] sm:$0xff]
      %v4272 = vld [vmem:[%s4264 + $0x38] sm:$0xff]
      %v4273 = vld [vmem:[%s4264 + $0x40] sm:$0xff]
      %v4274 = vld [vmem:[%s4264 + $0x48] sm:$0xff]
      %v4275 = vld [vmem:[%s4264 + $0x50] sm:$0xff]
      %v4276 = vld [vmem:[%s4264 + $0x58] sm:$0xff]
      %v4277 = vld [vmem:[%s4264 + $0x60] sm:$0xff]
      %v4278 = vld [vmem:[%s4264 + $0x68] sm:$0xff]
      %v4279 = vld [vmem:[%s4264 + $0x70] sm:$0xff]
      %v4280 = vld [vmem:[%s4264 + $0x78] sm:$0xff]
      %v4281 = vld [vmem:[%s4264 + $0x80] sm:$0xff]
      %v4282 = vld [vmem:[%s4264 + $0x88] sm:$0xff]
      %v4283 = vld [vmem:[%s4264 + $0x90] sm:$0xff]
      %v4284 = vld [vmem:[%s4264 + $0x98] sm:$0xff]
      %v4285 = vld [vmem:[%s4264 + $0xa0] sm:$0xff]
      %v4286 = vld [vmem:[%s4264 + $0xa8] sm:$0xff]
      %v4287 = vld [vmem:[%s4264 + $0xb0] sm:$0xff]
      %v4288 = vld [vmem:[%s4264 + $0xb8] sm:$0xff]
      %v4289 = vld [vmem:[%s4264 + $0xc0] sm:$0xff]
      %v4290 = vld [vmem:[%s4264 + $0xc8] sm:$0xff]
      %v4291 = vld [vmem:[%s4264 + $0xd0] sm:$0xff]
      %v4292 = vld [vmem:[%s4264 + $0xd8] sm:$0xff]
      %v4293 = vld [vmem:[%s4264 + $0xe0] sm:$0xff]
      %v4294 = vld [vmem:[%s4264 + $0xe8] sm:$0xff]
      %v4295 = vld [vmem:[%s4264 + $0xf0] sm:$0xff]
      %v4296 = vld [vmem:[%s4264 + $0xf8] sm:$0xff]
      %v4299 = vrot.slane %v4262, 1
      %v4300 = vrot.slane %v4263, 1
      %v4335 = vunpack.c.l.b16 %v4265
      %v4336 = vunpack.c.h.b16 %v4265
      %v4337 = vunpack.c.l.b16 %v4266
      %v4338 = vunpack.c.h.b16 %v4266
      %v4339 = vunpack.c.l.b16 %v4267
      %v4340 = vunpack.c.h.b16 %v4267
      %v4341 = vunpack.c.l.b16 %v4268
      %v4342 = vunpack.c.h.b16 %v4268
      %v4343 = vunpack.c.l.b16 %v4269
      %v4344 = vunpack.c.h.b16 %v4269
      %v4345 = vunpack.c.l.b16 %v4270
      %v4346 = vunpack.c.h.b16 %v4270
      %v4347 = vunpack.c.l.b16 %v4271
      %v4348 = vunpack.c.h.b16 %v4271
      %v4349 = vunpack.c.l.b16 %v4272
      %v4350 = vunpack.c.h.b16 %v4272
      %v4351 = vunpack.c.l.b16 %v4273
      %v4352 = vunpack.c.h.b16 %v4273
      %v4353 = vunpack.c.l.b16 %v4274
      %v4354 = vunpack.c.h.b16 %v4274
      %v4355 = vunpack.c.l.b16 %v4275
      %v4356 = vunpack.c.h.b16 %v4275
      %v4357 = vunpack.c.l.b16 %v4276
      %v4358 = vunpack.c.h.b16 %v4276
      %v4359 = vunpack.c.l.b16 %v4277
      %v4360 = vunpack.c.h.b16 %v4277
      %v4361 = vunpack.c.l.b16 %v4278
      %v4362 = vunpack.c.h.b16 %v4278
      %v4363 = vunpack.c.l.b16 %v4279
      %v4364 = vunpack.c.h.b16 %v4279
      %v4365 = vunpack.c.l.b16 %v4280
      %v4366 = vunpack.c.h.b16 %v4280
      %v4367 = vunpack.c.l.b16 %v4281
      %v4368 = vunpack.c.h.b16 %v4281
      %v4369 = vunpack.c.l.b16 %v4282
      %v4370 = vunpack.c.h.b16 %v4282
      %v4371 = vunpack.c.l.b16 %v4283
      %v4372 = vunpack.c.h.b16 %v4283
      %v4373 = vunpack.c.l.b16 %v4284
      %v4374 = vunpack.c.h.b16 %v4284
      %v4375 = vunpack.c.l.b16 %v4285
      %v4376 = vunpack.c.h.b16 %v4285
      %v4377 = vunpack.c.l.b16 %v4286
      %v4378 = vunpack.c.h.b16 %v4286
      %v4379 = vunpack.c.l.b16 %v4287
      %v4380 = vunpack.c.h.b16 %v4287
      %v4381 = vunpack.c.l.b16 %v4288
      %v4382 = vunpack.c.h.b16 %v4288
      %v4383 = vunpack.c.l.b16 %v4289
      %v4384 = vunpack.c.h.b16 %v4289
      %v4385 = vunpack.c.l.b16 %v4290
      %v4386 = vunpack.c.h.b16 %v4290
      %v4387 = vunpack.c.l.b16 %v4291
      %v4388 = vunpack.c.h.b16 %v4291
      %v4389 = vunpack.c.l.b16 %v4292
      %v4390 = vunpack.c.h.b16 %v4292
      %v4391 = vunpack.c.l.b16 %v4293
      %v4392 = vunpack.c.h.b16 %v4293
      %v4393 = vunpack.c.l.b16 %v4294
      %v4394 = vunpack.c.h.b16 %v4294
      %v4395 = vunpack.c.l.b16 %v4295
      %v4396 = vunpack.c.h.b16 %v4295
      %v4397 = vunpack.c.l.b16 %v4296
      %v4398 = vunpack.c.h.b16 %v4296
      %v4399 = vpack.c.b16 %v4337, %v4335
      %v4400 = vpack.c.b16 %v4338, %v4336
      %v4401 = vpack.c.b16 %v4341, %v4339
      %v4402 = vpack.c.b16 %v4342, %v4340
      %v4403 = vpack.c.b16 %v4345, %v4343
      %v4404 = vpack.c.b16 %v4346, %v4344
      %v4405 = vpack.c.b16 %v4349, %v4347
      %v4406 = vpack.c.b16 %v4350, %v4348
      %v4407 = vpack.c.b16 %v4353, %v4351
      %v4408 = vpack.c.b16 %v4354, %v4352
      %v4409 = vpack.c.b16 %v4357, %v4355
      %v4410 = vpack.c.b16 %v4358, %v4356
      %v4411 = vpack.c.b16 %v4361, %v4359
      %v4412 = vpack.c.b16 %v4362, %v4360
      %v4413 = vpack.c.b16 %v4365, %v4363
      %v4414 = vpack.c.b16 %v4366, %v4364
      %v4415 = vpack.c.b16 %v4369, %v4367
      %v4416 = vpack.c.b16 %v4370, %v4368
      %v4417 = vpack.c.b16 %v4373, %v4371
      %v4418 = vpack.c.b16 %v4374, %v4372
      %v4419 = vpack.c.b16 %v4377, %v4375
      %v4420 = vpack.c.b16 %v4378, %v4376
      %v4421 = vpack.c.b16 %v4381, %v4379
      %v4422 = vpack.c.b16 %v4382, %v4380
      %v4423 = vpack.c.b16 %v4385, %v4383
      %v4424 = vpack.c.b16 %v4386, %v4384
      %v4425 = vpack.c.b16 %v4389, %v4387
      %v4426 = vpack.c.b16 %v4390, %v4388
      %v4427 = vpack.c.b16 %v4393, %v4391
      %v4428 = vpack.c.b16 %v4394, %v4392
      %v4429 = vpack.c.b16 %v4397, %v4395
      %v4430 = vpack.c.b16 %v4398, %v4396
      %4463 = vmatprep.subr.bf16.mxu0 %v4400
      %4464 = vmatpush1.bf16.msra.mxu0 %v4399
      %4465 = vmatprep.subr.bf16.mxu0 %v4402
      %4466 = vmatpush1.bf16.msra.mxu0 %v4401
      %4467 = vmatprep.subr.bf16.mxu0 %v4404
      %4468 = vmatpush1.bf16.msra.mxu0 %v4403
      %4469 = vmatprep.subr.bf16.mxu0 %v4406
      %4470 = vmatpush1.bf16.msra.mxu0 %v4405
      %4471 = vmatprep.subr.bf16.mxu0 %v4408
      %4472 = vmatpush1.bf16.msra.mxu0 %v4407
      %4473 = vmatprep.subr.bf16.mxu0 %v4410
      %4474 = vmatpush1.bf16.msra.mxu0 %v4409
      %4475 = vmatprep.subr.bf16.mxu0 %v4412
      %4476 = vmatpush1.bf16.msra.mxu0 %v4411
      %4477 = vmatprep.subr.bf16.mxu0 %v4414
      %4478 = vmatpush1.bf16.msra.mxu0 %v4413
      %4479 = vmatprep.subr.bf16.mxu0 %v4416
      %4480 = vmatpush1.bf16.msra.mxu0 %v4415
      %4481 = vmatprep.subr.bf16.mxu0 %v4418
      %4482 = vmatpush1.bf16.msra.mxu0 %v4417
      %4483 = vmatprep.subr.bf16.mxu0 %v4420
      %4484 = vmatpush1.bf16.msra.mxu0 %v4419
      %4485 = vmatprep.subr.bf16.mxu0 %v4422
      %4486 = vmatpush1.bf16.msra.mxu0 %v4421
      %4487 = vmatprep.subr.bf16.mxu0 %v4424
      %4488 = vmatpush1.bf16.msra.mxu0 %v4423
      %4489 = vmatprep.subr.bf16.mxu0 %v4426
      %4490 = vmatpush1.bf16.msra.mxu0 %v4425
      %4491 = vmatprep.subr.bf16.mxu0 %v4428
      %4492 = vmatpush1.bf16.msra.mxu0 %v4427
      %4493 = vmatprep.subr.bf16.mxu0 %v4430
      %4494 = vmatpush1.bf16.msra.mxu0 %v4429
      %4495 = vmatprep.mubr.bf16.mxu0 %v4300
      %4496 = vmatmul.mubr.bf16.gmra.mrb[0].mxu0 %v4299
      %v4497 = vpop.f32.mrb[0].mxu0
      %v4498 = vadd.f32 0.0, %v4497
      %v4499 = vpop.f32.mrb[0].mxu0
      %v4500 = vadd.f32 0.0, %v4499
      %v4501 = vpop.f32.mrb[0].mxu0
      %v4502 = vpop.f32.mrb[0].mxu0
      %4503 = vdwg.mxu0
      %v4504 = vadd.f32 %v4254, %v4498
      %v4505 = vadd.f32 %v4256, %v4500
      %s4506 = scalar_lea.vmem %s7, 5
      %v4507 = vld [vmem:[%s4506] ss:$8 sm:$0x3]
      %v4509 = vlaneseq
      %v4510 = vshrl.u32 %v4509, 7
      %v4511 = vsub.s32 0, %v4510
      %v4512 = vrot.slane %v4507, %v4511
      %v4513 = vlaneseq
      %v4514 = vshrl.u32 %v4513, 7
      %v4515 = vsub.s32 1, %v4514
      %v4516 = vrot.slane %v4507, %v4515
      %v4519 = vadd.f32 %v4504, %v4512
      %v4520 = vadd.f32 %v4505, %v4516
      %v4521 = vmax.f32 %v4519, 0.0
      %v4522 = vmax.f32 %v4520, 0.0
      %v4525 = vcombine.low %v4521, %v4522
      %4527 = vst [vmem:[%s384] sm:$0xff] %v4525
      %p4528 = scmp.lt.s32.totalorder %s22, 1
      %s4529 = scalar_select %p4528, %s22, 1
      %s4530 = smul.addr %s4529, 4
      %s4531 = smul.addr %s4530, 8
      %s4532 = scalar_lea.vmem %s8, %s4531
      %p4533 = scmp.lt.s32.totalorder %s22, 1
      %s4534 = scalar_select %p4533, %s22, 1
      %s4535 = smul.addr %s4534, 2
      %s4536 = smul.addr %s4535, 8
      %s4537 = scalar_lea.vmem %s9, %s4536
      %p4538 = scmp.lt.s32.totalorder %s22, 1
      %s4539 = scalar_select %p4538, %s22, 1
      %s4540 = smul.addr %s4539, 2
      %s4541 = smul.addr %s4540, 4
      %s4542 = scalar_lea.vmem %s10, %s4541
      // Predicated region
      $region53: #{down_forward.1} parent=51 // pred_check
        %p4543 = pneg %p213
      $region54: #{down_forward.1} parent=51 // pred_check_branch
        %4545 = sbr.rel (%p4543) target = $region56
      $region55: #{down_forward.1} parent=51 // pred_region
        _
      $region56: #{down_forward.1} parent=51 // pred_fallthru
        _
      // Predicated region
      $region57: #{down_forward.1} parent=51 // pred_check
        %p4546 = pneg %p239
      $region58: #{down_forward.1} parent=51 // pred_check_branch
        %4548 = sbr.rel (%p4546) target = $region60
      $region59: #{down_forward.1} parent=51 // pred_region
        _
      $region60: #{down_forward.1} parent=51 // pred_fallthru
        _
      // Predicated region
      $region61: #{down_forward.1} parent=51 // pred_check
        %p4549 = pneg %p265
      $region62: #{down_forward.1} parent=51 // pred_check_branch
        %4551 = sbr.rel (%p4549) target = $region64
      $region63: #{down_forward.1} parent=51 // pred_region
        _
      $region64: #{down_forward.1} parent=51 // pred_fallthru
        _
    $region52: #{down_forward.1} parent=5 // pred_fallthru
      _
    %p4552 = scmp.le.s32.totalorder 2, %s17
    // Predicated region
    $region65: #{down_forward.1} parent=5 // pred_check
      %p4553 = pneg %p4552
    $region66: #{down_forward.1} parent=5 // pred_check_branch
      %4555 = sbr.rel (%p4553) target = $region68
    $region67: #{down_forward.1} parent=5 // pred_region
      %s4556 = ssub.s32 %s17, 2
      // Predicated region
      $region69: #{down_forward.1} parent=67 // pred_check
        %p4557 = pneg %p219
      $region70: #{down_forward.1} parent=67 // pred_check_branch
        %4559 = sbr.rel (%p4557) target = $region72
      $region71: #{down_forward.1} parent=67 // pred_region
        %p4560 = scmp.lt.s32.totalorder %s23, 1
        %s4561 = scalar_select %p4560, %s23, 1
        %s4562 = smul.addr %s4561, 4
        %s4563 = smul.addr %s4562, 8
        %s4564 = scalar_lea.vmem %s8, %s4563
      $region72: #{down_forward.1} parent=67 // pred_fallthru
        _
      // Predicated region
      $region73: #{down_forward.1} parent=67 // pred_check
        %p4565 = pneg %p245
      $region74: #{down_forward.1} parent=67 // pred_check_branch
        %4567 = sbr.rel (%p4565) target = $region76
      $region75: #{down_forward.1} parent=67 // pred_region
        %p4568 = scmp.lt.s32.totalorder %s23, 1
        %s4569 = scalar_select %p4568, %s23, 1
        %s4570 = smul.addr %s4569, 2
        %s4571 = smul.addr %s4570, 8
        %s4572 = scalar_lea.vmem %s9, %s4571
      $region76: #{down_forward.1} parent=67 // pred_fallthru
        _
      // Predicated region
      $region77: #{down_forward.1} parent=67 // pred_check
        %p4573 = pneg %p271
      $region78: #{down_forward.1} parent=67 // pred_check_branch
        %4575 = sbr.rel (%p4573) target = $region80
      $region79: #{down_forward.1} parent=67 // pred_region
        %p4576 = scmp.lt.s32.totalorder %s23, 1
        %s4577 = scalar_select %p4576, %s23, 1
        %s4578 = smul.addr %s4577, 2
        %s4579 = smul.addr %s4578, 4
        %s4580 = scalar_lea.vmem %s10, %s4579
      $region80: #{down_forward.1} parent=67 // pred_fallthru
        _
    $region68: #{down_forward.1} parent=5 // pred_fallthru
      _
  $region6: #{down_forward.1} parent=0 // loop_footer
    %s21 = sadd.s32 1, %s17
  $region7: #{down_forward.1} parent=0 // loop_footer_branch
    %16 = sbr.rel target = $region3
  $region8: #{down_forward.1} parent=0 // loop_exit
    _

</llo_original>
